<compile_context>
chip_gen: v7x
topology: tpu7x:2x2x1
jax: 0.10.0
libtpu: 0.0.40
codegen_flags: <defaults>
</compile_context>

<pallas_src>
import jax
import jax.numpy as jnp
from jax import lax
from jax.experimental import pallas as pl
from jax.experimental.pallas import tpu as pltpu

# ---- module hyper-parameters (small, consistent with the torch module) ------
N_FEATURES = 4          # n_features
WIDTH = 32              # width (n_intermediate)
POINT_DEPTH = 3         # point_depth
LIN_DEPTH = 5           # lin_depth
N_LABELS = 3            # n_labels
DIM2 = 2 * POINT_DEPTH * WIDTH   # n_intermediate2 = 192
OUT_PAD = 128           # lane-dense padded output width
OUT_SUB = 8             # sublane padding of the per-graph output block
LEAKY_SLOPE = 0.01      # F.leaky_relu default
BN_EPS = 1e-5
BIG = 1e30


# ---------------------------------------------------------------------------
# Per-graph fused kernel: 3x DynamicEdgeConv -> mean/max pool -> BN -> MLP head
# ---------------------------------------------------------------------------
def make_graph_kernel(nodes_per_graph):
    P = nodes_per_graph

    def kernel(x_ref,
               p1wa_ref, p1wb_ref, p1b0_ref, p1w1_ref, p1b1_ref,
               p2wa_ref, p2wb_ref, p2b0_ref,
               p3wa_ref, p3wb_ref, p3b0_ref,
               bns_ref, bnsh_ref,
               lw_ref, lb_ref, ow_ref, ob_ref,
               o_ref):
        x0 = x_ref[...].astype(jnp.float32)                       # [P, F]
        col = lax.broadcasted_iota(jnp.int32, (P, P), 1)

        def edge_conv(x, wa_ref_, wb_ref_, b0_ref_, extra):
            wa = wa_ref_[...]                                     # bf16 [K, W]
            wb = wb_ref_[...]                                     # bf16 [K, W]
            b0 = b0_ref_[...]                                     # f32  [1, W]
            extra_wb = [(w_r[...], b_r[...]) for (w_r, b_r) in extra]

            # ---- intra-graph kNN (k=2, self included), f32 distance path ----
            gram = lax.dot_general(x, x, (((1,), (1,)), ((), ())),
                                   preferred_element_type=jnp.float32)  # [P,P]
            sq = jnp.sum(x * x, axis=1, keepdims=True)                  # [P,1]
            # per-row argmin is invariant to the row-constant ||x_i||^2 term
            d = sq.T - 2.0 * gram                                       # [P,P]

            def nearest(dcur):
                dmin = jnp.min(dcur, axis=1, keepdims=True)
                idx = jnp.min(jnp.where(dcur <= dmin, col, P),
                              axis=1, keepdims=True)
                mask = (col == idx)             # computed once, reused twice
                return (mask.astype(jnp.float32),
                        jnp.where(mask, jnp.float32(BIG), dcur))

            oh1, d1 = nearest(d)
            if P >= 2:
                oh2, _ = nearest(d1)
            else:
                oh2 = oh1       # single-node graph: reuse the 1st neighbour

            # ---- neighbour gathers (f32 MXU, has slack) + edge MLP (bf16) ---
            xn1 = jnp.dot(oh1, x, preferred_element_type=jnp.float32)   # x_j
            xn2 = jnp.dot(oh2, x, preferred_element_type=jnp.float32)
            # Hoisted neighbour-independent term: x_i @ Wa + b0 (once).
            hs = jnp.dot(x.astype(jnp.bfloat16), wa,
                         preferred_element_type=jnp.float32) + b0       # [P,W]

            def branch(xn):
                h = hs + jnp.dot((xn - x).astype(jnp.bfloat16), wb,
                                 preferred_element_type=jnp.float32)
                # TODO(synk): LNN definition not in the snippet; assumed
                # Linear+ReLU per layer.
                h = jnp.maximum(h, 0.0)
                for (w, b) in extra_wb:
                    h = jnp.dot(h.astype(jnp.bfloat16), w,
                                preferred_element_type=jnp.float32) + b
                    h = jnp.maximum(h, 0.0)
                return h

            return jnp.maximum(branch(xn1), branch(xn2))        # aggr='max'

        # point1: LNN([2F, W, W]); pointfkt: 2x LNN([2W, W])
        y1 = edge_conv(x0, p1wa_ref, p1wb_ref, p1b0_ref,
                       [(p1w1_ref, p1b1_ref)])
        y2 = edge_conv(y1, p2wa_ref, p2wb_ref, p2b0_ref, [])
        y3 = edge_conv(y2, p3wa_ref, p3wb_ref, p3b0_ref, [])
        y = jnp.concatenate([y1, y2, y3], axis=1)               # [P, 3W]

        # ---- per-graph global mean (gap) + max (gmp) pooling ----------------
        mean_p = jnp.sum(y, axis=0, keepdims=True) * jnp.float32(1.0 / P)
        max_p = jnp.max(y, axis=0, keepdims=True)
        pooled = jnp.concatenate([mean_p, max_p], axis=1)       # [1, DIM2]

        # ---- head: folded BatchNorm1d(eval) -> 5x(Linear+leaky_relu) -> out -
        h = pooled * bns_ref[...] + bnsh_ref[...]
        for g in range(LIN_DEPTH):
            h = jnp.dot(h.astype(jnp.bfloat16), lw_ref[g],
                        preferred_element_type=jnp.float32) + lb_ref[g]
            h = jnp.where(h > 0, h, LEAKY_SLOPE * h)            # F.leaky_relu
            # Dropout(0.3) at (g-1) % 3 == 0 is identity in eval mode.
        res = jnp.dot(h.astype(jnp.bfloat16), ow_ref[...],
                      preferred_element_type=jnp.float32) + ob_ref[...]  # [1,128]
        # lane-dense (8,128) block = exactly one vreg, one unmasked store
        o_ref[...] = jnp.broadcast_to(res, (OUT_SUB, OUT_PAD))

    return kernel


# ---------------------------------------------------------------------------
# Helpers: specs, cost estimate, VMEM limit
# ---------------------------------------------------------------------------
def _bcast_spec(arr):
    # Full-array block, same block every grid step (weights stay VMEM-resident).
    shape = tuple(arr.shape)
    zeros = (0,) * len(shape)
    return pl.BlockSpec(shape, lambda g, _z=zeros: _z)


def _cost_estimate(P, G, args):
    def conv_flops(K, n_extra):
        f = 2 * P * P * K                 # gram
        f += 2 * (2 * P * P * K)          # two one-hot gather dots
        f += 2 * P * K * WIDTH            # hoisted x_i @ Wa
        f += 2 * (2 * P * K * WIDTH)      # two (x_j - x_i) @ Wb branches
        f += n_extra * 2 * (2 * P * WIDTH * WIDTH)
        return f

    per_graph = conv_flops(N_FEATURES, 1) + 2 * conv_flops(WIDTH, 0)
    per_graph += LIN_DEPTH * 2 * DIM2 * DIM2 + 2 * DIM2 * OUT_PAD
    bytes_accessed = (sum(int(a.size) * a.dtype.itemsize for a in args)
                      + G * OUT_SUB * OUT_PAD * 4)
    return pl.CostEstimate(flops=int(G * per_graph), transcendentals=0,
                           bytes_accessed=int(bytes_accessed))


def _vmem_limit_bytes(P, args):
    weight_bytes = sum(int(a.size) * a.dtype.itemsize for a in args)
    temp_bytes = 16 * P * P * 4 + 32 * P * DIM2 * 4      # per-graph live temps
    need = 2 * weight_bytes + 2 * temp_bytes + (4 << 20)
    # cap at 48 MiB so the same setting is also safe on v7x's 64 MiB VMEM
    return int(min(48 << 20, max(16 << 20, need)))


# ---------------------------------------------------------------------------
# Full forward pass: one per-graph-gridded pallas_call + tiny wrapper slice
# ---------------------------------------------------------------------------
def pointnet_forward(x, batch_ids, params, num_graphs):
    # edge_index = knn_graph(x, 100, batch); dropout_adj(...)  -> unused, skipped.
    del batch_ids  # graphs assumed equal-sized and contiguous (see TODO below)
    # TODO(synk): ragged graphs would need PrefetchScalarGridSpec per-graph
    # offsets + pl.BoundedSlice node blocks; equal-sized graphs assumed here.
    n = x.shape[0]
    assert n % num_graphs == 0, "equal-sized graphs required"
    P = n // num_graphs
    assert P % 8 == 0, "nodes_per_graph must be a multiple of 8 (sublane tile)"

    bf16 = jnp.bfloat16
    gamma, beta, mean, var = params["bn"]
    bn_scale = gamma * lax.rsqrt(var + BN_EPS)      # fold BN(eval) into scale
    bn_shift = beta - mean * bn_scale               # and shift (computed once)

    weight_args = [
        params["p1_wa"].astype(bf16), params["p1_wb"].astype(bf16),
        params["p1_b0"],
        params["p1_w1"].astype(bf16), params["p1_b1"],
        params["p2_wa"].astype(bf16), params["p2_wb"].astype(bf16),
        params["p2_b0"],
        params["p3_wa"].astype(bf16), params["p3_wb"].astype(bf16),
        params["p3_b0"],
        bn_scale, bn_shift,
        params["lin_w"].astype(bf16), params["lin_b"],
        params["out_w_pad"].astype(bf16), params["out_b_pad"],
    ]
    args = [x] + weight_args

    in_specs = ([pl.BlockSpec((P, N_FEATURES), lambda g: (g, 0))]
                + [_bcast_spec(a) for a in weight_args])
    out_spec = pl.BlockSpec((OUT_SUB, OUT_PAD), lambda g: (g, 0))

    out_pad = pl.pallas_call(
        make_graph_kernel(P),
        grid=(num_graphs,),
        out_shape=jax.ShapeDtypeStruct((num_graphs * OUT_SUB, OUT_PAD),
                                       jnp.float32),
        in_specs=in_specs,
        out_specs=out_spec,
        compiler_params=pltpu.CompilerParams(
            dimension_semantics=("parallel",),
            vmem_limit_bytes=_vmem_limit_bytes(P, args)),
        cost_estimate=_cost_estimate(P, num_graphs, args),
    )(*args)

    # classification=False -> no sigmoid; x.view(-1)
    out = out_pad.reshape(num_graphs, OUT_SUB, OUT_PAD)[:, 0, :N_LABELS]
    return out.reshape(-1)


# ---------------------------------------------------------------------------
# Parameter initialization (deterministic, synthetic, torch Linear-style init)
# ---------------------------------------------------------------------------
def init_params(key):
    keys = iter(jax.random.split(key, 64))

    def lin(fan_in, fan_out):
        bound = 1.0 / (fan_in ** 0.5)
        w = jax.random.uniform(next(keys), (fan_in, fan_out), jnp.float32, -bound, bound)
        b = jax.random.uniform(next(keys), (1, fan_out), jnp.float32, -bound, bound)
        return w, b

    p = {}
    # point1: LNN([2F, W, W]) -> layer0 (2F->W, split into self/diff halves), layer1 (W->W)
    w0, b0 = lin(2 * N_FEATURES, WIDTH)
    p["p1_wa"], p["p1_wb"], p["p1_b0"] = w0[:N_FEATURES], w0[N_FEATURES:], b0
    p["p1_w1"], p["p1_b1"] = lin(WIDTH, WIDTH)
    # pointfkt: (point_depth-1) x LNN([2W, W])
    w, b = lin(2 * WIDTH, WIDTH)
    p["p2_wa"], p["p2_wb"], p["p2_b0"] = w[:WIDTH], w[WIDTH:], b
    w, b = lin(2 * WIDTH, WIDTH)
    p["p3_wa"], p["p3_wb"], p["p3_b0"] = w[:WIDTH], w[WIDTH:], b
    # BatchNorm1d(DIM2) eval-mode parameters: gamma, beta, running mean, running var
    p["bn"] = (
        1.0 + 0.1 * jax.random.normal(next(keys), (1, DIM2), jnp.float32),
        0.1 * jax.random.normal(next(keys), (1, DIM2), jnp.float32),
        0.1 * jax.random.normal(next(keys), (1, DIM2), jnp.float32),
        1.0 + jax.random.uniform(next(keys), (1, DIM2), jnp.float32, 0.0, 0.5),
    )
    # linearfkt: 5 x Linear(DIM2, DIM2), stacked
    lws, lbs = [], []
    for _ in range(LIN_DEPTH):
        w, b = lin(DIM2, DIM2)
        lws.append(w)
        lbs.append(b)
    p["lin_w"] = jnp.stack(lws)                       # [5, DIM2, DIM2]
    p["lin_b"] = jnp.stack(lbs)                       # [5, 1, DIM2]
    # out: Linear(DIM2, N_LABELS), zero-padded to a lane-dense 128-wide slab.
    # (out2 is unused in forward.)
    ow, ob = lin(DIM2, N_LABELS)
    p["out_w_pad"] = jnp.zeros((DIM2, OUT_PAD), jnp.float32).at[:, :N_LABELS].set(ow)
    p["out_b_pad"] = jnp.zeros((1, OUT_PAD), jnp.float32).at[:, :N_LABELS].set(ob)
    return p


if __name__ == "__main__":
    key = jax.random.PRNGKey(0)
    kx, kp = jax.random.split(key)

    nodes_per_graph = 16
    num_graphs = 2
    n = nodes_per_graph * num_graphs

    x = jax.random.normal(kx, (n, N_FEATURES), jnp.float32)
    batch_ids = jnp.repeat(jnp.arange(num_graphs, dtype=jnp.int32), nodes_per_graph)

    params = init_params(kp)
    out = pointnet_forward(x, batch_ids, params, num_graphs)
    out = jax.block_until_ready(out)

    assert out.shape == (num_graphs * N_LABELS,)
    assert bool(jnp.all(jnp.isfinite(out)))
    print("KERNEL_OK")
</pallas_src>

<mosaic_0001>
module attributes {stable_mosaic.version = 11 : i64} {
  func.func @kernel(%arg0: i32, %arg1: memref<16x4xf32, #tpu.memory_space<vmem>>, %arg2: memref<4x32xbf16, #tpu.memory_space<vmem>>, %arg3: memref<4x32xbf16, #tpu.memory_space<vmem>>, %arg4: memref<1x32xf32, #tpu.memory_space<vmem>>, %arg5: memref<32x32xbf16, #tpu.memory_space<vmem>>, %arg6: memref<1x32xf32, #tpu.memory_space<vmem>>, %arg7: memref<32x32xbf16, #tpu.memory_space<vmem>>, %arg8: memref<32x32xbf16, #tpu.memory_space<vmem>>, %arg9: memref<1x32xf32, #tpu.memory_space<vmem>>, %arg10: memref<32x32xbf16, #tpu.memory_space<vmem>>, %arg11: memref<32x32xbf16, #tpu.memory_space<vmem>>, %arg12: memref<1x32xf32, #tpu.memory_space<vmem>>, %arg13: memref<1x192xf32, #tpu.memory_space<vmem>>, %arg14: memref<1x192xf32, #tpu.memory_space<vmem>>, %arg15: memref<5x192x192xbf16, #tpu.memory_space<vmem>>, %arg16: memref<5x1x192xf32, #tpu.memory_space<vmem>>, %arg17: memref<192x128xbf16, #tpu.memory_space<vmem>>, %arg18: memref<1x128xf32, #tpu.memory_space<vmem>>, %arg19: memref<8x128xf32, #tpu.memory_space<vmem>>) attributes {dimension_semantics = [#tpu.dimension_semantics<parallel>], iteration_bounds = array<i64: 2>, scalar_prefetch = 0 : i64, scratch_operands = 0 : i64, tpu.core_type = #tpu.core_type<tc>, window_params = [{transform_indices = @transform_0, window_bounds = array<i64: 16, 4>}, {pipeline_mode = #tpu.pipeline_mode<synchronous>, transform_indices = @transform_1, window_bounds = array<i64: 4, 32>}, {pipeline_mode = #tpu.pipeline_mode<synchronous>, transform_indices = @transform_2, window_bounds = array<i64: 4, 32>}, {pipeline_mode = #tpu.pipeline_mode<synchronous>, transform_indices = @transform_3, window_bounds = array<i64: 1, 32>}, {pipeline_mode = #tpu.pipeline_mode<synchronous>, transform_indices = @transform_4, window_bounds = array<i64: 32, 32>}, {pipeline_mode = #tpu.pipeline_mode<synchronous>, transform_indices = @transform_5, window_bounds = array<i64: 1, 32>}, {pipeline_mode = #tpu.pipeline_mode<synchronous>, transform_indices = @transform_6, window_bounds = array<i64: 32, 32>}, {pipeline_mode = #tpu.pipeline_mode<synchronous>, transform_indices = @transform_7, window_bounds = array<i64: 32, 32>}, {pipeline_mode = #tpu.pipeline_mode<synchronous>, transform_indices = @transform_8, window_bounds = array<i64: 1, 32>}, {pipeline_mode = #tpu.pipeline_mode<synchronous>, transform_indices = @transform_9, window_bounds = array<i64: 32, 32>}, {pipeline_mode = #tpu.pipeline_mode<synchronous>, transform_indices = @transform_10, window_bounds = array<i64: 32, 32>}, {pipeline_mode = #tpu.pipeline_mode<synchronous>, transform_indices = @transform_11, window_bounds = array<i64: 1, 32>}, {pipeline_mode = #tpu.pipeline_mode<synchronous>, transform_indices = @transform_12, window_bounds = array<i64: 1, 192>}, {pipeline_mode = #tpu.pipeline_mode<synchronous>, transform_indices = @transform_13, window_bounds = array<i64: 1, 192>}, {pipeline_mode = #tpu.pipeline_mode<synchronous>, transform_indices = @transform_14, window_bounds = array<i64: 5, 192, 192>}, {pipeline_mode = #tpu.pipeline_mode<synchronous>, transform_indices = @transform_15, window_bounds = array<i64: 5, 1, 192>}, {pipeline_mode = #tpu.pipeline_mode<synchronous>, transform_indices = @transform_16, window_bounds = array<i64: 192, 128>}, {pipeline_mode = #tpu.pipeline_mode<synchronous>, transform_indices = @transform_17, window_bounds = array<i64: 1, 128>}, {transform_indices = @transform_18, window_bounds = array<i64: 8, 128>}]} {
    %c0 = arith.constant 0 : index
    %c0_0 = arith.constant 0 : index
    %0 = vector.load %arg1[%c0, %c0_0] : memref<16x4xf32, #tpu.memory_space<vmem>>, vector<16x4xf32>
    %1 = tpu.iota {dimensions = array<i32: 1>} : vector<16x16xi32>
    %c0_1 = arith.constant 0 : index
    %c0_2 = arith.constant 0 : index
    %2 = vector.load %arg2[%c0_1, %c0_2] : memref<4x32xbf16, #tpu.memory_space<vmem>>, vector<4x32xbf16>
    %c0_3 = arith.constant 0 : index
    %c0_4 = arith.constant 0 : index
    %3 = vector.load %arg3[%c0_3, %c0_4] : memref<4x32xbf16, #tpu.memory_space<vmem>>, vector<4x32xbf16>
    %c0_5 = arith.constant 0 : index
    %c0_6 = arith.constant 0 : index
    %4 = vector.load %arg4[%c0_5, %c0_6] : memref<1x32xf32, #tpu.memory_space<vmem>>, vector<1x32xf32>
    %c0_7 = arith.constant 0 : index
    %c0_8 = arith.constant 0 : index
    %5 = vector.load %arg5[%c0_7, %c0_8] : memref<32x32xbf16, #tpu.memory_space<vmem>>, vector<32x32xbf16>
    %c0_9 = arith.constant 0 : index
    %c0_10 = arith.constant 0 : index
    %6 = vector.load %arg6[%c0_9, %c0_10] : memref<1x32xf32, #tpu.memory_space<vmem>>, vector<1x32xf32>
    %cst = arith.constant dense<0.000000e+00> : vector<16x16xf32>
    %7 = tpu.matmul %0, %0, %cst {dimension_numbers = #tpu.dot_dimension_numbers<[1], [1], [0], [0], [0, 0, 1, 0], [], []>} : vector<16x4xf32>, vector<16x4xf32>, vector<16x16xf32> -> vector<16x16xf32>
    %8 = arith.mulf %0, %0 : vector<16x4xf32>
    %cst_11 = arith.constant dense<0.000000e+00> : vector<16xf32>
    %9 = vector.multi_reduction <add>, %8, %cst_11 [1] : vector<16x4xf32> to vector<16xf32>
    %10 = vector.shape_cast %9 : vector<16xf32> to vector<16x1xf32>
    %11 = tpu.transpose %10, [1, 0] : vector<16x1xf32> -> vector<1x16xf32>
    %cst_12 = arith.constant 2.000000e+00 : f32
    %12 = vector.broadcast %cst_12 : f32 to vector<16x16xf32>
    %13 = arith.mulf %12, %7 : vector<16x16xf32>
    %14 = vector.broadcast %11 : vector<1x16xf32> to vector<16x16xf32>
    %15 = arith.subf %14, %13 : vector<16x16xf32>
    %cst_13 = arith.constant dense<0x7F800000> : vector<16xf32>
    %16 = vector.multi_reduction <minimumf>, %15, %cst_13 [1] : vector<16x16xf32> to vector<16xf32>
    %17 = vector.shape_cast %16 : vector<16xf32> to vector<16x1xf32>
    %18 = vector.broadcast %17 : vector<16x1xf32> to vector<16x16xf32>
    %19 = arith.cmpf ole, %15, %18 : vector<16x16xf32>
    %c16_i32 = arith.constant 16 : i32
    %20 = vector.broadcast %c16_i32 : i32 to vector<16x16xi32>
    %21 = arith.select %19, %1, %20 : vector<16x16xi1>, vector<16x16xi32>
    %cst_14 = arith.constant dense<2147483647> : vector<16xi32>
    %22 = vector.multi_reduction <minsi>, %21, %cst_14 [1] : vector<16x16xi32> to vector<16xi32>
    %23 = vector.shape_cast %22 : vector<16xi32> to vector<16x1xi32>
    %24 = vector.broadcast %23 : vector<16x1xi32> to vector<16x16xi32>
    %25 = arith.cmpi eq, %1, %24 : vector<16x16xi32>
    %26 = arith.extui %25 : vector<16x16xi1> to vector<16x16xi32>
    %27 = arith.sitofp %26 : vector<16x16xi32> to vector<16x16xf32>
    %cst_15 = arith.constant 1.000000e+30 : f32
    %28 = vector.broadcast %cst_15 : f32 to vector<16x16xf32>
    %29 = arith.select %25, %28, %15 : vector<16x16xi1>, vector<16x16xf32>
    %cst_16 = arith.constant dense<0x7F800000> : vector<16xf32>
    %30 = vector.multi_reduction <minimumf>, %29, %cst_16 [1] : vector<16x16xf32> to vector<16xf32>
    %31 = vector.shape_cast %30 : vector<16xf32> to vector<16x1xf32>
    %32 = vector.broadcast %31 : vector<16x1xf32> to vector<16x16xf32>
    %33 = arith.cmpf ole, %29, %32 : vector<16x16xf32>
    %c16_i32_17 = arith.constant 16 : i32
    %34 = vector.broadcast %c16_i32_17 : i32 to vector<16x16xi32>
    %35 = arith.select %33, %1, %34 : vector<16x16xi1>, vector<16x16xi32>
    %cst_18 = arith.constant dense<2147483647> : vector<16xi32>
    %36 = vector.multi_reduction <minsi>, %35, %cst_18 [1] : vector<16x16xi32> to vector<16xi32>
    %37 = vector.shape_cast %36 : vector<16xi32> to vector<16x1xi32>
    %38 = vector.broadcast %37 : vector<16x1xi32> to vector<16x16xi32>
    %39 = arith.cmpi eq, %1, %38 : vector<16x16xi32>
    %40 = arith.extui %39 : vector<16x16xi1> to vector<16x16xi32>
    %41 = arith.sitofp %40 : vector<16x16xi32> to vector<16x16xf32>
    %cst_19 = arith.constant dense<0.000000e+00> : vector<16x4xf32>
    %42 = tpu.matmul %27, %0, %cst_19 {dimension_numbers = #tpu.dot_dimension_numbers<[1], [0], [0], [1], [0, 0, 1, 1], [], []>} : vector<16x16xf32>, vector<16x4xf32>, vector<16x4xf32> -> vector<16x4xf32>
    %cst_20 = arith.constant dense<0.000000e+00> : vector<16x4xf32>
    %43 = tpu.matmul %41, %0, %cst_20 {dimension_numbers = #tpu.dot_dimension_numbers<[1], [0], [0], [1], [0, 0, 1, 1], [], []>} : vector<16x16xf32>, vector<16x4xf32>, vector<16x4xf32> -> vector<16x4xf32>
    %44 = arith.truncf %0 : vector<16x4xf32> to vector<16x4xbf16>
    %cst_21 = arith.constant dense<0.000000e+00> : vector<16x32xf32>
    %45 = tpu.matmul %44, %2, %cst_21 {dimension_numbers = #tpu.dot_dimension_numbers<[1], [0], [0], [1], [0, 0, 1, 1], [], []>} : vector<16x4xbf16>, vector<4x32xbf16>, vector<16x32xf32> -> vector<16x32xf32>
    %46 = vector.broadcast %4 : vector<1x32xf32> to vector<16x32xf32>
    %47 = arith.addf %45, %46 : vector<16x32xf32>
    %48 = arith.subf %42, %0 : vector<16x4xf32>
    %49 = arith.truncf %48 : vector<16x4xf32> to vector<16x4xbf16>
    %cst_22 = arith.constant dense<0.000000e+00> : vector<16x32xf32>
    %50 = tpu.matmul %49, %3, %cst_22 {dimension_numbers = #tpu.dot_dimension_numbers<[1], [0], [0], [1], [0, 0, 1, 1], [], []>} : vector<16x4xbf16>, vector<4x32xbf16>, vector<16x32xf32> -> vector<16x32xf32>
    %51 = arith.addf %47, %50 : vector<16x32xf32>
    %cst_23 = arith.constant 0.000000e+00 : f32
    %52 = vector.broadcast %cst_23 : f32 to vector<16x32xf32>
    %53 = arith.maximumf %51, %52 : vector<16x32xf32>
    %54 = arith.truncf %53 : vector<16x32xf32> to vector<16x32xbf16>
    %cst_24 = arith.constant dense<0.000000e+00> : vector<16x32xf32>
    %55 = tpu.matmul %54, %5, %cst_24 {dimension_numbers = #tpu.dot_dimension_numbers<[1], [0], [0], [1], [0, 0, 1, 1], [], []>} : vector<16x32xbf16>, vector<32x32xbf16>, vector<16x32xf32> -> vector<16x32xf32>
    %56 = vector.broadcast %6 : vector<1x32xf32> to vector<16x32xf32>
    %57 = arith.addf %55, %56 : vector<16x32xf32>
    %cst_25 = arith.constant 0.000000e+00 : f32
    %58 = vector.broadcast %cst_25 : f32 to vector<16x32xf32>
    %59 = arith.maximumf %57, %58 : vector<16x32xf32>
    %60 = arith.subf %43, %0 : vector<16x4xf32>
    %61 = arith.truncf %60 : vector<16x4xf32> to vector<16x4xbf16>
    %cst_26 = arith.constant dense<0.000000e+00> : vector<16x32xf32>
    %62 = tpu.matmul %61, %3, %cst_26 {dimension_numbers = #tpu.dot_dimension_numbers<[1], [0], [0], [1], [0, 0, 1, 1], [], []>} : vector<16x4xbf16>, vector<4x32xbf16>, vector<16x32xf32> -> vector<16x32xf32>
    %63 = arith.addf %47, %62 : vector<16x32xf32>
    %cst_27 = arith.constant 0.000000e+00 : f32
    %64 = vector.broadcast %cst_27 : f32 to vector<16x32xf32>
    %65 = arith.maximumf %63, %64 : vector<16x32xf32>
    %66 = arith.truncf %65 : vector<16x32xf32> to vector<16x32xbf16>
    %cst_28 = arith.constant dense<0.000000e+00> : vector<16x32xf32>
    %67 = tpu.matmul %66, %5, %cst_28 {dimension_numbers = #tpu.dot_dimension_numbers<[1], [0], [0], [1], [0, 0, 1, 1], [], []>} : vector<16x32xbf16>, vector<32x32xbf16>, vector<16x32xf32> -> vector<16x32xf32>
    %68 = vector.broadcast %6 : vector<1x32xf32> to vector<16x32xf32>
    %69 = arith.addf %67, %68 : vector<16x32xf32>
    %cst_29 = arith.constant 0.000000e+00 : f32
    %70 = vector.broadcast %cst_29 : f32 to vector<16x32xf32>
    %71 = arith.maximumf %69, %70 : vector<16x32xf32>
    %72 = arith.maximumf %59, %71 : vector<16x32xf32>
    %c0_30 = arith.constant 0 : index
    %c0_31 = arith.constant 0 : index
    %73 = vector.load %arg7[%c0_30, %c0_31] : memref<32x32xbf16, #tpu.memory_space<vmem>>, vector<32x32xbf16>
    %c0_32 = arith.constant 0 : index
    %c0_33 = arith.constant 0 : index
    %74 = vector.load %arg8[%c0_32, %c0_33] : memref<32x32xbf16, #tpu.memory_space<vmem>>, vector<32x32xbf16>
    %c0_34 = arith.constant 0 : index
    %c0_35 = arith.constant 0 : index
    %75 = vector.load %arg9[%c0_34, %c0_35] : memref<1x32xf32, #tpu.memory_space<vmem>>, vector<1x32xf32>
    %cst_36 = arith.constant dense<0.000000e+00> : vector<16x16xf32>
    %76 = tpu.matmul %72, %72, %cst_36 {dimension_numbers = #tpu.dot_dimension_numbers<[1], [1], [0], [0], [0, 0, 1, 0], [], []>} : vector<16x32xf32>, vector<16x32xf32>, vector<16x16xf32> -> vector<16x16xf32>
    %77 = arith.mulf %72, %72 : vector<16x32xf32>
    %cst_37 = arith.constant dense<0.000000e+00> : vector<16xf32>
    %78 = vector.multi_reduction <add>, %77, %cst_37 [1] : vector<16x32xf32> to vector<16xf32>
    %79 = vector.shape_cast %78 : vector<16xf32> to vector<16x1xf32>
    %80 = tpu.transpose %79, [1, 0] : vector<16x1xf32> -> vector<1x16xf32>
    %cst_38 = arith.constant 2.000000e+00 : f32
    %81 = vector.broadcast %cst_38 : f32 to vector<16x16xf32>
    %82 = arith.mulf %81, %76 : vector<16x16xf32>
    %83 = vector.broadcast %80 : vector<1x16xf32> to vector<16x16xf32>
    %84 = arith.subf %83, %82 : vector<16x16xf32>
    %cst_39 = arith.constant dense<0x7F800000> : vector<16xf32>
    %85 = vector.multi_reduction <minimumf>, %84, %cst_39 [1] : vector<16x16xf32> to vector<16xf32>
    %86 = vector.shape_cast %85 : vector<16xf32> to vector<16x1xf32>
    %87 = vector.broadcast %86 : vector<16x1xf32> to vector<16x16xf32>
    %88 = arith.cmpf ole, %84, %87 : vector<16x16xf32>
    %c16_i32_40 = arith.constant 16 : i32
    %89 = vector.broadcast %c16_i32_40 : i32 to vector<16x16xi32>
    %90 = arith.select %88, %1, %89 : vector<16x16xi1>, vector<16x16xi32>
    %cst_41 = arith.constant dense<2147483647> : vector<16xi32>
    %91 = vector.multi_reduction <minsi>, %90, %cst_41 [1] : vector<16x16xi32> to vector<16xi32>
    %92 = vector.shape_cast %91 : vector<16xi32> to vector<16x1xi32>
    %93 = vector.broadcast %92 : vector<16x1xi32> to vector<16x16xi32>
    %94 = arith.cmpi eq, %1, %93 : vector<16x16xi32>
    %95 = arith.extui %94 : vector<16x16xi1> to vector<16x16xi32>
    %96 = arith.sitofp %95 : vector<16x16xi32> to vector<16x16xf32>
    %cst_42 = arith.constant 1.000000e+30 : f32
    %97 = vector.broadcast %cst_42 : f32 to vector<16x16xf32>
    %98 = arith.select %94, %97, %84 : vector<16x16xi1>, vector<16x16xf32>
    %cst_43 = arith.constant dense<0x7F800000> : vector<16xf32>
    %99 = vector.multi_reduction <minimumf>, %98, %cst_43 [1] : vector<16x16xf32> to vector<16xf32>
    %100 = vector.shape_cast %99 : vector<16xf32> to vector<16x1xf32>
    %101 = vector.broadcast %100 : vector<16x1xf32> to vector<16x16xf32>
    %102 = arith.cmpf ole, %98, %101 : vector<16x16xf32>
    %c16_i32_44 = arith.constant 16 : i32
    %103 = vector.broadcast %c16_i32_44 : i32 to vector<16x16xi32>
    %104 = arith.select %102, %1, %103 : vector<16x16xi1>, vector<16x16xi32>
    %cst_45 = arith.constant dense<2147483647> : vector<16xi32>
    %105 = vector.multi_reduction <minsi>, %104, %cst_45 [1] : vector<16x16xi32> to vector<16xi32>
    %106 = vector.shape_cast %105 : vector<16xi32> to vector<16x1xi32>
    %107 = vector.broadcast %106 : vector<16x1xi32> to vector<16x16xi32>
    %108 = arith.cmpi eq, %1, %107 : vector<16x16xi32>
    %109 = arith.extui %108 : vector<16x16xi1> to vector<16x16xi32>
    %110 = arith.sitofp %109 : vector<16x16xi32> to vector<16x16xf32>
    %cst_46 = arith.constant dense<0.000000e+00> : vector<16x32xf32>
    %111 = tpu.matmul %96, %72, %cst_46 {dimension_numbers = #tpu.dot_dimension_numbers<[1], [0], [0], [1], [0, 0, 1, 1], [], []>} : vector<16x16xf32>, vector<16x32xf32>, vector<16x32xf32> -> vector<16x32xf32>
    %cst_47 = arith.constant dense<0.000000e+00> : vector<16x32xf32>
    %112 = tpu.matmul %110, %72, %cst_47 {dimension_numbers = #tpu.dot_dimension_numbers<[1], [0], [0], [1], [0, 0, 1, 1], [], []>} : vector<16x16xf32>, vector<16x32xf32>, vector<16x32xf32> -> vector<16x32xf32>
    %113 = arith.truncf %72 : vector<16x32xf32> to vector<16x32xbf16>
    %cst_48 = arith.constant dense<0.000000e+00> : vector<16x32xf32>
    %114 = tpu.matmul %113, %73, %cst_48 {dimension_numbers = #tpu.dot_dimension_numbers<[1], [0], [0], [1], [0, 0, 1, 1], [], []>} : vector<16x32xbf16>, vector<32x32xbf16>, vector<16x32xf32> -> vector<16x32xf32>
    %115 = vector.broadcast %75 : vector<1x32xf32> to vector<16x32xf32>
    %116 = arith.addf %114, %115 : vector<16x32xf32>
    %117 = arith.subf %111, %72 : vector<16x32xf32>
    %118 = arith.truncf %117 : vector<16x32xf32> to vector<16x32xbf16>
    %cst_49 = arith.constant dense<0.000000e+00> : vector<16x32xf32>
    %119 = tpu.matmul %118, %74, %cst_49 {dimension_numbers = #tpu.dot_dimension_numbers<[1], [0], [0], [1], [0, 0, 1, 1], [], []>} : vector<16x32xbf16>, vector<32x32xbf16>, vector<16x32xf32> -> vector<16x32xf32>
    %120 = arith.addf %116, %119 : vector<16x32xf32>
    %cst_50 = arith.constant 0.000000e+00 : f32
    %121 = vector.broadcast %cst_50 : f32 to vector<16x32xf32>
    %122 = arith.maximumf %120, %121 : vector<16x32xf32>
    %123 = arith.subf %112, %72 : vector<16x32xf32>
    %124 = arith.truncf %123 : vector<16x32xf32> to vector<16x32xbf16>
    %cst_51 = arith.constant dense<0.000000e+00> : vector<16x32xf32>
    %125 = tpu.matmul %124, %74, %cst_51 {dimension_numbers = #tpu.dot_dimension_numbers<[1], [0], [0], [1], [0, 0, 1, 1], [], []>} : vector<16x32xbf16>, vector<32x32xbf16>, vector<16x32xf32> -> vector<16x32xf32>
    %126 = arith.addf %116, %125 : vector<16x32xf32>
    %cst_52 = arith.constant 0.000000e+00 : f32
    %127 = vector.broadcast %cst_52 : f32 to vector<16x32xf32>
    %128 = arith.maximumf %126, %127 : vector<16x32xf32>
    %129 = arith.maximumf %122, %128 : vector<16x32xf32>
    %c0_53 = arith.constant 0 : index
    %c0_54 = arith.constant 0 : index
    %130 = vector.load %arg10[%c0_53, %c0_54] : memref<32x32xbf16, #tpu.memory_space<vmem>>, vector<32x32xbf16>
    %c0_55 = arith.constant 0 : index
    %c0_56 = arith.constant 0 : index
    %131 = vector.load %arg11[%c0_55, %c0_56] : memref<32x32xbf16, #tpu.memory_space<vmem>>, vector<32x32xbf16>
    %c0_57 = arith.constant 0 : index
    %c0_58 = arith.constant 0 : index
    %132 = vector.load %arg12[%c0_57, %c0_58] : memref<1x32xf32, #tpu.memory_space<vmem>>, vector<1x32xf32>
    %cst_59 = arith.constant dense<0.000000e+00> : vector<16x16xf32>
    %133 = tpu.matmul %129, %129, %cst_59 {dimension_numbers = #tpu.dot_dimension_numbers<[1], [1], [0], [0], [0, 0, 1, 0], [], []>} : vector<16x32xf32>, vector<16x32xf32>, vector<16x16xf32> -> vector<16x16xf32>
    %134 = arith.mulf %129, %129 : vector<16x32xf32>
    %cst_60 = arith.constant dense<0.000000e+00> : vector<16xf32>
    %135 = vector.multi_reduction <add>, %134, %cst_60 [1] : vector<16x32xf32> to vector<16xf32>
    %136 = vector.shape_cast %135 : vector<16xf32> to vector<16x1xf32>
    %137 = tpu.transpose %136, [1, 0] : vector<16x1xf32> -> vector<1x16xf32>
    %cst_61 = arith.constant 2.000000e+00 : f32
    %138 = vector.broadcast %cst_61 : f32 to vector<16x16xf32>
    %139 = arith.mulf %138, %133 : vector<16x16xf32>
    %140 = vector.broadcast %137 : vector<1x16xf32> to vector<16x16xf32>
    %141 = arith.subf %140, %139 : vector<16x16xf32>
    %cst_62 = arith.constant dense<0x7F800000> : vector<16xf32>
    %142 = vector.multi_reduction <minimumf>, %141, %cst_62 [1] : vector<16x16xf32> to vector<16xf32>
    %143 = vector.shape_cast %142 : vector<16xf32> to vector<16x1xf32>
    %144 = vector.broadcast %143 : vector<16x1xf32> to vector<16x16xf32>
    %145 = arith.cmpf ole, %141, %144 : vector<16x16xf32>
    %c16_i32_63 = arith.constant 16 : i32
    %146 = vector.broadcast %c16_i32_63 : i32 to vector<16x16xi32>
    %147 = arith.select %145, %1, %146 : vector<16x16xi1>, vector<16x16xi32>
    %cst_64 = arith.constant dense<2147483647> : vector<16xi32>
    %148 = vector.multi_reduction <minsi>, %147, %cst_64 [1] : vector<16x16xi32> to vector<16xi32>
    %149 = vector.shape_cast %148 : vector<16xi32> to vector<16x1xi32>
    %150 = vector.broadcast %149 : vector<16x1xi32> to vector<16x16xi32>
    %151 = arith.cmpi eq, %1, %150 : vector<16x16xi32>
    %152 = arith.extui %151 : vector<16x16xi1> to vector<16x16xi32>
    %153 = arith.sitofp %152 : vector<16x16xi32> to vector<16x16xf32>
    %cst_65 = arith.constant 1.000000e+30 : f32
    %154 = vector.broadcast %cst_65 : f32 to vector<16x16xf32>
    %155 = arith.select %151, %154, %141 : vector<16x16xi1>, vector<16x16xf32>
    %cst_66 = arith.constant dense<0x7F800000> : vector<16xf32>
    %156 = vector.multi_reduction <minimumf>, %155, %cst_66 [1] : vector<16x16xf32> to vector<16xf32>
    %157 = vector.shape_cast %156 : vector<16xf32> to vector<16x1xf32>
    %158 = vector.broadcast %157 : vector<16x1xf32> to vector<16x16xf32>
    %159 = arith.cmpf ole, %155, %158 : vector<16x16xf32>
    %c16_i32_67 = arith.constant 16 : i32
    %160 = vector.broadcast %c16_i32_67 : i32 to vector<16x16xi32>
    %161 = arith.select %159, %1, %160 : vector<16x16xi1>, vector<16x16xi32>
    %cst_68 = arith.constant dense<2147483647> : vector<16xi32>
    %162 = vector.multi_reduction <minsi>, %161, %cst_68 [1] : vector<16x16xi32> to vector<16xi32>
    %163 = vector.shape_cast %162 : vector<16xi32> to vector<16x1xi32>
    %164 = vector.broadcast %163 : vector<16x1xi32> to vector<16x16xi32>
    %165 = arith.cmpi eq, %1, %164 : vector<16x16xi32>
    %166 = arith.extui %165 : vector<16x16xi1> to vector<16x16xi32>
    %167 = arith.sitofp %166 : vector<16x16xi32> to vector<16x16xf32>
    %cst_69 = arith.constant dense<0.000000e+00> : vector<16x32xf32>
    %168 = tpu.matmul %153, %129, %cst_69 {dimension_numbers = #tpu.dot_dimension_numbers<[1], [0], [0], [1], [0, 0, 1, 1], [], []>} : vector<16x16xf32>, vector<16x32xf32>, vector<16x32xf32> -> vector<16x32xf32>
    %cst_70 = arith.constant dense<0.000000e+00> : vector<16x32xf32>
    %169 = tpu.matmul %167, %129, %cst_70 {dimension_numbers = #tpu.dot_dimension_numbers<[1], [0], [0], [1], [0, 0, 1, 1], [], []>} : vector<16x16xf32>, vector<16x32xf32>, vector<16x32xf32> -> vector<16x32xf32>
    %170 = arith.truncf %129 : vector<16x32xf32> to vector<16x32xbf16>
    %cst_71 = arith.constant dense<0.000000e+00> : vector<16x32xf32>
    %171 = tpu.matmul %170, %130, %cst_71 {dimension_numbers = #tpu.dot_dimension_numbers<[1], [0], [0], [1], [0, 0, 1, 1], [], []>} : vector<16x32xbf16>, vector<32x32xbf16>, vector<16x32xf32> -> vector<16x32xf32>
    %172 = vector.broadcast %132 : vector<1x32xf32> to vector<16x32xf32>
    %173 = arith.addf %171, %172 : vector<16x32xf32>
    %174 = arith.subf %168, %129 : vector<16x32xf32>
    %175 = arith.truncf %174 : vector<16x32xf32> to vector<16x32xbf16>
    %cst_72 = arith.constant dense<0.000000e+00> : vector<16x32xf32>
    %176 = tpu.matmul %175, %131, %cst_72 {dimension_numbers = #tpu.dot_dimension_numbers<[1], [0], [0], [1], [0, 0, 1, 1], [], []>} : vector<16x32xbf16>, vector<32x32xbf16>, vector<16x32xf32> -> vector<16x32xf32>
    %177 = arith.addf %173, %176 : vector<16x32xf32>
    %cst_73 = arith.constant 0.000000e+00 : f32
    %178 = vector.broadcast %cst_73 : f32 to vector<16x32xf32>
    %179 = arith.maximumf %177, %178 : vector<16x32xf32>
    %180 = arith.subf %169, %129 : vector<16x32xf32>
    %181 = arith.truncf %180 : vector<16x32xf32> to vector<16x32xbf16>
    %cst_74 = arith.constant dense<0.000000e+00> : vector<16x32xf32>
    %182 = tpu.matmul %181, %131, %cst_74 {dimension_numbers = #tpu.dot_dimension_numbers<[1], [0], [0], [1], [0, 0, 1, 1], [], []>} : vector<16x32xbf16>, vector<32x32xbf16>, vector<16x32xf32> -> vector<16x32xf32>
    %183 = arith.addf %173, %182 : vector<16x32xf32>
    %cst_75 = arith.constant 0.000000e+00 : f32
    %184 = vector.broadcast %cst_75 : f32 to vector<16x32xf32>
    %185 = arith.maximumf %183, %184 : vector<16x32xf32>
    %186 = arith.maximumf %179, %185 : vector<16x32xf32>
    %187 = tpu.concatenate %72, %129, %186 in 1 : vector<16x32xf32>, vector<16x32xf32>, vector<16x32xf32> -> vector<16x96xf32>
    %cst_76 = arith.constant dense<0.000000e+00> : vector<96xf32>
    %188 = vector.multi_reduction <add>, %187, %cst_76 [0] : vector<16x96xf32> to vector<96xf32>
    %189 = vector.shape_cast %188 : vector<96xf32> to vector<1x96xf32>
    %cst_77 = arith.constant 6.250000e-02 : f32
    %190 = vector.broadcast %cst_77 : f32 to vector<1x96xf32>
    %191 = arith.mulf %189, %190 : vector<1x96xf32>
    %cst_78 = arith.constant dense<0xFF800000> : vector<96xf32>
    %192 = vector.multi_reduction <maximumf>, %187, %cst_78 [0] : vector<16x96xf32> to vector<96xf32>
    %193 = vector.shape_cast %192 : vector<96xf32> to vector<1x96xf32>
    %194 = tpu.concatenate %191, %193 in 1 : vector<1x96xf32>, vector<1x96xf32> -> vector<1x192xf32>
    %c0_79 = arith.constant 0 : index
    %c0_80 = arith.constant 0 : index
    %195 = vector.load %arg13[%c0_79, %c0_80] : memref<1x192xf32, #tpu.memory_space<vmem>>, vector<1x192xf32>
    %196 = arith.mulf %194, %195 : vector<1x192xf32>
    %c0_81 = arith.constant 0 : index
    %c0_82 = arith.constant 0 : index
    %197 = vector.load %arg14[%c0_81, %c0_82] : memref<1x192xf32, #tpu.memory_space<vmem>>, vector<1x192xf32>
    %198 = arith.addf %196, %197 : vector<1x192xf32>
    %199 = arith.truncf %198 : vector<1x192xf32> to vector<1x192xbf16>
    %c0_83 = arith.constant 0 : index
    %c0_84 = arith.constant 0 : index
    %c0_85 = arith.constant 0 : index
    %200 = vector.load %arg15[%c0_83, %c0_84, %c0_85] : memref<5x192x192xbf16, #tpu.memory_space<vmem>>, vector<1x192x192xbf16>
    %201 = vector.shape_cast %200 : vector<1x192x192xbf16> to vector<192x192xbf16>
    %cst_86 = arith.constant dense<0.000000e+00> : vector<1x192xf32>
    %202 = tpu.matmul %199, %201, %cst_86 {dimension_numbers = #tpu.dot_dimension_numbers<[1], [0], [0], [1], [0, 0, 1, 1], [], []>} : vector<1x192xbf16>, vector<192x192xbf16>, vector<1x192xf32> -> vector<1x192xf32>
    %c0_87 = arith.constant 0 : index
    %c0_88 = arith.constant 0 : index
    %c0_89 = arith.constant 0 : index
    %203 = vector.load %arg16[%c0_87, %c0_88, %c0_89] : memref<5x1x192xf32, #tpu.memory_space<vmem>>, vector<1x1x192xf32>
    %204 = vector.shape_cast %203 : vector<1x1x192xf32> to vector<1x192xf32>
    %205 = arith.addf %202, %204 : vector<1x192xf32>
    %cst_90 = arith.constant 0.000000e+00 : f32
    %206 = vector.broadcast %cst_90 : f32 to vector<1x192xf32>
    %207 = arith.cmpf ogt, %205, %206 : vector<1x192xf32>
    %cst_91 = arith.constant 0.00999999977 : f32
    %208 = vector.broadcast %cst_91 : f32 to vector<1x192xf32>
    %209 = arith.mulf %208, %205 : vector<1x192xf32>
    %210 = arith.select %207, %205, %209 : vector<1x192xi1>, vector<1x192xf32>
    %211 = arith.truncf %210 : vector<1x192xf32> to vector<1x192xbf16>
    %c1 = arith.constant 1 : index
    %c0_92 = arith.constant 0 : index
    %c0_93 = arith.constant 0 : index
    %212 = vector.load %arg15[%c1, %c0_92, %c0_93] : memref<5x192x192xbf16, #tpu.memory_space<vmem>>, vector<1x192x192xbf16>
    %213 = vector.shape_cast %212 : vector<1x192x192xbf16> to vector<192x192xbf16>
    %cst_94 = arith.constant dense<0.000000e+00> : vector<1x192xf32>
    %214 = tpu.matmul %211, %213, %cst_94 {dimension_numbers = #tpu.dot_dimension_numbers<[1], [0], [0], [1], [0, 0, 1, 1], [], []>} : vector<1x192xbf16>, vector<192x192xbf16>, vector<1x192xf32> -> vector<1x192xf32>
    %c1_95 = arith.constant 1 : index
    %c0_96 = arith.constant 0 : index
    %c0_97 = arith.constant 0 : index
    %215 = vector.load %arg16[%c1_95, %c0_96, %c0_97] : memref<5x1x192xf32, #tpu.memory_space<vmem>>, vector<1x1x192xf32>
    %216 = vector.shape_cast %215 : vector<1x1x192xf32> to vector<1x192xf32>
    %217 = arith.addf %214, %216 : vector<1x192xf32>
    %cst_98 = arith.constant 0.000000e+00 : f32
    %218 = vector.broadcast %cst_98 : f32 to vector<1x192xf32>
    %219 = arith.cmpf ogt, %217, %218 : vector<1x192xf32>
    %cst_99 = arith.constant 0.00999999977 : f32
    %220 = vector.broadcast %cst_99 : f32 to vector<1x192xf32>
    %221 = arith.mulf %220, %217 : vector<1x192xf32>
    %222 = arith.select %219, %217, %221 : vector<1x192xi1>, vector<1x192xf32>
    %223 = arith.truncf %222 : vector<1x192xf32> to vector<1x192xbf16>
    %c2 = arith.constant 2 : index
    %c0_100 = arith.constant 0 : index
    %c0_101 = arith.constant 0 : index
    %224 = vector.load %arg15[%c2, %c0_100, %c0_101] : memref<5x192x192xbf16, #tpu.memory_space<vmem>>, vector<1x192x192xbf16>
    %225 = vector.shape_cast %224 : vector<1x192x192xbf16> to vector<192x192xbf16>
    %cst_102 = arith.constant dense<0.000000e+00> : vector<1x192xf32>
    %226 = tpu.matmul %223, %225, %cst_102 {dimension_numbers = #tpu.dot_dimension_numbers<[1], [0], [0], [1], [0, 0, 1, 1], [], []>} : vector<1x192xbf16>, vector<192x192xbf16>, vector<1x192xf32> -> vector<1x192xf32>
    %c2_103 = arith.constant 2 : index
    %c0_104 = arith.constant 0 : index
    %c0_105 = arith.constant 0 : index
    %227 = vector.load %arg16[%c2_103, %c0_104, %c0_105] : memref<5x1x192xf32, #tpu.memory_space<vmem>>, vector<1x1x192xf32>
    %228 = vector.shape_cast %227 : vector<1x1x192xf32> to vector<1x192xf32>
    %229 = arith.addf %226, %228 : vector<1x192xf32>
    %cst_106 = arith.constant 0.000000e+00 : f32
    %230 = vector.broadcast %cst_106 : f32 to vector<1x192xf32>
    %231 = arith.cmpf ogt, %229, %230 : vector<1x192xf32>
    %cst_107 = arith.constant 0.00999999977 : f32
    %232 = vector.broadcast %cst_107 : f32 to vector<1x192xf32>
    %233 = arith.mulf %232, %229 : vector<1x192xf32>
    %234 = arith.select %231, %229, %233 : vector<1x192xi1>, vector<1x192xf32>
    %235 = arith.truncf %234 : vector<1x192xf32> to vector<1x192xbf16>
    %c3 = arith.constant 3 : index
    %c0_108 = arith.constant 0 : index
    %c0_109 = arith.constant 0 : index
    %236 = vector.load %arg15[%c3, %c0_108, %c0_109] : memref<5x192x192xbf16, #tpu.memory_space<vmem>>, vector<1x192x192xbf16>
    %237 = vector.shape_cast %236 : vector<1x192x192xbf16> to vector<192x192xbf16>
    %cst_110 = arith.constant dense<0.000000e+00> : vector<1x192xf32>
    %238 = tpu.matmul %235, %237, %cst_110 {dimension_numbers = #tpu.dot_dimension_numbers<[1], [0], [0], [1], [0, 0, 1, 1], [], []>} : vector<1x192xbf16>, vector<192x192xbf16>, vector<1x192xf32> -> vector<1x192xf32>
    %c3_111 = arith.constant 3 : index
    %c0_112 = arith.constant 0 : index
    %c0_113 = arith.constant 0 : index
    %239 = vector.load %arg16[%c3_111, %c0_112, %c0_113] : memref<5x1x192xf32, #tpu.memory_space<vmem>>, vector<1x1x192xf32>
    %240 = vector.shape_cast %239 : vector<1x1x192xf32> to vector<1x192xf32>
    %241 = arith.addf %238, %240 : vector<1x192xf32>
    %cst_114 = arith.constant 0.000000e+00 : f32
    %242 = vector.broadcast %cst_114 : f32 to vector<1x192xf32>
    %243 = arith.cmpf ogt, %241, %242 : vector<1x192xf32>
    %cst_115 = arith.constant 0.00999999977 : f32
    %244 = vector.broadcast %cst_115 : f32 to vector<1x192xf32>
    %245 = arith.mulf %244, %241 : vector<1x192xf32>
    %246 = arith.select %243, %241, %245 : vector<1x192xi1>, vector<1x192xf32>
    %247 = arith.truncf %246 : vector<1x192xf32> to vector<1x192xbf16>
    %c4 = arith.constant 4 : index
    %c0_116 = arith.constant 0 : index
    %c0_117 = arith.constant 0 : index
    %248 = vector.load %arg15[%c4, %c0_116, %c0_117] : memref<5x192x192xbf16, #tpu.memory_space<vmem>>, vector<1x192x192xbf16>
    %249 = vector.shape_cast %248 : vector<1x192x192xbf16> to vector<192x192xbf16>
    %cst_118 = arith.constant dense<0.000000e+00> : vector<1x192xf32>
    %250 = tpu.matmul %247, %249, %cst_118 {dimension_numbers = #tpu.dot_dimension_numbers<[1], [0], [0], [1], [0, 0, 1, 1], [], []>} : vector<1x192xbf16>, vector<192x192xbf16>, vector<1x192xf32> -> vector<1x192xf32>
    %c4_119 = arith.constant 4 : index
    %c0_120 = arith.constant 0 : index
    %c0_121 = arith.constant 0 : index
    %251 = vector.load %arg16[%c4_119, %c0_120, %c0_121] : memref<5x1x192xf32, #tpu.memory_space<vmem>>, vector<1x1x192xf32>
    %252 = vector.shape_cast %251 : vector<1x1x192xf32> to vector<1x192xf32>
    %253 = arith.addf %250, %252 : vector<1x192xf32>
    %cst_122 = arith.constant 0.000000e+00 : f32
    %254 = vector.broadcast %cst_122 : f32 to vector<1x192xf32>
    %255 = arith.cmpf ogt, %253, %254 : vector<1x192xf32>
    %cst_123 = arith.constant 0.00999999977 : f32
    %256 = vector.broadcast %cst_123 : f32 to vector<1x192xf32>
    %257 = arith.mulf %256, %253 : vector<1x192xf32>
    %258 = arith.select %255, %253, %257 : vector<1x192xi1>, vector<1x192xf32>
    %259 = arith.truncf %258 : vector<1x192xf32> to vector<1x192xbf16>
    %c0_124 = arith.constant 0 : index
    %c0_125 = arith.constant 0 : index
    %260 = vector.load %arg17[%c0_124, %c0_125] : memref<192x128xbf16, #tpu.memory_space<vmem>>, vector<192x128xbf16>
    %cst_126 = arith.constant dense<0.000000e+00> : vector<1x128xf32>
    %261 = tpu.matmul %259, %260, %cst_126 {dimension_numbers = #tpu.dot_dimension_numbers<[1], [0], [0], [1], [0, 0, 1, 1], [], []>} : vector<1x192xbf16>, vector<192x128xbf16>, vector<1x128xf32> -> vector<1x128xf32>
    %c0_127 = arith.constant 0 : index
    %c0_128 = arith.constant 0 : index
    %262 = vector.load %arg18[%c0_127, %c0_128] : memref<1x128xf32, #tpu.memory_space<vmem>>, vector<1x128xf32>
    %263 = arith.addf %261, %262 : vector<1x128xf32>
    %264 = vector.shape_cast %263 : vector<1x128xf32> to vector<1x128xf32>
    %265 = vector.broadcast %264 : vector<1x128xf32> to vector<8x128xf32>
    %c0_129 = arith.constant 0 : index
    %c0_130 = arith.constant 0 : index
    %266 = vector.load %arg19[%c0_129, %c0_130] : memref<8x128xf32, #tpu.memory_space<vmem>>, vector<8x128xf32>
    tpu.vector_store %arg19[%c0_129, %c0_130], %265 {strides = array<i32>} : memref<8x128xf32, #tpu.memory_space<vmem>>, vector<8x128xf32>,
    return
  }
  func.func @transform_0(%arg0: i32) -> (i32, i32) {
    %c0_i32 = arith.constant 0 : i32
    %c0_i32_0 = arith.constant 0 : i32
    return %arg0, %c0_i32 : i32, i32
  }
  func.func @transform_1(%arg0: i32) -> (i32, i32) {
    %c0_i32 = arith.constant 0 : i32
    %c0_i32_0 = arith.constant 0 : i32
    %c0_i32_1 = arith.constant 0 : i32
    return %c0_i32, %c0_i32_0 : i32, i32
  }
  func.func @transform_2(%arg0: i32) -> (i32, i32) {
    %c0_i32 = arith.constant 0 : i32
    %c0_i32_0 = arith.constant 0 : i32
    %c0_i32_1 = arith.constant 0 : i32
    return %c0_i32, %c0_i32_0 : i32, i32
  }
  func.func @transform_3(%arg0: i32) -> (i32, i32) {
    %c0_i32 = arith.constant 0 : i32
    %c0_i32_0 = arith.constant 0 : i32
    %c0_i32_1 = arith.constant 0 : i32
    return %c0_i32, %c0_i32_0 : i32, i32
  }
  func.func @transform_4(%arg0: i32) -> (i32, i32) {
    %c0_i32 = arith.constant 0 : i32
    %c0_i32_0 = arith.constant 0 : i32
    %c0_i32_1 = arith.constant 0 : i32
    return %c0_i32, %c0_i32_0 : i32, i32
  }
  func.func @transform_5(%arg0: i32) -> (i32, i32) {
    %c0_i32 = arith.constant 0 : i32
    %c0_i32_0 = arith.constant 0 : i32
    %c0_i32_1 = arith.constant 0 : i32
    return %c0_i32, %c0_i32_0 : i32, i32
  }
  func.func @transform_6(%arg0: i32) -> (i32, i32) {
    %c0_i32 = arith.constant 0 : i32
    %c0_i32_0 = arith.constant 0 : i32
    %c0_i32_1 = arith.constant 0 : i32
    return %c0_i32, %c0_i32_0 : i32, i32
  }
  func.func @transform_7(%arg0: i32) -> (i32, i32) {
    %c0_i32 = arith.constant 0 : i32
    %c0_i32_0 = arith.constant 0 : i32
    %c0_i32_1 = arith.constant 0 : i32
    return %c0_i32, %c0_i32_0 : i32, i32
  }
  func.func @transform_8(%arg0: i32) -> (i32, i32) {
    %c0_i32 = arith.constant 0 : i32
    %c0_i32_0 = arith.constant 0 : i32
    %c0_i32_1 = arith.constant 0 : i32
    return %c0_i32, %c0_i32_0 : i32, i32
  }
  func.func @transform_9(%arg0: i32) -> (i32, i32) {
    %c0_i32 = arith.constant 0 : i32
    %c0_i32_0 = arith.constant 0 : i32
    %c0_i32_1 = arith.constant 0 : i32
    return %c0_i32, %c0_i32_0 : i32, i32
  }
  func.func @transform_10(%arg0: i32) -> (i32, i32) {
    %c0_i32 = arith.constant 0 : i32
    %c0_i32_0 = arith.constant 0 : i32
    %c0_i32_1 = arith.constant 0 : i32
    return %c0_i32, %c0_i32_0 : i32, i32
  }
  func.func @transform_11(%arg0: i32) -> (i32, i32) {
    %c0_i32 = arith.constant 0 : i32
    %c0_i32_0 = arith.constant 0 : i32
    %c0_i32_1 = arith.constant 0 : i32
    return %c0_i32, %c0_i32_0 : i32, i32
  }
  func.func @transform_12(%arg0: i32) -> (i32, i32) {
    %c0_i32 = arith.constant 0 : i32
    %c0_i32_0 = arith.constant 0 : i32
    %c0_i32_1 = arith.constant 0 : i32
    return %c0_i32, %c0_i32_0 : i32, i32
  }
  func.func @transform_13(%arg0: i32) -> (i32, i32) {
    %c0_i32 = arith.constant 0 : i32
    %c0_i32_0 = arith.constant 0 : i32
    %c0_i32_1 = arith.constant 0 : i32
    return %c0_i32, %c0_i32_0 : i32, i32
  }
  func.func @transform_14(%arg0: i32) -> (i32, i32, i32) {
    %c0_i32 = arith.constant 0 : i32
    %c0_i32_0 = arith.constant 0 : i32
    %c0_i32_1 = arith.constant 0 : i32
    %c0_i32_2 = arith.constant 0 : i32
    return %c0_i32, %c0_i32_0, %c0_i32_1 : i32, i32, i32
  }
  func.func @transform_15(%arg0: i32) -> (i32, i32, i32) {
    %c0_i32 = arith.constant 0 : i32
    %c0_i32_0 = arith.constant 0 : i32
    %c0_i32_1 = arith.constant 0 : i32
    %c0_i32_2 = arith.constant 0 : i32
    return %c0_i32, %c0_i32_0, %c0_i32_1 : i32, i32, i32
  }
  func.func @transform_16(%arg0: i32) -> (i32, i32) {
    %c0_i32 = arith.constant 0 : i32
    %c0_i32_0 = arith.constant 0 : i32
    %c0_i32_1 = arith.constant 0 : i32
    return %c0_i32, %c0_i32_0 : i32, i32
  }
  func.func @transform_17(%arg0: i32) -> (i32, i32) {
    %c0_i32 = arith.constant 0 : i32
    %c0_i32_0 = arith.constant 0 : i32
    %c0_i32_1 = arith.constant 0 : i32
    return %c0_i32, %c0_i32_0 : i32, i32
  }
  func.func @transform_18(%arg0: i32) -> (i32, i32) {
    %c0_i32 = arith.constant 0 : i32
    %c0_i32_0 = arith.constant 0 : i32
    return %arg0, %c0_i32 : i32, i32
  }
}

</mosaic_0001>

<llo_original>
// kernel: tpu_custom_call.1
$region0: #{tpu_custom_call.1}
  #allocation0 [shape = 'u32[]', space=smem, size = 0x4, offset = 0x4, fixed_abs, tag = 'smem constant byte address 0x4 - core index']
  #allocation1 [shape = 'u32[144,128]{1,0:T(1,128)}', space=vmem, size = 0x12000, scoped, tag = 'internal scratch']
  %s0 = inlined_call_operand.vmem [shape: f32[32,4], index: 0, kind: input, shape index: {}]
  %s1 = inlined_call_operand.hbm [shape: bf16[4,32], index: 1, kind: input, shape index: {}]
  %s2 = inlined_call_operand.hbm [shape: bf16[4,32], index: 2, kind: input, shape index: {}]
  %s3 = inlined_call_operand.hbm [shape: f32[1,32], index: 3, kind: input, shape index: {}]
  %s4 = inlined_call_operand.hbm [shape: bf16[32,32], index: 4, kind: input, shape index: {}]
  %s5 = inlined_call_operand.hbm [shape: f32[1,32], index: 5, kind: input, shape index: {}]
  %s6 = inlined_call_operand.hbm [shape: bf16[32,32], index: 6, kind: input, shape index: {}]
  %s7 = inlined_call_operand.hbm [shape: bf16[32,32], index: 7, kind: input, shape index: {}]
  %s8 = inlined_call_operand.hbm [shape: f32[1,32], index: 8, kind: input, shape index: {}]
  %s9 = inlined_call_operand.hbm [shape: bf16[32,32], index: 9, kind: input, shape index: {}]
  %s10 = inlined_call_operand.hbm [shape: bf16[32,32], index: 10, kind: input, shape index: {}]
  %s11 = inlined_call_operand.hbm [shape: f32[1,32], index: 11, kind: input, shape index: {}]
  %s12 = inlined_call_operand.hbm [shape: f32[1,192], index: 12, kind: input, shape index: {}]
  %s13 = inlined_call_operand.hbm [shape: f32[1,192], index: 13, kind: input, shape index: {}]
  %s14 = inlined_call_operand.hbm [shape: bf16[5,192,192], index: 14, kind: input, shape index: {}]
  %s15 = inlined_call_operand.hbm [shape: f32[5,1,192], index: 15, kind: input, shape index: {}]
  %s16 = inlined_call_operand.vmem [shape: bf16[192,128], index: 16, kind: input, shape index: {}]
  %s17 = inlined_call_operand.vmem [shape: f32[1,128], index: 17, kind: input, shape index: {}]
  %s18 = inlined_call_operand.hbm [shape: f32[16,128], index: 18, kind: output, shape index: {}]
  %s19 = sld [smem:[#allocation0]]
  $region165: #{tpu_custom_call.1} parent=0
    _
  %s21 = ssub.s32 1, %s19
  %s22 = scalar_select 0, %s21, %s19
  $region1: #{tpu_custom_call.1} parent=0
    #allocation2 [shape = 'u8[1024]{0}', space=vmem, size = 0x400, scoped, tag = 'input window, operand 1, single buffered']
    #allocation3 [shape = 's32[2]{0}', space=sflag, size = 0x8, scoped, tag = 'scoped memory for tpu_custom_call.1']
    #allocation4 [shape = 's32[2]{0}', space=sflag, size = 0x8, scoped, tag = 'scoped memory for tpu_custom_call.1']
    #allocation5 [shape = 'u8[1024]{0}', space=vmem, size = 0x400, scoped, tag = 'input window, operand 2, single buffered']
    #allocation6 [shape = 's32[1]{0}', space=sflag, size = 0x4, scoped, tag = 'scoped memory for tpu_custom_call.1']
    #allocation7 [shape = 'u8[512]{0}', space=vmem, size = 0x400, scoped, tag = 'input window, operand 3, single buffered']
    #allocation8 [shape = 'u8[8192]{0}', space=vmem, size = 0x2000, scoped, tag = 'input window, operand 4, single buffered']
    #allocation9 [shape = 's32[1]{0}', space=sflag, size = 0x4, scoped, tag = 'scoped memory for tpu_custom_call.1']
    #allocation10 [shape = 'u8[512]{0}', space=vmem, size = 0x400, scoped, tag = 'input window, operand 5, single buffered']
    #allocation11 [shape = 'u8[8192]{0}', space=vmem, size = 0x2000, scoped, tag = 'input window, operand 6, single buffered']
    #allocation12 [shape = 's32[1]{0}', space=sflag, size = 0x4, scoped, tag = 'scoped memory for tpu_custom_call.1']
    #allocation13 [shape = 'u8[8192]{0}', space=vmem, size = 0x2000, scoped, tag = 'input window, operand 7, single buffered']
    #allocation14 [shape = 'u8[512]{0}', space=vmem, size = 0x400, scoped, tag = 'input window, operand 8, single buffered']
    #allocation15 [shape = 's32[1]{0}', space=sflag, size = 0x4, scoped, tag = 'scoped memory for tpu_custom_call.1']
    #allocation16 [shape = 'u8[8192]{0}', space=vmem, size = 0x2000, scoped, tag = 'input window, operand 9, single buffered']
    #allocation17 [shape = 'u8[8192]{0}', space=vmem, size = 0x2000, scoped, tag = 'input window, operand 10, single buffered']
    #allocation18 [shape = 's32[1]{0}', space=sflag, size = 0x4, scoped, tag = 'scoped memory for tpu_custom_call.1']
    #allocation19 [shape = 'u8[512]{0}', space=vmem, size = 0x400, scoped, tag = 'input window, operand 11, single buffered']
    #allocation20 [shape = 'u8[1024]{0}', space=vmem, size = 0x400, scoped, tag = 'input window, operand 12, single buffered']
    #allocation21 [shape = 's32[1]{0}', space=sflag, size = 0x4, scoped, tag = 'scoped memory for tpu_custom_call.1']
    #allocation22 [shape = 'u8[1024]{0}', space=vmem, size = 0x400, scoped, tag = 'input window, operand 13, single buffered']
    #allocation23 [shape = 'u8[491520]{0}', space=vmem, size = 0x78000, scoped, tag = 'input window, operand 14, single buffered']
    #allocation24 [shape = 's32[1]{0}', space=sflag, size = 0x4, scoped, tag = 'scoped memory for tpu_custom_call.1']
    #allocation25 [shape = 'u8[5120]{0}', space=vmem, size = 0x1400, scoped, tag = 'input window, operand 15, single buffered']
    #allocation26 [shape = 'u8[8192]{0}', space=vmem, size = 0x2000, scoped, tag = 'output window, operand 0']
    %23 = vsyncpa [#allocation3], 0
    %24 = vsyncpa [#allocation6], 0
    %25 = vsyncpa [#allocation9], 0
    %26 = vsyncpa [#allocation12], 0
    %27 = vsyncpa [#allocation15], 0
    %28 = vsyncpa [#allocation18], 0
    %29 = vsyncpa [#allocation21], 0
    %30 = vsyncpa [#allocation24], 0
    %31 = vsyncpa [#allocation4], 0
    %s32 = scalar_lea.sflag [#allocation4], 1
    %33 = vsyncpa %s32, 0
    loop: start=0, step=1, limit=4
    $region2: #{tpu_custom_call.1} parent=1 // loop_pre_header
      _
    $region3: #{tpu_custom_call.1} parent=1 // loop_header
      %s35 = sphi 0, %s39
      %p36 = scmp.ge.s32.totalorder %s35, 4
      %s45 = sphi 0, %s47
      %s48 = sphi 0, %s45
      %s49 = sphi 0, %s48
      %s65 = sphi 0, %s49
      %s69 = sphi 0, %s69
      %s71 = sphi 0, %s69
      %s72 = sphi 0, %s71
      %s86 = sphi 0, %s72
      %s90 = sphi 0, %s90
      %s92 = sphi 0, %s90
      %s93 = sphi 0, %s92
      %s107 = sphi 0, %s93
      %s111 = sphi 0, %s111
      %s113 = sphi 0, %s111
      %s114 = sphi 0, %s113
      %s128 = sphi 0, %s114
      %s132 = sphi 0, %s132
      %s134 = sphi 0, %s132
      %s135 = sphi 0, %s134
      %s149 = sphi 0, %s135
      %s153 = sphi 0, %s153
      %s155 = sphi 0, %s153
      %s156 = sphi 0, %s155
      %s170 = sphi 0, %s156
      %s174 = sphi 0, %s174
      %s176 = sphi 0, %s174
      %s177 = sphi 0, %s176
      %s191 = sphi 0, %s177
      %s195 = sphi 0, %s195
      %s197 = sphi 0, %s195
      %s198 = sphi 0, %s197
      %s212 = sphi 0, %s198
      %s216 = sphi 0, %s216
      %s218 = sphi 0, %s216
      %s219 = sphi 0, %s218
      %s233 = sphi 0, %s219
      %s237 = sphi 0, %s237
      %s239 = sphi 0, %s237
      %s240 = sphi 0, %s239
      %s254 = sphi 0, %s240
      %s258 = sphi 0, %s258
      %s260 = sphi 0, %s258
      %s261 = sphi 0, %s260
      %s275 = sphi 0, %s261
      %s279 = sphi 0, %s279
      %s281 = sphi 0, %s279
      %s282 = sphi 0, %s281
      %s296 = sphi 0, %s282
      %s300 = sphi 0, %s300
      %s302 = sphi 0, %s300
      %s303 = sphi 0, %s302
      %s317 = sphi 0, %s303
      %s321 = sphi 0, %s321
      %s323 = sphi 0, %s321
      %s324 = sphi 0, %s323
      %s338 = sphi 0, %s324
      %s342 = sphi 0, %s342
      %s344 = sphi 0, %s342
      %s345 = sphi 0, %s344
      %s359 = sphi 0, %s345
      %s363 = sphi 0, %s363
      %s365 = sphi 0, %s363
      %s366 = sphi 0, %s365
      %s380 = sphi 0, %s366
      %s384 = sphi 0, %s384
      %s386 = sphi 0, %s384
      %s387 = sphi 0, %s386
      %s401 = sphi 0, %s387
      %s405 = sphi 0, %s405
      %s407 = sphi 0, %s405
      %s408 = sphi 0, %s407
      %s422 = sphi 0, %s408
      %s428 = sphi 0, %s430
      %s431 = sphi 0, %s428
      %s432 = sphi 0, %s431
      %s448 = sphi 0, %s432
    $region4: #{tpu_custom_call.1} parent=1 // loop_header_branch
      %38 = sbr.rel (%p36) target = $region8
    $region5: #{tpu_custom_call.1} parent=1 // loop_body
      %s40 = ssub.s32 %s35, 1
      %s41 = ssub.s32 %s35, 2
      %s42 = sadd.s32 %s35, 1
      %s43 = ssub.s32 %s35, %s42
      %p44 = scmp.eq.s32.totalorder %s43, 0
      %s46 = sadd.s32 %s45, 1
      %s47 = scalar_select %p44, %s45, %s46
      %p50 = pneg %p44
      %p51 = scmp.eq.s32.totalorder %s35, 1
      %p52 = por %p50, %p51
      %p53 = scmp.ne.s32.totalorder %s45, %s48
      %p54 = scmp.eq.s32.totalorder %s35, 0
      %p55 = por %p53, %p54
      %p56 = scmp.ne.s32.totalorder %s45, %s48
      %p57 = scmp.eq.s32.totalorder %s40, 1
      %p58 = por %p56, %p57
      %p59 = scmp.ne.s32.totalorder %s48, %s49
      %p60 = scmp.eq.s32.totalorder %s40, 0
      %p61 = por %p59, %p60
      %p62 = scmp.ne.s32.totalorder %s48, %s49
      %p63 = scmp.eq.s32.totalorder %s41, 1
      %p64 = por %p62, %p63
      %p66 = scmp.ne.s32.totalorder %s49, %s65
      %p67 = scmp.eq.s32.totalorder %s41, 0
      %p68 = por %p66, %p67
      %s70 = sadd.s32 %s69, 1
      %p73 = scmp.eq.s32.totalorder %s35, 1
      %p74 = scmp.ne.s32.totalorder %s69, %s71
      %p75 = scmp.eq.s32.totalorder %s35, 0
      %p76 = por %p74, %p75
      %p77 = scmp.ne.s32.totalorder %s69, %s71
      %p78 = scmp.eq.s32.totalorder %s40, 1
      %p79 = por %p77, %p78
      %p80 = scmp.ne.s32.totalorder %s71, %s72
      %p81 = scmp.eq.s32.totalorder %s40, 0
      %p82 = por %p80, %p81
      %p83 = scmp.ne.s32.totalorder %s71, %s72
      %p84 = scmp.eq.s32.totalorder %s41, 1
      %p85 = por %p83, %p84
      %p87 = scmp.ne.s32.totalorder %s72, %s86
      %p88 = scmp.eq.s32.totalorder %s41, 0
      %p89 = por %p87, %p88
      %s91 = sadd.s32 %s90, 1
      %p94 = scmp.eq.s32.totalorder %s35, 1
      %p95 = scmp.ne.s32.totalorder %s90, %s92
      %p96 = scmp.eq.s32.totalorder %s35, 0
      %p97 = por %p95, %p96
      %p98 = scmp.ne.s32.totalorder %s90, %s92
      %p99 = scmp.eq.s32.totalorder %s40, 1
      %p100 = por %p98, %p99
      %p101 = scmp.ne.s32.totalorder %s92, %s93
      %p102 = scmp.eq.s32.totalorder %s40, 0
      %p103 = por %p101, %p102
      %p104 = scmp.ne.s32.totalorder %s92, %s93
      %p105 = scmp.eq.s32.totalorder %s41, 1
      %p106 = por %p104, %p105
      %p108 = scmp.ne.s32.totalorder %s93, %s107
      %p109 = scmp.eq.s32.totalorder %s41, 0
      %p110 = por %p108, %p109
      %s112 = sadd.s32 %s111, 1
      %p115 = scmp.eq.s32.totalorder %s35, 1
      %p116 = scmp.ne.s32.totalorder %s111, %s113
      %p117 = scmp.eq.s32.totalorder %s35, 0
      %p118 = por %p116, %p117
      %p119 = scmp.ne.s32.totalorder %s111, %s113
      %p120 = scmp.eq.s32.totalorder %s40, 1
      %p121 = por %p119, %p120
      %p122 = scmp.ne.s32.totalorder %s113, %s114
      %p123 = scmp.eq.s32.totalorder %s40, 0
      %p124 = por %p122, %p123
      %p125 = scmp.ne.s32.totalorder %s113, %s114
      %p126 = scmp.eq.s32.totalorder %s41, 1
      %p127 = por %p125, %p126
      %p129 = scmp.ne.s32.totalorder %s114, %s128
      %p130 = scmp.eq.s32.totalorder %s41, 0
      %p131 = por %p129, %p130
      %s133 = sadd.s32 %s132, 1
      %p136 = scmp.eq.s32.totalorder %s35, 1
      %p137 = scmp.ne.s32.totalorder %s132, %s134
      %p138 = scmp.eq.s32.totalorder %s35, 0
      %p139 = por %p137, %p138
      %p140 = scmp.ne.s32.totalorder %s132, %s134
      %p141 = scmp.eq.s32.totalorder %s40, 1
      %p142 = por %p140, %p141
      %p143 = scmp.ne.s32.totalorder %s134, %s135
      %p144 = scmp.eq.s32.totalorder %s40, 0
      %p145 = por %p143, %p144
      %p146 = scmp.ne.s32.totalorder %s134, %s135
      %p147 = scmp.eq.s32.totalorder %s41, 1
      %p148 = por %p146, %p147
      %p150 = scmp.ne.s32.totalorder %s135, %s149
      %p151 = scmp.eq.s32.totalorder %s41, 0
      %p152 = por %p150, %p151
      %s154 = sadd.s32 %s153, 1
      %p157 = scmp.eq.s32.totalorder %s35, 1
      %p158 = scmp.ne.s32.totalorder %s153, %s155
      %p159 = scmp.eq.s32.totalorder %s35, 0
      %p160 = por %p158, %p159
      %p161 = scmp.ne.s32.totalorder %s153, %s155
      %p162 = scmp.eq.s32.totalorder %s40, 1
      %p163 = por %p161, %p162
      %p164 = scmp.ne.s32.totalorder %s155, %s156
      %p165 = scmp.eq.s32.totalorder %s40, 0
      %p166 = por %p164, %p165
      %p167 = scmp.ne.s32.totalorder %s155, %s156
      %p168 = scmp.eq.s32.totalorder %s41, 1
      %p169 = por %p167, %p168
      %p171 = scmp.ne.s32.totalorder %s156, %s170
      %p172 = scmp.eq.s32.totalorder %s41, 0
      %p173 = por %p171, %p172
      %s175 = sadd.s32 %s174, 1
      %p178 = scmp.eq.s32.totalorder %s35, 1
      %p179 = scmp.ne.s32.totalorder %s174, %s176
      %p180 = scmp.eq.s32.totalorder %s35, 0
      %p181 = por %p179, %p180
      %p182 = scmp.ne.s32.totalorder %s174, %s176
      %p183 = scmp.eq.s32.totalorder %s40, 1
      %p184 = por %p182, %p183
      %p185 = scmp.ne.s32.totalorder %s176, %s177
      %p186 = scmp.eq.s32.totalorder %s40, 0
      %p187 = por %p185, %p186
      %p188 = scmp.ne.s32.totalorder %s176, %s177
      %p189 = scmp.eq.s32.totalorder %s41, 1
      %p190 = por %p188, %p189
      %p192 = scmp.ne.s32.totalorder %s177, %s191
      %p193 = scmp.eq.s32.totalorder %s41, 0
      %p194 = por %p192, %p193
      %s196 = sadd.s32 %s195, 1
      %p199 = scmp.eq.s32.totalorder %s35, 1
      %p200 = scmp.ne.s32.totalorder %s195, %s197
      %p201 = scmp.eq.s32.totalorder %s35, 0
      %p202 = por %p200, %p201
      %p203 = scmp.ne.s32.totalorder %s195, %s197
      %p204 = scmp.eq.s32.totalorder %s40, 1
      %p205 = por %p203, %p204
      %p206 = scmp.ne.s32.totalorder %s197, %s198
      %p207 = scmp.eq.s32.totalorder %s40, 0
      %p208 = por %p206, %p207
      %p209 = scmp.ne.s32.totalorder %s197, %s198
      %p210 = scmp.eq.s32.totalorder %s41, 1
      %p211 = por %p209, %p210
      %p213 = scmp.ne.s32.totalorder %s198, %s212
      %p214 = scmp.eq.s32.totalorder %s41, 0
      %p215 = por %p213, %p214
      %s217 = sadd.s32 %s216, 1
      %p220 = scmp.eq.s32.totalorder %s35, 1
      %p221 = scmp.ne.s32.totalorder %s216, %s218
      %p222 = scmp.eq.s32.totalorder %s35, 0
      %p223 = por %p221, %p222
      %p224 = scmp.ne.s32.totalorder %s216, %s218
      %p225 = scmp.eq.s32.totalorder %s40, 1
      %p226 = por %p224, %p225
      %p227 = scmp.ne.s32.totalorder %s218, %s219
      %p228 = scmp.eq.s32.totalorder %s40, 0
      %p229 = por %p227, %p228
      %p230 = scmp.ne.s32.totalorder %s218, %s219
      %p231 = scmp.eq.s32.totalorder %s41, 1
      %p232 = por %p230, %p231
      %p234 = scmp.ne.s32.totalorder %s219, %s233
      %p235 = scmp.eq.s32.totalorder %s41, 0
      %p236 = por %p234, %p235
      %s238 = sadd.s32 %s237, 1
      %p241 = scmp.eq.s32.totalorder %s35, 1
      %p242 = scmp.ne.s32.totalorder %s237, %s239
      %p243 = scmp.eq.s32.totalorder %s35, 0
      %p244 = por %p242, %p243
      %p245 = scmp.ne.s32.totalorder %s237, %s239
      %p246 = scmp.eq.s32.totalorder %s40, 1
      %p247 = por %p245, %p246
      %p248 = scmp.ne.s32.totalorder %s239, %s240
      %p249 = scmp.eq.s32.totalorder %s40, 0
      %p250 = por %p248, %p249
      %p251 = scmp.ne.s32.totalorder %s239, %s240
      %p252 = scmp.eq.s32.totalorder %s41, 1
      %p253 = por %p251, %p252
      %p255 = scmp.ne.s32.totalorder %s240, %s254
      %p256 = scmp.eq.s32.totalorder %s41, 0
      %p257 = por %p255, %p256
      %s259 = sadd.s32 %s258, 1
      %p262 = scmp.eq.s32.totalorder %s35, 1
      %p263 = scmp.ne.s32.totalorder %s258, %s260
      %p264 = scmp.eq.s32.totalorder %s35, 0
      %p265 = por %p263, %p264
      %p266 = scmp.ne.s32.totalorder %s258, %s260
      %p267 = scmp.eq.s32.totalorder %s40, 1
      %p268 = por %p266, %p267
      %p269 = scmp.ne.s32.totalorder %s260, %s261
      %p270 = scmp.eq.s32.totalorder %s40, 0
      %p271 = por %p269, %p270
      %p272 = scmp.ne.s32.totalorder %s260, %s261
      %p273 = scmp.eq.s32.totalorder %s41, 1
      %p274 = por %p272, %p273
      %p276 = scmp.ne.s32.totalorder %s261, %s275
      %p277 = scmp.eq.s32.totalorder %s41, 0
      %p278 = por %p276, %p277
      %s280 = sadd.s32 %s279, 1
      %p283 = scmp.eq.s32.totalorder %s35, 1
      %p284 = scmp.ne.s32.totalorder %s279, %s281
      %p285 = scmp.eq.s32.totalorder %s35, 0
      %p286 = por %p284, %p285
      %p287 = scmp.ne.s32.totalorder %s279, %s281
      %p288 = scmp.eq.s32.totalorder %s40, 1
      %p289 = por %p287, %p288
      %p290 = scmp.ne.s32.totalorder %s281, %s282
      %p291 = scmp.eq.s32.totalorder %s40, 0
      %p292 = por %p290, %p291
      %p293 = scmp.ne.s32.totalorder %s281, %s282
      %p294 = scmp.eq.s32.totalorder %s41, 1
      %p295 = por %p293, %p294
      %p297 = scmp.ne.s32.totalorder %s282, %s296
      %p298 = scmp.eq.s32.totalorder %s41, 0
      %p299 = por %p297, %p298
      %s301 = sadd.s32 %s300, 1
      %p304 = scmp.eq.s32.totalorder %s35, 1
      %p305 = scmp.ne.s32.totalorder %s300, %s302
      %p306 = scmp.eq.s32.totalorder %s35, 0
      %p307 = por %p305, %p306
      %p308 = scmp.ne.s32.totalorder %s300, %s302
      %p309 = scmp.eq.s32.totalorder %s40, 1
      %p310 = por %p308, %p309
      %p311 = scmp.ne.s32.totalorder %s302, %s303
      %p312 = scmp.eq.s32.totalorder %s40, 0
      %p313 = por %p311, %p312
      %p314 = scmp.ne.s32.totalorder %s302, %s303
      %p315 = scmp.eq.s32.totalorder %s41, 1
      %p316 = por %p314, %p315
      %p318 = scmp.ne.s32.totalorder %s303, %s317
      %p319 = scmp.eq.s32.totalorder %s41, 0
      %p320 = por %p318, %p319
      %s322 = sadd.s32 %s321, 1
      %p325 = scmp.eq.s32.totalorder %s35, 1
      %p326 = scmp.ne.s32.totalorder %s321, %s323
      %p327 = scmp.eq.s32.totalorder %s35, 0
      %p328 = por %p326, %p327
      %p329 = scmp.ne.s32.totalorder %s321, %s323
      %p330 = scmp.eq.s32.totalorder %s40, 1
      %p331 = por %p329, %p330
      %p332 = scmp.ne.s32.totalorder %s323, %s324
      %p333 = scmp.eq.s32.totalorder %s40, 0
      %p334 = por %p332, %p333
      %p335 = scmp.ne.s32.totalorder %s323, %s324
      %p336 = scmp.eq.s32.totalorder %s41, 1
      %p337 = por %p335, %p336
      %p339 = scmp.ne.s32.totalorder %s324, %s338
      %p340 = scmp.eq.s32.totalorder %s41, 0
      %p341 = por %p339, %p340
      %s343 = sadd.s32 %s342, 1
      %p346 = scmp.eq.s32.totalorder %s35, 1
      %p347 = scmp.ne.s32.totalorder %s342, %s344
      %p348 = scmp.eq.s32.totalorder %s35, 0
      %p349 = por %p347, %p348
      %p350 = scmp.ne.s32.totalorder %s342, %s344
      %p351 = scmp.eq.s32.totalorder %s40, 1
      %p352 = por %p350, %p351
      %p353 = scmp.ne.s32.totalorder %s344, %s345
      %p354 = scmp.eq.s32.totalorder %s40, 0
      %p355 = por %p353, %p354
      %p356 = scmp.ne.s32.totalorder %s344, %s345
      %p357 = scmp.eq.s32.totalorder %s41, 1
      %p358 = por %p356, %p357
      %p360 = scmp.ne.s32.totalorder %s345, %s359
      %p361 = scmp.eq.s32.totalorder %s41, 0
      %p362 = por %p360, %p361
      %s364 = sadd.s32 %s363, 1
      %p367 = scmp.eq.s32.totalorder %s35, 1
      %p368 = scmp.ne.s32.totalorder %s363, %s365
      %p369 = scmp.eq.s32.totalorder %s35, 0
      %p370 = por %p368, %p369
      %p371 = scmp.ne.s32.totalorder %s363, %s365
      %p372 = scmp.eq.s32.totalorder %s40, 1
      %p373 = por %p371, %p372
      %p374 = scmp.ne.s32.totalorder %s365, %s366
      %p375 = scmp.eq.s32.totalorder %s40, 0
      %p376 = por %p374, %p375
      %p377 = scmp.ne.s32.totalorder %s365, %s366
      %p378 = scmp.eq.s32.totalorder %s41, 1
      %p379 = por %p377, %p378
      %p381 = scmp.ne.s32.totalorder %s366, %s380
      %p382 = scmp.eq.s32.totalorder %s41, 0
      %p383 = por %p381, %p382
      %s385 = sadd.s32 %s384, 1
      %p388 = scmp.eq.s32.totalorder %s35, 1
      %p389 = scmp.ne.s32.totalorder %s384, %s386
      %p390 = scmp.eq.s32.totalorder %s35, 0
      %p391 = por %p389, %p390
      %p392 = scmp.ne.s32.totalorder %s384, %s386
      %p393 = scmp.eq.s32.totalorder %s40, 1
      %p394 = por %p392, %p393
      %p395 = scmp.ne.s32.totalorder %s386, %s387
      %p396 = scmp.eq.s32.totalorder %s40, 0
      %p397 = por %p395, %p396
      %p398 = scmp.ne.s32.totalorder %s386, %s387
      %p399 = scmp.eq.s32.totalorder %s41, 1
      %p400 = por %p398, %p399
      %p402 = scmp.ne.s32.totalorder %s387, %s401
      %p403 = scmp.eq.s32.totalorder %s41, 0
      %p404 = por %p402, %p403
      %s406 = sadd.s32 %s405, 1
      %p409 = scmp.eq.s32.totalorder %s35, 1
      %p410 = scmp.ne.s32.totalorder %s405, %s407
      %p411 = scmp.eq.s32.totalorder %s35, 0
      %p412 = por %p410, %p411
      %p413 = scmp.ne.s32.totalorder %s405, %s407
      %p414 = scmp.eq.s32.totalorder %s40, 1
      %p415 = por %p413, %p414
      %p416 = scmp.ne.s32.totalorder %s407, %s408
      %p417 = scmp.eq.s32.totalorder %s40, 0
      %p418 = por %p416, %p417
      %p419 = scmp.ne.s32.totalorder %s407, %s408
      %p420 = scmp.eq.s32.totalorder %s41, 1
      %p421 = por %p419, %p420
      %p423 = scmp.ne.s32.totalorder %s408, %s422
      %p424 = scmp.eq.s32.totalorder %s41, 0
      %p425 = por %p423, %p424
      %s426 = ssub.s32 %s35, %s42
      %p427 = scmp.eq.s32.totalorder %s426, 0
      %s429 = sadd.s32 %s428, 1
      %s430 = scalar_select %p427, %s428, %s429
      %p433 = pneg %p427
      %p434 = scmp.eq.s32.totalorder %s35, 1
      %p435 = por %p433, %p434
      %p436 = scmp.ne.s32.totalorder %s428, %s431
      %p437 = scmp.eq.s32.totalorder %s35, 0
      %p438 = por %p436, %p437
      %p439 = scmp.ne.s32.totalorder %s428, %s431
      %p440 = scmp.eq.s32.totalorder %s40, 1
      %p441 = por %p439, %p440
      %p442 = scmp.ne.s32.totalorder %s431, %s432
      %p443 = scmp.eq.s32.totalorder %s40, 0
      %p444 = por %p442, %p443
      %p445 = scmp.ne.s32.totalorder %s431, %s432
      %p446 = scmp.eq.s32.totalorder %s41, 1
      %p447 = por %p445, %p446
      %p449 = scmp.ne.s32.totalorder %s432, %s448
      %p450 = scmp.eq.s32.totalorder %s41, 0
      %p451 = por %p449, %p450
      %p452 = scmp.le.s32.totalorder 1, %s35
      %p453 = scmp.lt.s32.totalorder %s35, 3
      %p454 = pnand %p452, %p453
      %p455 = pneg %p454
      // Predicated region
      $region9: #{tpu_custom_call.1} parent=5 // pred_check
        _
      $region10: #{tpu_custom_call.1} parent=5 // pred_check_branch
        %457 = sbr.rel (%p454) target = $region12
      $region11: #{tpu_custom_call.1} parent=5 // pred_region
        %s458 = ssub.s32 %s35, 1
        // Predicated region
        $region13: #{tpu_custom_call.1} parent=11 // pred_check
          %p459 = pneg %p82
        $region14: #{tpu_custom_call.1} parent=11 // pred_check_branch
          %461 = sbr.rel (%p459) target = $region16
        $region15: #{tpu_custom_call.1} parent=11 // pred_region
          %s463 = ssub.s32 32, 32
          %464 = vsyncadd [#allocation3], %s463
          %s466 = sshll.u32 [#allocation2], 4
          %s467 = int_to_ptr.vmem [resolvable:$true] %s466
          %469 = dma.hbm_to_vmem [thread:$0]  %s1, 32, %s467, [#allocation3]
        $region16: #{tpu_custom_call.1} parent=11 // pred_fallthru
          _
        // Predicated region
        $region17: #{tpu_custom_call.1} parent=11 // pred_check
          %p470 = pneg %p103
        $region18: #{tpu_custom_call.1} parent=11 // pred_check_branch
          %472 = sbr.rel (%p470) target = $region20
        $region19: #{tpu_custom_call.1} parent=11 // pred_region
          %s474 = ssub.s32 32, 32
          %475 = vsyncadd [#allocation6], %s474
          %s477 = sshll.u32 [#allocation5], 4
          %s478 = int_to_ptr.vmem [resolvable:$true] %s477
          %480 = dma.hbm_to_vmem [thread:$0]  %s2, 32, %s478, [#allocation6]
        $region20: #{tpu_custom_call.1} parent=11 // pred_fallthru
          _
        // Predicated region
        $region21: #{tpu_custom_call.1} parent=11 // pred_check
          %p481 = pneg %p124
        $region22: #{tpu_custom_call.1} parent=11 // pred_check_branch
          %483 = sbr.rel (%p481) target = $region24
        $region23: #{tpu_custom_call.1} parent=11 // pred_region
          %s485 = ssub.s32 16, 16
          %486 = vsyncadd [#allocation6], %s485
          %s488 = sshll.u32 [#allocation7], 4
          %s489 = int_to_ptr.vmem [resolvable:$true] %s488
          %491 = dma.hbm_to_vmem [thread:$0]  %s3, 16, %s489, [#allocation6]
        $region24: #{tpu_custom_call.1} parent=11 // pred_fallthru
          _
        // Predicated region
        $region25: #{tpu_custom_call.1} parent=11 // pred_check
          %p492 = pneg %p145
        $region26: #{tpu_custom_call.1} parent=11 // pred_check_branch
          %494 = sbr.rel (%p492) target = $region28
        $region27: #{tpu_custom_call.1} parent=11 // pred_region
          %s496 = ssub.s32 256, 256
          %497 = vsyncadd [#allocation9], %s496
          %s498 = sshll.u32 [#allocation8], 4
          %s499 = int_to_ptr.vmem [resolvable:$true] %s498
          %504 = dma.hbm_to_vmem [thread:$0]  %s4, 256, %s499, [#allocation9], 64, 64, 4
        $region28: #{tpu_custom_call.1} parent=11 // pred_fallthru
          _
        // Predicated region
        $region29: #{tpu_custom_call.1} parent=11 // pred_check
          %p505 = pneg %p166
        $region30: #{tpu_custom_call.1} parent=11 // pred_check_branch
          %507 = sbr.rel (%p505) target = $region32
        $region31: #{tpu_custom_call.1} parent=11 // pred_region
          %s509 = ssub.s32 16, 16
          %510 = vsyncadd [#allocation9], %s509
          %s512 = sshll.u32 [#allocation10], 4
          %s513 = int_to_ptr.vmem [resolvable:$true] %s512
          %515 = dma.hbm_to_vmem [thread:$0]  %s5, 16, %s513, [#allocation9]
        $region32: #{tpu_custom_call.1} parent=11 // pred_fallthru
          _
        // Predicated region
        $region33: #{tpu_custom_call.1} parent=11 // pred_check
          %p516 = pneg %p187
        $region34: #{tpu_custom_call.1} parent=11 // pred_check_branch
          %518 = sbr.rel (%p516) target = $region36
        $region35: #{tpu_custom_call.1} parent=11 // pred_region
          %s520 = ssub.s32 256, 256
          %521 = vsyncadd [#allocation12], %s520
          %s522 = sshll.u32 [#allocation11], 4
          %s523 = int_to_ptr.vmem [resolvable:$true] %s522
          %528 = dma.hbm_to_vmem [thread:$0]  %s6, 256, %s523, [#allocation12], 64, 64, 4
        $region36: #{tpu_custom_call.1} parent=11 // pred_fallthru
          _
        // Predicated region
        $region37: #{tpu_custom_call.1} parent=11 // pred_check
          %p529 = pneg %p208
        $region38: #{tpu_custom_call.1} parent=11 // pred_check_branch
          %531 = sbr.rel (%p529) target = $region40
        $region39: #{tpu_custom_call.1} parent=11 // pred_region
          %s533 = ssub.s32 256, 256
          %534 = vsyncadd [#allocation12], %s533
          %s535 = sshll.u32 [#allocation13], 4
          %s536 = int_to_ptr.vmem [resolvable:$true] %s535
          %541 = dma.hbm_to_vmem [thread:$0]  %s7, 256, %s536, [#allocation12], 64, 64, 4
        $region40: #{tpu_custom_call.1} parent=11 // pred_fallthru
          _
        // Predicated region
        $region41: #{tpu_custom_call.1} parent=11 // pred_check
          %p542 = pneg %p229
        $region42: #{tpu_custom_call.1} parent=11 // pred_check_branch
          %544 = sbr.rel (%p542) target = $region44
        $region43: #{tpu_custom_call.1} parent=11 // pred_region
          %s546 = ssub.s32 16, 16
          %547 = vsyncadd [#allocation15], %s546
          %s549 = sshll.u32 [#allocation14], 4
          %s550 = int_to_ptr.vmem [resolvable:$true] %s549
          %552 = dma.hbm_to_vmem [thread:$0]  %s8, 16, %s550, [#allocation15]
        $region44: #{tpu_custom_call.1} parent=11 // pred_fallthru
          _
        // Predicated region
        $region45: #{tpu_custom_call.1} parent=11 // pred_check
          %p553 = pneg %p250
        $region46: #{tpu_custom_call.1} parent=11 // pred_check_branch
          %555 = sbr.rel (%p553) target = $region48
        $region47: #{tpu_custom_call.1} parent=11 // pred_region
          %s557 = ssub.s32 256, 256
          %558 = vsyncadd [#allocation15], %s557
          %s559 = sshll.u32 [#allocation16], 4
          %s560 = int_to_ptr.vmem [resolvable:$true] %s559
          %565 = dma.hbm_to_vmem [thread:$0]  %s9, 256, %s560, [#allocation15], 64, 64, 4
        $region48: #{tpu_custom_call.1} parent=11 // pred_fallthru
          _
        // Predicated region
        $region49: #{tpu_custom_call.1} parent=11 // pred_check
          %p566 = pneg %p271
        $region50: #{tpu_custom_call.1} parent=11 // pred_check_branch
          %568 = sbr.rel (%p566) target = $region52
        $region51: #{tpu_custom_call.1} parent=11 // pred_region
          %s570 = ssub.s32 256, 256
          %571 = vsyncadd [#allocation18], %s570
          %s572 = sshll.u32 [#allocation17], 4
          %s573 = int_to_ptr.vmem [resolvable:$true] %s572
          %578 = dma.hbm_to_vmem [thread:$0]  %s10, 256, %s573, [#allocation18], 64, 64, 4
        $region52: #{tpu_custom_call.1} parent=11 // pred_fallthru
          _
        // Predicated region
        $region53: #{tpu_custom_call.1} parent=11 // pred_check
          %p579 = pneg %p292
        $region54: #{tpu_custom_call.1} parent=11 // pred_check_branch
          %581 = sbr.rel (%p579) target = $region56
        $region55: #{tpu_custom_call.1} parent=11 // pred_region
          %s583 = ssub.s32 16, 16
          %584 = vsyncadd [#allocation18], %s583
          %s586 = sshll.u32 [#allocation19], 4
          %s587 = int_to_ptr.vmem [resolvable:$true] %s586
          %589 = dma.hbm_to_vmem [thread:$0]  %s11, 16, %s587, [#allocation18]
        $region56: #{tpu_custom_call.1} parent=11 // pred_fallthru
          _
        // Predicated region
        $region57: #{tpu_custom_call.1} parent=11 // pred_check
          %p590 = pneg %p313
        $region58: #{tpu_custom_call.1} parent=11 // pred_check_branch
          %592 = sbr.rel (%p590) target = $region60
        $region59: #{tpu_custom_call.1} parent=11 // pred_region
          %s594 = ssub.s32 32, 32
          %595 = vsyncadd [#allocation21], %s594
          %s597 = sshll.u32 [#allocation20], 4
          %s598 = int_to_ptr.vmem [resolvable:$true] %s597
          %600 = dma.hbm_to_vmem [thread:$0]  %s12, 32, %s598, [#allocation21]
        $region60: #{tpu_custom_call.1} parent=11 // pred_fallthru
          _
        // Predicated region
        $region61: #{tpu_custom_call.1} parent=11 // pred_check
          %p601 = pneg %p334
        $region62: #{tpu_custom_call.1} parent=11 // pred_check_branch
          %603 = sbr.rel (%p601) target = $region64
        $region63: #{tpu_custom_call.1} parent=11 // pred_region
          %s605 = ssub.s32 32, 32
          %606 = vsyncadd [#allocation21], %s605
          %s608 = sshll.u32 [#allocation22], 4
          %s609 = int_to_ptr.vmem [resolvable:$true] %s608
          %611 = dma.hbm_to_vmem [thread:$0]  %s13, 32, %s609, [#allocation21]
        $region64: #{tpu_custom_call.1} parent=11 // pred_fallthru
          _
        // Predicated region
        $region65: #{tpu_custom_call.1} parent=11 // pred_check
          %p612 = pneg %p355
        $region66: #{tpu_custom_call.1} parent=11 // pred_check_branch
          %614 = sbr.rel (%p612) target = $region68
        $region67: #{tpu_custom_call.1} parent=11 // pred_region
          %s616 = ssub.s32 15360, 15360
          %617 = vsyncadd [#allocation24], %s616
          %s618 = sshll.u32 [#allocation23], 4
          %s619 = int_to_ptr.vmem [resolvable:$true] %s618
          %624 = dma.hbm_to_vmem [thread:$0]  %s14, 15360, %s619, [#allocation24], 128, 128, 8
        $region68: #{tpu_custom_call.1} parent=11 // pred_fallthru
          _
        // Predicated region
        $region69: #{tpu_custom_call.1} parent=11 // pred_check
          %p625 = pneg %p376
        $region70: #{tpu_custom_call.1} parent=11 // pred_check_branch
          %627 = sbr.rel (%p625) target = $region72
        $region71: #{tpu_custom_call.1} parent=11 // pred_region
          %s629 = ssub.s32 160, 160
          %630 = vsyncadd [#allocation24], %s629
          %s631 = sshll.u32 [#allocation25], 4
          %s632 = int_to_ptr.vmem [resolvable:$true] %s631
          %637 = dma.hbm_to_vmem [thread:$0]  %s15, 160, %s632, [#allocation24], 32, 32, 2
        $region72: #{tpu_custom_call.1} parent=11 // pred_fallthru
          _
        // Predicated region
        $region73: #{tpu_custom_call.1} parent=11 // pred_check
          %p638 = pneg %p397
        $region74: #{tpu_custom_call.1} parent=11 // pred_check_branch
          %640 = sbr.rel (%p638) target = $region76
        $region75: #{tpu_custom_call.1} parent=11 // pred_region
          _
        $region76: #{tpu_custom_call.1} parent=11 // pred_fallthru
          _
        // Predicated region
        $region77: #{tpu_custom_call.1} parent=11 // pred_check
          %p641 = pneg %p418
        $region78: #{tpu_custom_call.1} parent=11 // pred_check_branch
          %643 = sbr.rel (%p641) target = $region80
        $region79: #{tpu_custom_call.1} parent=11 // pred_region
          _
        $region80: #{tpu_custom_call.1} parent=11 // pred_fallthru
          _
      $region12: #{tpu_custom_call.1} parent=5 // pred_fallthru
        _
      %p644 = scmp.lt.s32.totalorder %s35, 2
      // Predicated region
      $region81: #{tpu_custom_call.1} parent=5 // pred_check
        %p645 = pneg %p644
      $region82: #{tpu_custom_call.1} parent=5 // pred_check_branch
        %647 = sbr.rel (%p645) target = $region84
      $region83: #{tpu_custom_call.1} parent=5 // pred_region
        // Predicated region
        $region85: #{tpu_custom_call.1} parent=83 // pred_check
          %p648 = pneg %p55
        $region86: #{tpu_custom_call.1} parent=83 // pred_check_branch
          %650 = sbr.rel (%p648) target = $region88
        $region87: #{tpu_custom_call.1} parent=83 // pred_region
          %s651 = smul.u32 2, %s35
          %p652 = scmp.lt.s32.totalorder %s651, 3
          %s653 = scalar_select %p652, %s651, 3
          %s654 = smul.addr %s653, 8
          %s655 = scalar_lea.vmem %s0, %s654
          %s656 = smul.u32 2, %s35
        $region88: #{tpu_custom_call.1} parent=83 // pred_fallthru
          _
      $region84: #{tpu_custom_call.1} parent=5 // pred_fallthru
        _
      %p657 = scmp.le.s32.totalorder 1, %s35
      %p658 = scmp.lt.s32.totalorder %s35, 3
      %p659 = pnand %p657, %p658
      %p660 = pneg %p659
      // Predicated region
      $region89: #{tpu_custom_call.1} parent=5 // pred_check
        _
      $region90: #{tpu_custom_call.1} parent=5 // pred_check_branch
        %662 = sbr.rel (%p659) target = $region92
      $region91: #{tpu_custom_call.1} parent=5 // pred_region
        %s663 = ssub.s32 %s35, 1
        // Predicated region
        $region93: #{tpu_custom_call.1} parent=91 // pred_check
          %p664 = pneg %p82
        $region94: #{tpu_custom_call.1} parent=91 // pred_check_branch
          %666 = sbr.rel (%p664) target = $region96
        $region95: #{tpu_custom_call.1} parent=91 // pred_region
          %667 = dma.done [#allocation3], 32
        $region96: #{tpu_custom_call.1} parent=91 // pred_fallthru
          _
        // Predicated region
        $region97: #{tpu_custom_call.1} parent=91 // pred_check
          %p668 = pneg %p103
        $region98: #{tpu_custom_call.1} parent=91 // pred_check_branch
          %670 = sbr.rel (%p668) target = $region100
        $region99: #{tpu_custom_call.1} parent=91 // pred_region
          %671 = dma.done [#allocation6], 32
        $region100: #{tpu_custom_call.1} parent=91 // pred_fallthru
          _
        // Predicated region
        $region101: #{tpu_custom_call.1} parent=91 // pred_check
          %p672 = pneg %p124
        $region102: #{tpu_custom_call.1} parent=91 // pred_check_branch
          %674 = sbr.rel (%p672) target = $region104
        $region103: #{tpu_custom_call.1} parent=91 // pred_region
          %675 = dma.done [#allocation6], 16
        $region104: #{tpu_custom_call.1} parent=91 // pred_fallthru
          _
        // Predicated region
        $region105: #{tpu_custom_call.1} parent=91 // pred_check
          %p676 = pneg %p145
        $region106: #{tpu_custom_call.1} parent=91 // pred_check_branch
          %678 = sbr.rel (%p676) target = $region108
        $region107: #{tpu_custom_call.1} parent=91 // pred_region
          %679 = dma.done [#allocation9], 256
        $region108: #{tpu_custom_call.1} parent=91 // pred_fallthru
          _
        // Predicated region
        $region109: #{tpu_custom_call.1} parent=91 // pred_check
          %p680 = pneg %p166
        $region110: #{tpu_custom_call.1} parent=91 // pred_check_branch
          %682 = sbr.rel (%p680) target = $region112
        $region111: #{tpu_custom_call.1} parent=91 // pred_region
          %683 = dma.done [#allocation9], 16
        $region112: #{tpu_custom_call.1} parent=91 // pred_fallthru
          _
        // Predicated region
        $region113: #{tpu_custom_call.1} parent=91 // pred_check
          %p684 = pneg %p187
        $region114: #{tpu_custom_call.1} parent=91 // pred_check_branch
          %686 = sbr.rel (%p684) target = $region116
        $region115: #{tpu_custom_call.1} parent=91 // pred_region
          %687 = dma.done [#allocation12], 256
        $region116: #{tpu_custom_call.1} parent=91 // pred_fallthru
          _
        // Predicated region
        $region117: #{tpu_custom_call.1} parent=91 // pred_check
          %p688 = pneg %p208
        $region118: #{tpu_custom_call.1} parent=91 // pred_check_branch
          %690 = sbr.rel (%p688) target = $region120
        $region119: #{tpu_custom_call.1} parent=91 // pred_region
          %691 = dma.done [#allocation12], 256
        $region120: #{tpu_custom_call.1} parent=91 // pred_fallthru
          _
        // Predicated region
        $region121: #{tpu_custom_call.1} parent=91 // pred_check
          %p692 = pneg %p229
        $region122: #{tpu_custom_call.1} parent=91 // pred_check_branch
          %694 = sbr.rel (%p692) target = $region124
        $region123: #{tpu_custom_call.1} parent=91 // pred_region
          %695 = dma.done [#allocation15], 16
        $region124: #{tpu_custom_call.1} parent=91 // pred_fallthru
          _
        // Predicated region
        $region125: #{tpu_custom_call.1} parent=91 // pred_check
          %p696 = pneg %p250
        $region126: #{tpu_custom_call.1} parent=91 // pred_check_branch
          %698 = sbr.rel (%p696) target = $region128
        $region127: #{tpu_custom_call.1} parent=91 // pred_region
          %699 = dma.done [#allocation15], 256
        $region128: #{tpu_custom_call.1} parent=91 // pred_fallthru
          _
        // Predicated region
        $region129: #{tpu_custom_call.1} parent=91 // pred_check
          %p700 = pneg %p271
        $region130: #{tpu_custom_call.1} parent=91 // pred_check_branch
          %702 = sbr.rel (%p700) target = $region132
        $region131: #{tpu_custom_call.1} parent=91 // pred_region
          %703 = dma.done [#allocation18], 256
        $region132: #{tpu_custom_call.1} parent=91 // pred_fallthru
          _
        // Predicated region
        $region133: #{tpu_custom_call.1} parent=91 // pred_check
          %p704 = pneg %p292
        $region134: #{tpu_custom_call.1} parent=91 // pred_check_branch
          %706 = sbr.rel (%p704) target = $region136
        $region135: #{tpu_custom_call.1} parent=91 // pred_region
          %707 = dma.done [#allocation18], 16
        $region136: #{tpu_custom_call.1} parent=91 // pred_fallthru
          _
        // Predicated region
        $region137: #{tpu_custom_call.1} parent=91 // pred_check
          %p708 = pneg %p313
        $region138: #{tpu_custom_call.1} parent=91 // pred_check_branch
          %710 = sbr.rel (%p708) target = $region140
        $region139: #{tpu_custom_call.1} parent=91 // pred_region
          %711 = dma.done [#allocation21], 32
        $region140: #{tpu_custom_call.1} parent=91 // pred_fallthru
          _
        // Predicated region
        $region141: #{tpu_custom_call.1} parent=91 // pred_check
          %p712 = pneg %p334
        $region142: #{tpu_custom_call.1} parent=91 // pred_check_branch
          %714 = sbr.rel (%p712) target = $region144
        $region143: #{tpu_custom_call.1} parent=91 // pred_region
          %715 = dma.done [#allocation21], 32
        $region144: #{tpu_custom_call.1} parent=91 // pred_fallthru
          _
        // Predicated region
        $region145: #{tpu_custom_call.1} parent=91 // pred_check
          %p716 = pneg %p355
        $region146: #{tpu_custom_call.1} parent=91 // pred_check_branch
          %718 = sbr.rel (%p716) target = $region148
        $region147: #{tpu_custom_call.1} parent=91 // pred_region
          %719 = dma.done [#allocation24], 15360
        $region148: #{tpu_custom_call.1} parent=91 // pred_fallthru
          _
        // Predicated region
        $region149: #{tpu_custom_call.1} parent=91 // pred_check
          %p720 = pneg %p376
        $region150: #{tpu_custom_call.1} parent=91 // pred_check_branch
          %722 = sbr.rel (%p720) target = $region152
        $region151: #{tpu_custom_call.1} parent=91 // pred_region
          %723 = dma.done [#allocation24], 160
        $region152: #{tpu_custom_call.1} parent=91 // pred_fallthru
          _
        %s724 = smul.u32 2, %s40
        %p725 = scmp.lt.s32.totalorder %s724, 3
        %s726 = scalar_select %p725, %s724, 3
        %s727 = smul.addr %s726, 8
        %s728 = scalar_lea.vmem %s0, %s727
        %p729 = pneg %p61
        %p730 = pneg %p58
        %p731 = pneg %p82
        %p732 = pneg %p79
        %p733 = pneg %p103
        %p734 = pneg %p100
        %p735 = pneg %p124
        %p736 = pneg %p121
        %p737 = pneg %p145
        %p738 = pneg %p142
        %p739 = pneg %p166
        %p740 = pneg %p163
        %p741 = pneg %p187
        %p742 = pneg %p184
        %p743 = pneg %p208
        %p744 = pneg %p205
        %p745 = pneg %p229
        %p746 = pneg %p226
        %p747 = pneg %p250
        %p748 = pneg %p247
        %p749 = pneg %p271
        %p750 = pneg %p268
        %p751 = pneg %p292
        %p752 = pneg %p289
        %p753 = pneg %p313
        %p754 = pneg %p310
        %p755 = pneg %p334
        %p756 = pneg %p331
        %p757 = pneg %p355
        %p758 = pneg %p352
        %p759 = pneg %p376
        %p760 = pneg %p373
        %p761 = pneg %p397
        %p762 = pneg %p394
        %p763 = pneg %p418
        %p764 = pneg %p415
        %p765 = pneg %p444
        %p766 = pneg %p441
        %s767 = sand.u32 %s431, 1
        %s768 = scalar_lea.sflag [#allocation4], %s767
        %s769 = sand.u32 %s431, 1
        %s770 = smul.addr %s769, 8
        %s771 = scalar_lea.vmem [#allocation26], %s770
        %s772 = smul.u32 2, %s40
        %p773 = scmp.lt.s32.totalorder %s772, 3
        %s774 = scalar_select %p773, %s772, 3
        %s775 = smul.addr %s774, 8
        %s776 = scalar_lea.vmem %s0, %s775
        %s777 = smul.u32 2, %s40
        %v779 = vld [vmem:[%s776] sm:$0xff]
        %v780 = vld [vmem:[%s776 + $0x8] sm:$0xff]
        %v781 = vlaneseq
        %v782 = vand.u32 %v781, 127
        %v783 = vld [vmem:[#allocation2] sm:$0x3]
        %v784 = vld [vmem:[#allocation5] sm:$0x3]
        %v785 = vld [vmem:[#allocation7] sm:$0x1]
        %v786 = vld [vmem:[#allocation8] sm:$0xf]
        %v787 = vld [vmem:[#allocation8 + $0x4] sm:$0xf]
        %v788 = vld [vmem:[#allocation8 + $0x8] sm:$0xf]
        %v789 = vld [vmem:[#allocation8 + $0xc] sm:$0xf]
        %v790 = vld [vmem:[#allocation10] sm:$0x1]
        %vm791 = vcmask 31744
        %v793 = vsel %vm791, %v779, 0
        %v796 = vsel %vm791, %v780, 0
        %798 = vmatprep.subr.mxu0 0.0
        %799 = vmatpush1.xpose.msra.mxu0 %v793
        %800 = vmatprep.subr.mxu0 0.0
        %801 = vmatpush1.xpose.msra.mxu0 %v796
        %802 = vmatprep.subr.mxu0 0.0
        %803 = vmatpush1.xpose.msra.mxu0 0.0
        %804 = vmatprep.subr.mxu0 0.0
        %805 = vmatpush1.xpose.msra.mxu0 0.0
        %806 = vmatprep.subr.mxu0 0.0
        %807 = vmatpush1.xpose.msra.mxu0 0.0
        %808 = vmatprep.subr.mxu0 0.0
        %809 = vmatpush1.xpose.msra.mxu0 0.0
        %810 = vmatprep.subr.mxu0 0.0
        %811 = vmatpush1.xpose.msra.mxu0 0.0
        %812 = vmatprep.subr.mxu0 0.0
        %813 = vmatpush1.xpose.msra.mxu0 0.0
        %814 = vmatprep.subr.mxu0 0.0
        %815 = vmatpush1.xpose.msra.mxu0 0.0
        %816 = vmatprep.subr.mxu0 0.0
        %817 = vmatpush1.xpose.msra.mxu0 0.0
        %818 = vmatprep.subr.mxu0 0.0
        %819 = vmatpush1.xpose.msra.mxu0 0.0
        %820 = vmatprep.subr.mxu0 0.0
        %821 = vmatpush1.xpose.msra.mxu0 0.0
        %822 = vmatprep.subr.mxu0 0.0
        %823 = vmatpush1.xpose.msra.mxu0 0.0
        %824 = vmatprep.subr.mxu0 0.0
        %825 = vmatpush1.xpose.msra.mxu0 0.0
        %826 = vmatprep.subr.mxu0 0.0
        %827 = vmatpush1.xpose.msra.mxu0 0.0
        %828 = vmatprep.subr.mxu0 0.0
        %829 = vmatpush1.xpose.msra.mxu0 0.0
        %830 = vmatprep.subr.mxu0 0.0
        %831 = vmatpush1.xpose.msra.mxu0 0.0
        %832 = vmatprep.subr.mxu0 0.0
        %833 = vmatpush1.xpose.msra.mxu0 0.0
        %834 = vmatprep.subr.mxu0 0.0
        %835 = vmatpush1.xpose.msra.mxu0 0.0
        %836 = vmatprep.subr.mxu0 0.0
        %837 = vmatpush1.xpose.msra.mxu0 0.0
        %838 = vmatprep.subr.mxu0 0.0
        %839 = vmatpush1.xpose.msra.mxu0 0.0
        %840 = vmatprep.subr.mxu0 0.0
        %841 = vmatpush1.xpose.msra.mxu0 0.0
        %842 = vmatprep.subr.mxu0 0.0
        %843 = vmatpush1.xpose.msra.mxu0 0.0
        %844 = vmatprep.subr.mxu0 0.0
        %845 = vmatpush1.xpose.msra.mxu0 0.0
        %846 = vmatprep.subr.mxu0 0.0
        %847 = vmatpush1.xpose.msra.mxu0 0.0
        %848 = vmatprep.subr.mxu0 0.0
        %849 = vmatpush1.xpose.msra.mxu0 0.0
        %850 = vmatprep.subr.mxu0 0.0
        %851 = vmatpush1.xpose.msra.mxu0 0.0
        %852 = vmatprep.subr.mxu0 0.0
        %853 = vmatpush1.xpose.msra.mxu0 0.0
        %854 = vmatprep.subr.mxu0 0.0
        %855 = vmatpush1.xpose.msra.mxu0 0.0
        %856 = vmatprep.subr.mxu0 0.0
        %857 = vmatpush1.xpose.msra.mxu0 0.0
        %858 = vmatprep.subr.mxu0 0.0
        %859 = vmatpush1.xpose.msra.mxu0 0.0
        %860 = vmatprep.subr.mxu0 0.0
        %861 = vmatpush1.xpose.msra.mxu0 0.0
        %862 = vmatprep.mubr.f32.mxu0 0.0
        %863 = vmatmul.mubr.f32.gmra.mrb[0].mxu0 %v793
        %v864 = vpop.f32.mrb[0].mxu0
        %v865 = vadd.f32 0.0, %v864
        %v866 = vpop.f32.mrb[0].mxu0
        %867 = vmatprep.mubr.f32.mxu0 0.0
        %868 = vmatmul.mubr.f32.gmra.mrb[0].mxu0 %v796
        %v869 = vpop.f32.mrb[0].mxu0
        %v870 = vadd.f32 0.0, %v869
        %v871 = vpop.f32.mrb[0].mxu0
        %872 = vdwg.mxu0
        %v873 = vmul.f32 %v779, %v779
        %v874 = vmul.f32 %v780, %v780
        %v875 = vsel %vm791, %v873, 0.0
        %876 = vadd.xlane.f32.xlu0 %v875
        %v877 = vpop.xlane.xlu0 %876
        %v878 = vsel %vm791, %v874, 0.0
        %879 = vadd.xlane.f32.xlu0 %v878
        %v880 = vpop.xlane.xlu0 %879
        %881 = vxpose.xlu0.b32.start [1/16] %v877, 128
        %882 = vxpose.xlu0.b32.cont [2/16] %v880, 128
        %883 = vxpose.xlu0.b32.cont [3/16] 0.0, 128
        %884 = vxpose.xlu0.b32.cont [4/16] 0.0, 128
        %885 = vxpose.xlu0.b32.cont [5/16] 0.0, 128
        %886 = vxpose.xlu0.b32.cont [6/16] 0.0, 128
        %887 = vxpose.xlu0.b32.cont [7/16] 0.0, 128
        %888 = vxpose.xlu0.b32.cont [8/16] 0.0, 128
        %889 = vxpose.xlu0.b32.cont [9/16] 0.0, 128
        %890 = vxpose.xlu0.b32.cont [10/16] 0.0, 128
        %891 = vxpose.xlu0.b32.cont [11/16] 0.0, 128
        %892 = vxpose.xlu0.b32.cont [12/16] 0.0, 128
        %893 = vxpose.xlu0.b32.cont [13/16] 0.0, 128
        %894 = vxpose.xlu0.b32.cont [14/16] 0.0, 128
        %895 = vxpose.xlu0.b32.cont [15/16] 0.0, 128
        %896 = vxpose.xlu0.b32.end [16/16] 0.0, 128
        %v897 = vpop.trf.xlu0
        %v898 = vpop.trf.xlu0
        %v899 = vpop.trf.xlu0
        %v900 = vpop.trf.xlu0
        %v901 = vpop.trf.xlu0
        %v902 = vpop.trf.xlu0
        %v903 = vpop.trf.xlu0
        %v904 = vpop.trf.xlu0
        %v905 = vpop.trf.xlu0
        %v906 = vpop.trf.xlu0
        %v907 = vpop.trf.xlu0
        %v908 = vpop.trf.xlu0
        %v909 = vpop.trf.xlu0
        %v910 = vpop.trf.xlu0
        %v911 = vpop.trf.xlu0
        %v912 = vpop.trf.xlu0
        %v913 = vmul.f32 %v865, 2.0
        %v914 = vmul.f32 %v870, 2.0
        %v915 = vlaneseq
        %v916 = vshrl.u32 %v915, 7
        %v917 = vsub.s32 0, %v916
        %v918 = vrot.slane %v897, %v917
        %v919 = vsub.f32 %v918, %v913
        %v920 = vsub.f32 %v918, %v914
        %vm921 = vcmask 130048
        %v922 = vsel %vm921, %v919, inf
        %923 = vmin.xlane.f32.xlu0 %v922
        %v924 = vpop.xlane.xlu0 %923
        %v925 = vsel %vm921, %v920, inf
        %926 = vmin.xlane.f32.xlu0 %v925
        %v927 = vpop.xlane.xlu0 %926
        %vm928 = vcmp.le.f32.partialorder %v919, %v924
        %vm929 = vcmp.le.f32.partialorder %v920, %v927
        %v930 = vsel %vm928, %v782, 16
        %v931 = vsel %vm929, %v782, 16
        %v932 = vsel %vm921, %v930, 2147483647
        %v933 = vand.u32 %v932, 65535
        %v934 = vshra.s32 %v932, 16
        %v935 = vcvt.s32.f32 %v933
        %v936 = vcvt.s32.f32 %v934
        %937 = vmin.xlane.f32.xlu0 %v936
        %v938 = vpop.xlane.xlu0 %937
        %vm939 = vcmp.eq.f32.partialorder %v936, %v938
        %v940 = vsel %vm939, %v935, inf
        %941 = vmin.xlane.f32.xlu0 %v940
        %v942 = vpop.xlane.xlu0 %941
        %v943 = vcvt.f32.s32 %v942
        %v944 = vcvt.f32.s32 %v938
        %v945 = vshll.u32 %v944, 16
        %v946 = vadd.s32 %v945, %v943
        %v947 = vsel %vm921, %v931, 2147483647
        %v948 = vand.u32 %v947, 65535
        %v949 = vshra.s32 %v947, 16
        %v950 = vcvt.s32.f32 %v948
        %v951 = vcvt.s32.f32 %v949
        %952 = vmin.xlane.f32.xlu0 %v951
        %v953 = vpop.xlane.xlu0 %952
        %vm954 = vcmp.eq.f32.partialorder %v951, %v953
        %v955 = vsel %vm954, %v950, inf
        %956 = vmin.xlane.f32.xlu0 %v955
        %v957 = vpop.xlane.xlu0 %956
        %v958 = vcvt.f32.s32 %v957
        %v959 = vcvt.f32.s32 %v953
        %v960 = vshll.u32 %v959, 16
        %v961 = vadd.s32 %v960, %v958
        %vm962 = vcmp.eq.s32.totalorder %v782, %v946
        %vm963 = vcmp.eq.s32.totalorder %v782, %v961
        %v964 = vsel %vm962, 1, 0
        %v965 = vsel %vm963, 1, 0
        %v966 = vcvt.s32.f32 %v964
        %v967 = vcvt.s32.f32 %v965
        %v968 = vsel %vm962, 1e+30, %v919
        %v969 = vsel %vm963, 1e+30, %v920
        %v970 = vsel %vm921, %v968, inf
        %971 = vmin.xlane.f32.xlu0 %v970
        %v972 = vpop.xlane.xlu0 %971
        %v973 = vsel %vm921, %v969, inf
        %974 = vmin.xlane.f32.xlu0 %v973
        %v975 = vpop.xlane.xlu0 %974
        %vm976 = vcmp.le.f32.partialorder %v968, %v972
        %vm977 = vcmp.le.f32.partialorder %v969, %v975
        %v978 = vsel %vm976, %v782, 16
        %v979 = vsel %vm977, %v782, 16
        %v980 = vsel %vm921, %v978, 2147483647
        %v981 = vand.u32 %v980, 65535
        %v982 = vshra.s32 %v980, 16
        %v983 = vcvt.s32.f32 %v981
        %v984 = vcvt.s32.f32 %v982
        %985 = vmin.xlane.f32.xlu0 %v984
        %v986 = vpop.xlane.xlu0 %985
        %vm987 = vcmp.eq.f32.partialorder %v984, %v986
        %v988 = vsel %vm987, %v983, inf
        %989 = vmin.xlane.f32.xlu0 %v988
        %v990 = vpop.xlane.xlu0 %989
        %v991 = vcvt.f32.s32 %v990
        %v992 = vcvt.f32.s32 %v986
        %v993 = vshll.u32 %v992, 16
        %v994 = vadd.s32 %v993, %v991
        %v995 = vsel %vm921, %v979, 2147483647
        %v996 = vand.u32 %v995, 65535
        %v997 = vshra.s32 %v995, 16
        %v998 = vcvt.s32.f32 %v996
        %v999 = vcvt.s32.f32 %v997
        %1000 = vmin.xlane.f32.xlu0 %v999
        %v1001 = vpop.xlane.xlu0 %1000
        %vm1002 = vcmp.eq.f32.partialorder %v999, %v1001
        %v1003 = vsel %vm1002, %v998, inf
        %1004 = vmin.xlane.f32.xlu0 %v1003
        %v1005 = vpop.xlane.xlu0 %1004
        %v1006 = vcvt.f32.s32 %v1005
        %v1007 = vcvt.f32.s32 %v1001
        %v1008 = vshll.u32 %v1007, 16
        %v1009 = vadd.s32 %v1008, %v1006
        %vm1010 = vcmp.eq.s32.totalorder %v782, %v994
        %vm1011 = vcmp.eq.s32.totalorder %v782, %v1009
        %v1012 = vsel %vm1010, 1, 0
        %v1013 = vsel %vm1011, 1, 0
        %v1014 = vcvt.s32.f32 %v1012
        %v1015 = vcvt.s32.f32 %v1013
        %v1017 = vsel %vm921, %v966, 0
        %v1020 = vsel %vm921, %v967, 0
        %1022 = vmatprep.subr.mxu0 0.0
        %1023 = vmatpush1.msra.mxu0 %v779
        %1024 = vmatprep.subr.mxu0 0.0
        %1025 = vmatpush1.msra.mxu0 %v780
        %1026 = vmatprep.subr.mxu0 0.0
        %1027 = vmatpush1.msra.mxu0 0.0
        %1028 = vmatprep.subr.mxu0 0.0
        %1029 = vmatpush1.msra.mxu0 0.0
        %1030 = vmatprep.subr.mxu0 0.0
        %1031 = vmatpush1.msra.mxu0 0.0
        %1032 = vmatprep.subr.mxu0 0.0
        %1033 = vmatpush1.msra.mxu0 0.0
        %1034 = vmatprep.subr.mxu0 0.0
        %1035 = vmatpush1.msra.mxu0 0.0
        %1036 = vmatprep.subr.mxu0 0.0
        %1037 = vmatpush1.msra.mxu0 0.0
        %1038 = vmatprep.subr.mxu0 0.0
        %1039 = vmatpush1.msra.mxu0 0.0
        %1040 = vmatprep.subr.mxu0 0.0
        %1041 = vmatpush1.msra.mxu0 0.0
        %1042 = vmatprep.subr.mxu0 0.0
        %1043 = vmatpush1.msra.mxu0 0.0
        %1044 = vmatprep.subr.mxu0 0.0
        %1045 = vmatpush1.msra.mxu0 0.0
        %1046 = vmatprep.subr.mxu0 0.0
        %1047 = vmatpush1.msra.mxu0 0.0
        %1048 = vmatprep.subr.mxu0 0.0
        %1049 = vmatpush1.msra.mxu0 0.0
        %1050 = vmatprep.subr.mxu0 0.0
        %1051 = vmatpush1.msra.mxu0 0.0
        %1052 = vmatprep.subr.mxu0 0.0
        %1053 = vmatpush1.msra.mxu0 0.0
        %1054 = vmatprep.subr.mxu0 0.0
        %1055 = vmatpush1.msra.mxu0 0.0
        %1056 = vmatprep.subr.mxu0 0.0
        %1057 = vmatpush1.msra.mxu0 0.0
        %1058 = vmatprep.subr.mxu0 0.0
        %1059 = vmatpush1.msra.mxu0 0.0
        %1060 = vmatprep.subr.mxu0 0.0
        %1061 = vmatpush1.msra.mxu0 0.0
        %1062 = vmatprep.subr.mxu0 0.0
        %1063 = vmatpush1.msra.mxu0 0.0
        %1064 = vmatprep.subr.mxu0 0.0
        %1065 = vmatpush1.msra.mxu0 0.0
        %1066 = vmatprep.subr.mxu0 0.0
        %1067 = vmatpush1.msra.mxu0 0.0
        %1068 = vmatprep.subr.mxu0 0.0
        %1069 = vmatpush1.msra.mxu0 0.0
        %1070 = vmatprep.subr.mxu0 0.0
        %1071 = vmatpush1.msra.mxu0 0.0
        %1072 = vmatprep.subr.mxu0 0.0
        %1073 = vmatpush1.msra.mxu0 0.0
        %1074 = vmatprep.subr.mxu0 0.0
        %1075 = vmatpush1.msra.mxu0 0.0
        %1076 = vmatprep.subr.mxu0 0.0
        %1077 = vmatpush1.msra.mxu0 0.0
        %1078 = vmatprep.subr.mxu0 0.0
        %1079 = vmatpush1.msra.mxu0 0.0
        %1080 = vmatprep.subr.mxu0 0.0
        %1081 = vmatpush1.msra.mxu0 0.0
        %1082 = vmatprep.subr.mxu0 0.0
        %1083 = vmatpush1.msra.mxu0 0.0
        %1084 = vmatprep.subr.mxu0 0.0
        %1085 = vmatpush1.msra.mxu0 0.0
        %1086 = vmatprep.mubr.f32.mxu0 0.0
        %1087 = vmatmul.mubr.f32.gmra.mrb[0].mxu0 %v1017
        %v1088 = vpop.f32.mrb[0].mxu0
        %v1089 = vadd.f32 0.0, %v1088
        %v1090 = vpop.f32.mrb[0].mxu0
        %1091 = vmatprep.mubr.f32.mxu0 0.0
        %1092 = vmatmul.mubr.f32.gmra.mrb[0].mxu0 %v1020
        %v1093 = vpop.f32.mrb[0].mxu0
        %v1094 = vadd.f32 0.0, %v1093
        %v1095 = vpop.f32.mrb[0].mxu0
        %1096 = vdwg.mxu0
        %v1098 = vsel %vm921, %v1014, 0
        %v1101 = vsel %vm921, %v1015, 0
        %1103 = vmatprep.subr.mxu0 0.0
        %1104 = vmatpush1.msra.mxu0 %v779
        %1105 = vmatprep.subr.mxu0 0.0
        %1106 = vmatpush1.msra.mxu0 %v780
        %1107 = vmatprep.subr.mxu0 0.0
        %1108 = vmatpush1.msra.mxu0 0.0
        %1109 = vmatprep.subr.mxu0 0.0
        %1110 = vmatpush1.msra.mxu0 0.0
        %1111 = vmatprep.subr.mxu0 0.0
        %1112 = vmatpush1.msra.mxu0 0.0
        %1113 = vmatprep.subr.mxu0 0.0
        %1114 = vmatpush1.msra.mxu0 0.0
        %1115 = vmatprep.subr.mxu0 0.0
        %1116 = vmatpush1.msra.mxu0 0.0
        %1117 = vmatprep.subr.mxu0 0.0
        %1118 = vmatpush1.msra.mxu0 0.0
        %1119 = vmatprep.subr.mxu0 0.0
        %1120 = vmatpush1.msra.mxu0 0.0
        %1121 = vmatprep.subr.mxu0 0.0
        %1122 = vmatpush1.msra.mxu0 0.0
        %1123 = vmatprep.subr.mxu0 0.0
        %1124 = vmatpush1.msra.mxu0 0.0
        %1125 = vmatprep.subr.mxu0 0.0
        %1126 = vmatpush1.msra.mxu0 0.0
        %1127 = vmatprep.subr.mxu0 0.0
        %1128 = vmatpush1.msra.mxu0 0.0
        %1129 = vmatprep.subr.mxu0 0.0
        %1130 = vmatpush1.msra.mxu0 0.0
        %1131 = vmatprep.subr.mxu0 0.0
        %1132 = vmatpush1.msra.mxu0 0.0
        %1133 = vmatprep.subr.mxu0 0.0
        %1134 = vmatpush1.msra.mxu0 0.0
        %1135 = vmatprep.subr.mxu0 0.0
        %1136 = vmatpush1.msra.mxu0 0.0
        %1137 = vmatprep.subr.mxu0 0.0
        %1138 = vmatpush1.msra.mxu0 0.0
        %1139 = vmatprep.subr.mxu0 0.0
        %1140 = vmatpush1.msra.mxu0 0.0
        %1141 = vmatprep.subr.mxu0 0.0
        %1142 = vmatpush1.msra.mxu0 0.0
        %1143 = vmatprep.subr.mxu0 0.0
        %1144 = vmatpush1.msra.mxu0 0.0
        %1145 = vmatprep.subr.mxu0 0.0
        %1146 = vmatpush1.msra.mxu0 0.0
        %1147 = vmatprep.subr.mxu0 0.0
        %1148 = vmatpush1.msra.mxu0 0.0
        %1149 = vmatprep.subr.mxu0 0.0
        %1150 = vmatpush1.msra.mxu0 0.0
        %1151 = vmatprep.subr.mxu0 0.0
        %1152 = vmatpush1.msra.mxu0 0.0
        %1153 = vmatprep.subr.mxu0 0.0
        %1154 = vmatpush1.msra.mxu0 0.0
        %1155 = vmatprep.subr.mxu0 0.0
        %1156 = vmatpush1.msra.mxu0 0.0
        %1157 = vmatprep.subr.mxu0 0.0
        %1158 = vmatpush1.msra.mxu0 0.0
        %1159 = vmatprep.subr.mxu0 0.0
        %1160 = vmatpush1.msra.mxu0 0.0
        %1161 = vmatprep.subr.mxu0 0.0
        %1162 = vmatpush1.msra.mxu0 0.0
        %1163 = vmatprep.subr.mxu0 0.0
        %1164 = vmatpush1.msra.mxu0 0.0
        %1165 = vmatprep.subr.mxu0 0.0
        %1166 = vmatpush1.msra.mxu0 0.0
        %1167 = vmatprep.mubr.f32.mxu0 0.0
        %1168 = vmatmul.mubr.f32.gmra.mrb[0].mxu0 %v1098
        %v1169 = vpop.f32.mrb[0].mxu0
        %v1170 = vadd.f32 0.0, %v1169
        %v1171 = vpop.f32.mrb[0].mxu0
        %1172 = vmatprep.mubr.f32.mxu0 0.0
        %1173 = vmatmul.mubr.f32.gmra.mrb[0].mxu0 %v1101
        %v1174 = vpop.f32.mrb[0].mxu0
        %v1175 = vadd.f32 0.0, %v1174
        %v1176 = vpop.f32.mrb[0].mxu0
        %1177 = vdwg.mxu0
        %v1178 = vpack.c.bf16 %v780, %v779
        %v1180 = vlaneseq
        %v1181 = vshrl.u32 %v1180, 7
        %v1182 = vsub.s32 0, %v1181
        %v1183 = vrot.slane %v785, %v1182
        %v1186 = vsel %vm791, %v1178, 0
        %vm1188 = vcmask 1041408
        %v1190 = vsel %vm1188, %v783, 0
        %1192 = vmatprep.subr.bf16.mxu0 0
        %1193 = vmatpush1.bf16.msra.mxu0 %v1190
        %1194 = vmatprep.subr.bf16.mxu0 0
        %1195 = vmatpush1.bf16.msra.mxu0 0
        %1196 = vmatprep.subr.bf16.mxu0 0
        %1197 = vmatpush1.bf16.msra.mxu0 0
        %1198 = vmatprep.subr.bf16.mxu0 0
        %1199 = vmatpush1.bf16.msra.mxu0 0
        %1200 = vmatprep.subr.bf16.mxu0 0
        %1201 = vmatpush1.bf16.msra.mxu0 0
        %1202 = vmatprep.subr.bf16.mxu0 0
        %1203 = vmatpush1.bf16.msra.mxu0 0
        %1204 = vmatprep.subr.bf16.mxu0 0
        %1205 = vmatpush1.bf16.msra.mxu0 0
        %1206 = vmatprep.subr.bf16.mxu0 0
        %1207 = vmatpush1.bf16.msra.mxu0 0
        %1208 = vmatprep.subr.bf16.mxu0 0
        %1209 = vmatpush1.bf16.msra.mxu0 0
        %1210 = vmatprep.subr.bf16.mxu0 0
        %1211 = vmatpush1.bf16.msra.mxu0 0
        %1212 = vmatprep.subr.bf16.mxu0 0
        %1213 = vmatpush1.bf16.msra.mxu0 0
        %1214 = vmatprep.subr.bf16.mxu0 0
        %1215 = vmatpush1.bf16.msra.mxu0 0
        %1216 = vmatprep.subr.bf16.mxu0 0
        %1217 = vmatpush1.bf16.msra.mxu0 0
        %1218 = vmatprep.subr.bf16.mxu0 0
        %1219 = vmatpush1.bf16.msra.mxu0 0
        %1220 = vmatprep.subr.bf16.mxu0 0
        %1221 = vmatpush1.bf16.msra.mxu0 0
        %1222 = vmatprep.subr.bf16.mxu0 0
        %1223 = vmatpush1.bf16.msra.mxu0 0
        %1224 = vmatprep.mubr.bf16.mxu0 0
        %1225 = vmatmul.mubr.bf16.gmra.mrb[0].mxu0 %v1186
        %v1226 = vpop.f32.mrb[0].mxu0
        %v1227 = vadd.f32 %v1183, %v1226
        %v1228 = vpop.f32.mrb[0].mxu0
        %v1229 = vpop.f32.mrb[0].mxu0
        %v1230 = vadd.f32 %v1183, %v1229
        %v1231 = vpop.f32.mrb[0].mxu0
        %1232 = vdwg.mxu0
        %v1233 = vsub.f32 %v1089, %v779
        %v1234 = vsub.f32 %v1094, %v780
        %v1235 = vpack.c.bf16 %v1234, %v1233
        %v1237 = vsel %vm791, %v1235, 0
        %v1240 = vsel %vm1188, %v784, 0
        %1242 = vmatprep.subr.bf16.mxu0 0
        %1243 = vmatpush1.bf16.msra.mxu0 %v1240
        %1244 = vmatprep.subr.bf16.mxu0 0
        %1245 = vmatpush1.bf16.msra.mxu0 0
        %1246 = vmatprep.subr.bf16.mxu0 0
        %1247 = vmatpush1.bf16.msra.mxu0 0
        %1248 = vmatprep.subr.bf16.mxu0 0
        %1249 = vmatpush1.bf16.msra.mxu0 0
        %1250 = vmatprep.subr.bf16.mxu0 0
        %1251 = vmatpush1.bf16.msra.mxu0 0
        %1252 = vmatprep.subr.bf16.mxu0 0
        %1253 = vmatpush1.bf16.msra.mxu0 0
        %1254 = vmatprep.subr.bf16.mxu0 0
        %1255 = vmatpush1.bf16.msra.mxu0 0
        %1256 = vmatprep.subr.bf16.mxu0 0
        %1257 = vmatpush1.bf16.msra.mxu0 0
        %1258 = vmatprep.subr.bf16.mxu0 0
        %1259 = vmatpush1.bf16.msra.mxu0 0
        %1260 = vmatprep.subr.bf16.mxu0 0
        %1261 = vmatpush1.bf16.msra.mxu0 0
        %1262 = vmatprep.subr.bf16.mxu0 0
        %1263 = vmatpush1.bf16.msra.mxu0 0
        %1264 = vmatprep.subr.bf16.mxu0 0
        %1265 = vmatpush1.bf16.msra.mxu0 0
        %1266 = vmatprep.subr.bf16.mxu0 0
        %1267 = vmatpush1.bf16.msra.mxu0 0
        %1268 = vmatprep.subr.bf16.mxu0 0
        %1269 = vmatpush1.bf16.msra.mxu0 0
        %1270 = vmatprep.subr.bf16.mxu0 0
        %1271 = vmatpush1.bf16.msra.mxu0 0
        %1272 = vmatprep.subr.bf16.mxu0 0
        %1273 = vmatpush1.bf16.msra.mxu0 0
        %1274 = vmatprep.mubr.bf16.mxu0 0
        %1275 = vmatmul.mubr.bf16.gmra.mrb[0].mxu0 %v1237
        %v1276 = vpop.f32.mrb[0].mxu0
        %v1277 = vadd.f32 0.0, %v1276
        %v1278 = vpop.f32.mrb[0].mxu0
        %v1279 = vpop.f32.mrb[0].mxu0
        %v1280 = vadd.f32 0.0, %v1279
        %v1281 = vpop.f32.mrb[0].mxu0
        %1282 = vdwg.mxu0
        %v1283 = vadd.f32 %v1227, %v1277
        %v1284 = vadd.f32 %v1230, %v1280
        %v1285 = vmax.f32 %v1283, 0.0
        %v1286 = vmax.f32 %v1284, 0.0
        %v1287 = vpack.c.bf16 %v1286, %v1285
        %v1289 = vlaneseq
        %v1290 = vshrl.u32 %v1289, 7
        %v1291 = vsub.s32 0, %v1290
        %v1292 = vrot.slane %v790, %v1291
        %v1298 = vunpack.c.l.b16 %v786
        %v1299 = vunpack.c.l.b16 %v787
        %v1300 = vunpack.c.l.b16 %v788
        %v1301 = vunpack.c.l.b16 %v789
        %v1302 = vpack.c.b16 %v1299, %v1298
        %v1303 = vpack.c.b16 %v1301, %v1300
        %vm1306 = vcmask 261120
        %v1308 = vsel %vm1306, %v1287, 0
        %1310 = vmatprep.subr.bf16.mxu0 0
        %1311 = vmatpush1.bf16.msra.mxu0 %v1302
        %1312 = vmatprep.subr.bf16.mxu0 0
        %1313 = vmatpush1.bf16.msra.mxu0 %v1303
        %1314 = vmatprep.subr.bf16.mxu0 0
        %1315 = vmatpush1.bf16.msra.mxu0 0
        %1316 = vmatprep.subr.bf16.mxu0 0
        %1317 = vmatpush1.bf16.msra.mxu0 0
        %1318 = vmatprep.subr.bf16.mxu0 0
        %1319 = vmatpush1.bf16.msra.mxu0 0
        %1320 = vmatprep.subr.bf16.mxu0 0
        %1321 = vmatpush1.bf16.msra.mxu0 0
        %1322 = vmatprep.subr.bf16.mxu0 0
        %1323 = vmatpush1.bf16.msra.mxu0 0
        %1324 = vmatprep.subr.bf16.mxu0 0
        %1325 = vmatpush1.bf16.msra.mxu0 0
        %1326 = vmatprep.subr.bf16.mxu0 0
        %1327 = vmatpush1.bf16.msra.mxu0 0
        %1328 = vmatprep.subr.bf16.mxu0 0
        %1329 = vmatpush1.bf16.msra.mxu0 0
        %1330 = vmatprep.subr.bf16.mxu0 0
        %1331 = vmatpush1.bf16.msra.mxu0 0
        %1332 = vmatprep.subr.bf16.mxu0 0
        %1333 = vmatpush1.bf16.msra.mxu0 0
        %1334 = vmatprep.subr.bf16.mxu0 0
        %1335 = vmatpush1.bf16.msra.mxu0 0
        %1336 = vmatprep.subr.bf16.mxu0 0
        %1337 = vmatpush1.bf16.msra.mxu0 0
        %1338 = vmatprep.subr.bf16.mxu0 0
        %1339 = vmatpush1.bf16.msra.mxu0 0
        %1340 = vmatprep.subr.bf16.mxu0 0
        %1341 = vmatpush1.bf16.msra.mxu0 0
        %1342 = vmatprep.mubr.bf16.mxu0 0
        %1343 = vmatmul.mubr.bf16.gmra.mrb[0].mxu0 %v1308
        %v1344 = vpop.f32.mrb[0].mxu0
        %v1345 = vadd.f32 %v1292, %v1344
        %v1346 = vpop.f32.mrb[0].mxu0
        %v1347 = vpop.f32.mrb[0].mxu0
        %v1348 = vadd.f32 %v1292, %v1347
        %v1349 = vpop.f32.mrb[0].mxu0
        %1350 = vdwg.mxu0
        %v1351 = vmax.f32 %v1345, 0.0
        %v1352 = vmax.f32 %v1348, 0.0
        %v1353 = vsub.f32 %v1170, %v779
        %v1354 = vsub.f32 %v1175, %v780
        %v1355 = vpack.c.bf16 %v1354, %v1353
        %v1357 = vsel %vm791, %v1355, 0
        %1359 = vmatprep.subr.bf16.mxu0 0
        %1360 = vmatpush1.bf16.msra.mxu0 %v1240
        %1361 = vmatprep.subr.bf16.mxu0 0
        %1362 = vmatpush1.bf16.msra.mxu0 0
        %1363 = vmatprep.subr.bf16.mxu0 0
        %1364 = vmatpush1.bf16.msra.mxu0 0
        %1365 = vmatprep.subr.bf16.mxu0 0
        %1366 = vmatpush1.bf16.msra.mxu0 0
        %1367 = vmatprep.subr.bf16.mxu0 0
        %1368 = vmatpush1.bf16.msra.mxu0 0
        %1369 = vmatprep.subr.bf16.mxu0 0
        %1370 = vmatpush1.bf16.msra.mxu0 0
        %1371 = vmatprep.subr.bf16.mxu0 0
        %1372 = vmatpush1.bf16.msra.mxu0 0
        %1373 = vmatprep.subr.bf16.mxu0 0
        %1374 = vmatpush1.bf16.msra.mxu0 0
        %1375 = vmatprep.subr.bf16.mxu0 0
        %1376 = vmatpush1.bf16.msra.mxu0 0
        %1377 = vmatprep.subr.bf16.mxu0 0
        %1378 = vmatpush1.bf16.msra.mxu0 0
        %1379 = vmatprep.subr.bf16.mxu0 0
        %1380 = vmatpush1.bf16.msra.mxu0 0
        %1381 = vmatprep.subr.bf16.mxu0 0
        %1382 = vmatpush1.bf16.msra.mxu0 0
        %1383 = vmatprep.subr.bf16.mxu0 0
        %1384 = vmatpush1.bf16.msra.mxu0 0
        %1385 = vmatprep.subr.bf16.mxu0 0
        %1386 = vmatpush1.bf16.msra.mxu0 0
        %1387 = vmatprep.subr.bf16.mxu0 0
        %1388 = vmatpush1.bf16.msra.mxu0 0
        %1389 = vmatprep.subr.bf16.mxu0 0
        %1390 = vmatpush1.bf16.msra.mxu0 0
        %1391 = vmatprep.mubr.bf16.mxu0 0
        %1392 = vmatmul.mubr.bf16.gmra.mrb[0].mxu0 %v1357
        %v1393 = vpop.f32.mrb[0].mxu0
        %v1394 = vadd.f32 0.0, %v1393
        %v1395 = vpop.f32.mrb[0].mxu0
        %v1396 = vpop.f32.mrb[0].mxu0
        %v1397 = vadd.f32 0.0, %v1396
        %v1398 = vpop.f32.mrb[0].mxu0
        %1399 = vdwg.mxu0
        %v1400 = vadd.f32 %v1227, %v1394
        %v1401 = vadd.f32 %v1230, %v1397
        %v1402 = vmax.f32 %v1400, 0.0
        %v1403 = vmax.f32 %v1401, 0.0
        %v1404 = vpack.c.bf16 %v1403, %v1402
        %v1406 = vsel %vm1306, %v1404, 0
        %1408 = vmatprep.subr.bf16.mxu0 0
        %1409 = vmatpush1.bf16.msra.mxu0 %v1302
        %1410 = vmatprep.subr.bf16.mxu0 0
        %1411 = vmatpush1.bf16.msra.mxu0 %v1303
        %1412 = vmatprep.subr.bf16.mxu0 0
        %1413 = vmatpush1.bf16.msra.mxu0 0
        %1414 = vmatprep.subr.bf16.mxu0 0
        %1415 = vmatpush1.bf16.msra.mxu0 0
        %1416 = vmatprep.subr.bf16.mxu0 0
        %1417 = vmatpush1.bf16.msra.mxu0 0
        %1418 = vmatprep.subr.bf16.mxu0 0
        %1419 = vmatpush1.bf16.msra.mxu0 0
        %1420 = vmatprep.subr.bf16.mxu0 0
        %1421 = vmatpush1.bf16.msra.mxu0 0
        %1422 = vmatprep.subr.bf16.mxu0 0
        %1423 = vmatpush1.bf16.msra.mxu0 0
        %1424 = vmatprep.subr.bf16.mxu0 0
        %1425 = vmatpush1.bf16.msra.mxu0 0
        %1426 = vmatprep.subr.bf16.mxu0 0
        %1427 = vmatpush1.bf16.msra.mxu0 0
        %1428 = vmatprep.subr.bf16.mxu0 0
        %1429 = vmatpush1.bf16.msra.mxu0 0
        %1430 = vmatprep.subr.bf16.mxu0 0
        %1431 = vmatpush1.bf16.msra.mxu0 0
        %1432 = vmatprep.subr.bf16.mxu0 0
        %1433 = vmatpush1.bf16.msra.mxu0 0
        %1434 = vmatprep.subr.bf16.mxu0 0
        %1435 = vmatpush1.bf16.msra.mxu0 0
        %1436 = vmatprep.subr.bf16.mxu0 0
        %1437 = vmatpush1.bf16.msra.mxu0 0
        %1438 = vmatprep.subr.bf16.mxu0 0
        %1439 = vmatpush1.bf16.msra.mxu0 0
        %1440 = vmatprep.mubr.bf16.mxu0 0
        %1441 = vmatmul.mubr.bf16.gmra.mrb[0].mxu0 %v1406
        %v1442 = vpop.f32.mrb[0].mxu0
        %v1443 = vadd.f32 %v1292, %v1442
        %v1444 = vpop.f32.mrb[0].mxu0
        %v1445 = vpop.f32.mrb[0].mxu0
        %v1446 = vadd.f32 %v1292, %v1445
        %v1447 = vpop.f32.mrb[0].mxu0
        %1448 = vdwg.mxu0
        %v1449 = vmax.f32 %v1443, 0.0
        %v1450 = vmax.f32 %v1446, 0.0
        %v1451 = vmax.f32 %v1351, %v1449
        %v1452 = vmax.f32 %v1352, %v1450
        %v1453 = vld [vmem:[#allocation11] sm:$0xf]
        %v1454 = vld [vmem:[#allocation11 + $0x4] sm:$0xf]
        %v1455 = vld [vmem:[#allocation11 + $0x8] sm:$0xf]
        %v1456 = vld [vmem:[#allocation11 + $0xc] sm:$0xf]
        %v1457 = vld [vmem:[#allocation13] sm:$0xf]
        %v1458 = vld [vmem:[#allocation13 + $0x4] sm:$0xf]
        %v1459 = vld [vmem:[#allocation13 + $0x8] sm:$0xf]
        %v1460 = vld [vmem:[#allocation13 + $0xc] sm:$0xf]
        %v1461 = vld [vmem:[#allocation14] sm:$0x1]
        %v1463 = vsel %vm1306, %v1451, 0
        %v1466 = vsel %vm1306, %v1452, 0
        %1468 = vmatprep.subr.mxu0 0.0
        %1469 = vmatpush1.xpose.msra.mxu0 %v1463
        %1470 = vmatprep.subr.mxu0 0.0
        %1471 = vmatpush1.xpose.msra.mxu0 %v1466
        %1472 = vmatprep.subr.mxu0 0.0
        %1473 = vmatpush1.xpose.msra.mxu0 0.0
        %1474 = vmatprep.subr.mxu0 0.0
        %1475 = vmatpush1.xpose.msra.mxu0 0.0
        %1476 = vmatprep.subr.mxu0 0.0
        %1477 = vmatpush1.xpose.msra.mxu0 0.0
        %1478 = vmatprep.subr.mxu0 0.0
        %1479 = vmatpush1.xpose.msra.mxu0 0.0
        %1480 = vmatprep.subr.mxu0 0.0
        %1481 = vmatpush1.xpose.msra.mxu0 0.0
        %1482 = vmatprep.subr.mxu0 0.0
        %1483 = vmatpush1.xpose.msra.mxu0 0.0
        %1484 = vmatprep.subr.mxu0 0.0
        %1485 = vmatpush1.xpose.msra.mxu0 0.0
        %1486 = vmatprep.subr.mxu0 0.0
        %1487 = vmatpush1.xpose.msra.mxu0 0.0
        %1488 = vmatprep.subr.mxu0 0.0
        %1489 = vmatpush1.xpose.msra.mxu0 0.0
        %1490 = vmatprep.subr.mxu0 0.0
        %1491 = vmatpush1.xpose.msra.mxu0 0.0
        %1492 = vmatprep.subr.mxu0 0.0
        %1493 = vmatpush1.xpose.msra.mxu0 0.0
        %1494 = vmatprep.subr.mxu0 0.0
        %1495 = vmatpush1.xpose.msra.mxu0 0.0
        %1496 = vmatprep.subr.mxu0 0.0
        %1497 = vmatpush1.xpose.msra.mxu0 0.0
        %1498 = vmatprep.subr.mxu0 0.0
        %1499 = vmatpush1.xpose.msra.mxu0 0.0
        %1500 = vmatprep.subr.mxu0 0.0
        %1501 = vmatpush1.xpose.msra.mxu0 0.0
        %1502 = vmatprep.subr.mxu0 0.0
        %1503 = vmatpush1.xpose.msra.mxu0 0.0
        %1504 = vmatprep.subr.mxu0 0.0
        %1505 = vmatpush1.xpose.msra.mxu0 0.0
        %1506 = vmatprep.subr.mxu0 0.0
        %1507 = vmatpush1.xpose.msra.mxu0 0.0
        %1508 = vmatprep.subr.mxu0 0.0
        %1509 = vmatpush1.xpose.msra.mxu0 0.0
        %1510 = vmatprep.subr.mxu0 0.0
        %1511 = vmatpush1.xpose.msra.mxu0 0.0
        %1512 = vmatprep.subr.mxu0 0.0
        %1513 = vmatpush1.xpose.msra.mxu0 0.0
        %1514 = vmatprep.subr.mxu0 0.0
        %1515 = vmatpush1.xpose.msra.mxu0 0.0
        %1516 = vmatprep.subr.mxu0 0.0
        %1517 = vmatpush1.xpose.msra.mxu0 0.0
        %1518 = vmatprep.subr.mxu0 0.0
        %1519 = vmatpush1.xpose.msra.mxu0 0.0
        %1520 = vmatprep.subr.mxu0 0.0
        %1521 = vmatpush1.xpose.msra.mxu0 0.0
        %1522 = vmatprep.subr.mxu0 0.0
        %1523 = vmatpush1.xpose.msra.mxu0 0.0
        %1524 = vmatprep.subr.mxu0 0.0
        %1525 = vmatpush1.xpose.msra.mxu0 0.0
        %1526 = vmatprep.subr.mxu0 0.0
        %1527 = vmatpush1.xpose.msra.mxu0 0.0
        %1528 = vmatprep.subr.mxu0 0.0
        %1529 = vmatpush1.xpose.msra.mxu0 0.0
        %1530 = vmatprep.subr.mxu0 0.0
        %1531 = vmatpush1.xpose.msra.mxu0 0.0
        %1532 = vmatprep.mubr.f32.mxu0 0.0
        %1533 = vmatmul.mubr.f32.gmra.mrb[0].mxu0 %v1463
        %v1534 = vpop.f32.mrb[0].mxu0
        %v1535 = vadd.f32 0.0, %v1534
        %v1536 = vpop.f32.mrb[0].mxu0
        %1537 = vmatprep.mubr.f32.mxu0 0.0
        %1538 = vmatmul.mubr.f32.gmra.mrb[0].mxu0 %v1466
        %v1539 = vpop.f32.mrb[0].mxu0
        %v1540 = vadd.f32 0.0, %v1539
        %v1541 = vpop.f32.mrb[0].mxu0
        %1542 = vdwg.mxu0
        %v1543 = vmul.f32 %v1451, %v1451
        %v1544 = vmul.f32 %v1452, %v1452
        %v1545 = vsel %vm1306, %v1543, 0.0
        %1546 = vadd.xlane.f32.xlu0 %v1545
        %v1547 = vpop.xlane.xlu0 %1546
        %v1548 = vsel %vm1306, %v1544, 0.0
        %1549 = vadd.xlane.f32.xlu0 %v1548
        %v1550 = vpop.xlane.xlu0 %1549
        %1551 = vxpose.xlu0.b32.start [1/16] %v1547, 128
        %1552 = vxpose.xlu0.b32.cont [2/16] %v1550, 128
        %1553 = vxpose.xlu0.b32.cont [3/16] 0.0, 128
        %1554 = vxpose.xlu0.b32.cont [4/16] 0.0, 128
        %1555 = vxpose.xlu0.b32.cont [5/16] 0.0, 128
        %1556 = vxpose.xlu0.b32.cont [6/16] 0.0, 128
        %1557 = vxpose.xlu0.b32.cont [7/16] 0.0, 128
        %1558 = vxpose.xlu0.b32.cont [8/16] 0.0, 128
        %1559 = vxpose.xlu0.b32.cont [9/16] 0.0, 128
        %1560 = vxpose.xlu0.b32.cont [10/16] 0.0, 128
        %1561 = vxpose.xlu0.b32.cont [11/16] 0.0, 128
        %1562 = vxpose.xlu0.b32.cont [12/16] 0.0, 128
        %1563 = vxpose.xlu0.b32.cont [13/16] 0.0, 128
        %1564 = vxpose.xlu0.b32.cont [14/16] 0.0, 128
        %1565 = vxpose.xlu0.b32.cont [15/16] 0.0, 128
        %1566 = vxpose.xlu0.b32.end [16/16] 0.0, 128
        %v1567 = vpop.trf.xlu0
        %v1568 = vpop.trf.xlu0
        %v1569 = vpop.trf.xlu0
        %v1570 = vpop.trf.xlu0
        %v1571 = vpop.trf.xlu0
        %v1572 = vpop.trf.xlu0
        %v1573 = vpop.trf.xlu0
        %v1574 = vpop.trf.xlu0
        %v1575 = vpop.trf.xlu0
        %v1576 = vpop.trf.xlu0
        %v1577 = vpop.trf.xlu0
        %v1578 = vpop.trf.xlu0
        %v1579 = vpop.trf.xlu0
        %v1580 = vpop.trf.xlu0
        %v1581 = vpop.trf.xlu0
        %v1582 = vpop.trf.xlu0
        %v1583 = vmul.f32 %v1535, 2.0
        %v1584 = vmul.f32 %v1540, 2.0
        %v1585 = vlaneseq
        %v1586 = vshrl.u32 %v1585, 7
        %v1587 = vsub.s32 0, %v1586
        %v1588 = vrot.slane %v1567, %v1587
        %v1589 = vsub.f32 %v1588, %v1583
        %v1590 = vsub.f32 %v1588, %v1584
        %v1591 = vsel %vm921, %v1589, inf
        %1592 = vmin.xlane.f32.xlu0 %v1591
        %v1593 = vpop.xlane.xlu0 %1592
        %v1594 = vsel %vm921, %v1590, inf
        %1595 = vmin.xlane.f32.xlu0 %v1594
        %v1596 = vpop.xlane.xlu0 %1595
        %vm1597 = vcmp.le.f32.partialorder %v1589, %v1593
        %vm1598 = vcmp.le.f32.partialorder %v1590, %v1596
        %v1599 = vsel %vm1597, %v782, 16
        %v1600 = vsel %vm1598, %v782, 16
        %v1601 = vsel %vm921, %v1599, 2147483647
        %v1602 = vand.u32 %v1601, 65535
        %v1603 = vshra.s32 %v1601, 16
        %v1604 = vcvt.s32.f32 %v1602
        %v1605 = vcvt.s32.f32 %v1603
        %1606 = vmin.xlane.f32.xlu0 %v1605
        %v1607 = vpop.xlane.xlu0 %1606
        %vm1608 = vcmp.eq.f32.partialorder %v1605, %v1607
        %v1609 = vsel %vm1608, %v1604, inf
        %1610 = vmin.xlane.f32.xlu0 %v1609
        %v1611 = vpop.xlane.xlu0 %1610
        %v1612 = vcvt.f32.s32 %v1611
        %v1613 = vcvt.f32.s32 %v1607
        %v1614 = vshll.u32 %v1613, 16
        %v1615 = vadd.s32 %v1614, %v1612
        %v1616 = vsel %vm921, %v1600, 2147483647
        %v1617 = vand.u32 %v1616, 65535
        %v1618 = vshra.s32 %v1616, 16
        %v1619 = vcvt.s32.f32 %v1617
        %v1620 = vcvt.s32.f32 %v1618
        %1621 = vmin.xlane.f32.xlu0 %v1620
        %v1622 = vpop.xlane.xlu0 %1621
        %vm1623 = vcmp.eq.f32.partialorder %v1620, %v1622
        %v1624 = vsel %vm1623, %v1619, inf
        %1625 = vmin.xlane.f32.xlu0 %v1624
        %v1626 = vpop.xlane.xlu0 %1625
        %v1627 = vcvt.f32.s32 %v1626
        %v1628 = vcvt.f32.s32 %v1622
        %v1629 = vshll.u32 %v1628, 16
        %v1630 = vadd.s32 %v1629, %v1627
        %vm1631 = vcmp.eq.s32.totalorder %v782, %v1615
        %vm1632 = vcmp.eq.s32.totalorder %v782, %v1630
        %v1633 = vsel %vm1631, 1, 0
        %v1634 = vsel %vm1632, 1, 0
        %v1635 = vcvt.s32.f32 %v1633
        %v1636 = vcvt.s32.f32 %v1634
        %v1637 = vsel %vm1631, 1e+30, %v1589
        %v1638 = vsel %vm1632, 1e+30, %v1590
        %v1639 = vsel %vm921, %v1637, inf
        %1640 = vmin.xlane.f32.xlu0 %v1639
        %v1641 = vpop.xlane.xlu0 %1640
        %v1642 = vsel %vm921, %v1638, inf
        %1643 = vmin.xlane.f32.xlu0 %v1642
        %v1644 = vpop.xlane.xlu0 %1643
        %vm1645 = vcmp.le.f32.partialorder %v1637, %v1641
        %vm1646 = vcmp.le.f32.partialorder %v1638, %v1644
        %v1647 = vsel %vm1645, %v782, 16
        %v1648 = vsel %vm1646, %v782, 16
        %v1649 = vsel %vm921, %v1647, 2147483647
        %v1650 = vand.u32 %v1649, 65535
        %v1651 = vshra.s32 %v1649, 16
        %v1652 = vcvt.s32.f32 %v1650
        %v1653 = vcvt.s32.f32 %v1651
        %1654 = vmin.xlane.f32.xlu0 %v1653
        %v1655 = vpop.xlane.xlu0 %1654
        %vm1656 = vcmp.eq.f32.partialorder %v1653, %v1655
        %v1657 = vsel %vm1656, %v1652, inf
        %1658 = vmin.xlane.f32.xlu0 %v1657
        %v1659 = vpop.xlane.xlu0 %1658
        %v1660 = vcvt.f32.s32 %v1659
        %v1661 = vcvt.f32.s32 %v1655
        %v1662 = vshll.u32 %v1661, 16
        %v1663 = vadd.s32 %v1662, %v1660
        %v1664 = vsel %vm921, %v1648, 2147483647
        %v1665 = vand.u32 %v1664, 65535
        %v1666 = vshra.s32 %v1664, 16
        %v1667 = vcvt.s32.f32 %v1665
        %v1668 = vcvt.s32.f32 %v1666
        %1669 = vmin.xlane.f32.xlu0 %v1668
        %v1670 = vpop.xlane.xlu0 %1669
        %vm1671 = vcmp.eq.f32.partialorder %v1668, %v1670
        %v1672 = vsel %vm1671, %v1667, inf
        %1673 = vmin.xlane.f32.xlu0 %v1672
        %v1674 = vpop.xlane.xlu0 %1673
        %v1675 = vcvt.f32.s32 %v1674
        %v1676 = vcvt.f32.s32 %v1670
        %v1677 = vshll.u32 %v1676, 16
        %v1678 = vadd.s32 %v1677, %v1675
        %vm1679 = vcmp.eq.s32.totalorder %v782, %v1663
        %vm1680 = vcmp.eq.s32.totalorder %v782, %v1678
        %v1681 = vsel %vm1679, 1, 0
        %v1682 = vsel %vm1680, 1, 0
        %v1683 = vcvt.s32.f32 %v1681
        %v1684 = vcvt.s32.f32 %v1682
        %v1686 = vsel %vm921, %v1635, 0
        %v1689 = vsel %vm921, %v1636, 0
        %1691 = vmatprep.subr.mxu0 0.0
        %1692 = vmatpush1.msra.mxu0 %v1451
        %1693 = vmatprep.subr.mxu0 0.0
        %1694 = vmatpush1.msra.mxu0 %v1452
        %1695 = vmatprep.subr.mxu0 0.0
        %1696 = vmatpush1.msra.mxu0 0.0
        %1697 = vmatprep.subr.mxu0 0.0
        %1698 = vmatpush1.msra.mxu0 0.0
        %1699 = vmatprep.subr.mxu0 0.0
        %1700 = vmatpush1.msra.mxu0 0.0
        %1701 = vmatprep.subr.mxu0 0.0
        %1702 = vmatpush1.msra.mxu0 0.0
        %1703 = vmatprep.subr.mxu0 0.0
        %1704 = vmatpush1.msra.mxu0 0.0
        %1705 = vmatprep.subr.mxu0 0.0
        %1706 = vmatpush1.msra.mxu0 0.0
        %1707 = vmatprep.subr.mxu0 0.0
        %1708 = vmatpush1.msra.mxu0 0.0
        %1709 = vmatprep.subr.mxu0 0.0
        %1710 = vmatpush1.msra.mxu0 0.0
        %1711 = vmatprep.subr.mxu0 0.0
        %1712 = vmatpush1.msra.mxu0 0.0
        %1713 = vmatprep.subr.mxu0 0.0
        %1714 = vmatpush1.msra.mxu0 0.0
        %1715 = vmatprep.subr.mxu0 0.0
        %1716 = vmatpush1.msra.mxu0 0.0
        %1717 = vmatprep.subr.mxu0 0.0
        %1718 = vmatpush1.msra.mxu0 0.0
        %1719 = vmatprep.subr.mxu0 0.0
        %1720 = vmatpush1.msra.mxu0 0.0
        %1721 = vmatprep.subr.mxu0 0.0
        %1722 = vmatpush1.msra.mxu0 0.0
        %1723 = vmatprep.subr.mxu0 0.0
        %1724 = vmatpush1.msra.mxu0 0.0
        %1725 = vmatprep.subr.mxu0 0.0
        %1726 = vmatpush1.msra.mxu0 0.0
        %1727 = vmatprep.subr.mxu0 0.0
        %1728 = vmatpush1.msra.mxu0 0.0
        %1729 = vmatprep.subr.mxu0 0.0
        %1730 = vmatpush1.msra.mxu0 0.0
        %1731 = vmatprep.subr.mxu0 0.0
        %1732 = vmatpush1.msra.mxu0 0.0
        %1733 = vmatprep.subr.mxu0 0.0
        %1734 = vmatpush1.msra.mxu0 0.0
        %1735 = vmatprep.subr.mxu0 0.0
        %1736 = vmatpush1.msra.mxu0 0.0
        %1737 = vmatprep.subr.mxu0 0.0
        %1738 = vmatpush1.msra.mxu0 0.0
        %1739 = vmatprep.subr.mxu0 0.0
        %1740 = vmatpush1.msra.mxu0 0.0
        %1741 = vmatprep.subr.mxu0 0.0
        %1742 = vmatpush1.msra.mxu0 0.0
        %1743 = vmatprep.subr.mxu0 0.0
        %1744 = vmatpush1.msra.mxu0 0.0
        %1745 = vmatprep.subr.mxu0 0.0
        %1746 = vmatpush1.msra.mxu0 0.0
        %1747 = vmatprep.subr.mxu0 0.0
        %1748 = vmatpush1.msra.mxu0 0.0
        %1749 = vmatprep.subr.mxu0 0.0
        %1750 = vmatpush1.msra.mxu0 0.0
        %1751 = vmatprep.subr.mxu0 0.0
        %1752 = vmatpush1.msra.mxu0 0.0
        %1753 = vmatprep.subr.mxu0 0.0
        %1754 = vmatpush1.msra.mxu0 0.0
        %1755 = vmatprep.mubr.f32.mxu0 0.0
        %1756 = vmatmul.mubr.f32.gmra.mrb[0].mxu0 %v1686
        %v1757 = vpop.f32.mrb[0].mxu0
        %v1758 = vadd.f32 0.0, %v1757
        %v1759 = vpop.f32.mrb[0].mxu0
        %1760 = vmatprep.mubr.f32.mxu0 0.0
        %1761 = vmatmul.mubr.f32.gmra.mrb[0].mxu0 %v1689
        %v1762 = vpop.f32.mrb[0].mxu0
        %v1763 = vadd.f32 0.0, %v1762
        %v1764 = vpop.f32.mrb[0].mxu0
        %1765 = vdwg.mxu0
        %v1767 = vsel %vm921, %v1683, 0
        %v1770 = vsel %vm921, %v1684, 0
        %1772 = vmatprep.subr.mxu0 0.0
        %1773 = vmatpush1.msra.mxu0 %v1451
        %1774 = vmatprep.subr.mxu0 0.0
        %1775 = vmatpush1.msra.mxu0 %v1452
        %1776 = vmatprep.subr.mxu0 0.0
        %1777 = vmatpush1.msra.mxu0 0.0
        %1778 = vmatprep.subr.mxu0 0.0
        %1779 = vmatpush1.msra.mxu0 0.0
        %1780 = vmatprep.subr.mxu0 0.0
        %1781 = vmatpush1.msra.mxu0 0.0
        %1782 = vmatprep.subr.mxu0 0.0
        %1783 = vmatpush1.msra.mxu0 0.0
        %1784 = vmatprep.subr.mxu0 0.0
        %1785 = vmatpush1.msra.mxu0 0.0
        %1786 = vmatprep.subr.mxu0 0.0
        %1787 = vmatpush1.msra.mxu0 0.0
        %1788 = vmatprep.subr.mxu0 0.0
        %1789 = vmatpush1.msra.mxu0 0.0
        %1790 = vmatprep.subr.mxu0 0.0
        %1791 = vmatpush1.msra.mxu0 0.0
        %1792 = vmatprep.subr.mxu0 0.0
        %1793 = vmatpush1.msra.mxu0 0.0
        %1794 = vmatprep.subr.mxu0 0.0
        %1795 = vmatpush1.msra.mxu0 0.0
        %1796 = vmatprep.subr.mxu0 0.0
        %1797 = vmatpush1.msra.mxu0 0.0
        %1798 = vmatprep.subr.mxu0 0.0
        %1799 = vmatpush1.msra.mxu0 0.0
        %1800 = vmatprep.subr.mxu0 0.0
        %1801 = vmatpush1.msra.mxu0 0.0
        %1802 = vmatprep.subr.mxu0 0.0
        %1803 = vmatpush1.msra.mxu0 0.0
        %1804 = vmatprep.subr.mxu0 0.0
        %1805 = vmatpush1.msra.mxu0 0.0
        %1806 = vmatprep.subr.mxu0 0.0
        %1807 = vmatpush1.msra.mxu0 0.0
        %1808 = vmatprep.subr.mxu0 0.0
        %1809 = vmatpush1.msra.mxu0 0.0
        %1810 = vmatprep.subr.mxu0 0.0
        %1811 = vmatpush1.msra.mxu0 0.0
        %1812 = vmatprep.subr.mxu0 0.0
        %1813 = vmatpush1.msra.mxu0 0.0
        %1814 = vmatprep.subr.mxu0 0.0
        %1815 = vmatpush1.msra.mxu0 0.0
        %1816 = vmatprep.subr.mxu0 0.0
        %1817 = vmatpush1.msra.mxu0 0.0
        %1818 = vmatprep.subr.mxu0 0.0
        %1819 = vmatpush1.msra.mxu0 0.0
        %1820 = vmatprep.subr.mxu0 0.0
        %1821 = vmatpush1.msra.mxu0 0.0
        %1822 = vmatprep.subr.mxu0 0.0
        %1823 = vmatpush1.msra.mxu0 0.0
        %1824 = vmatprep.subr.mxu0 0.0
        %1825 = vmatpush1.msra.mxu0 0.0
        %1826 = vmatprep.subr.mxu0 0.0
        %1827 = vmatpush1.msra.mxu0 0.0
        %1828 = vmatprep.subr.mxu0 0.0
        %1829 = vmatpush1.msra.mxu0 0.0
        %1830 = vmatprep.subr.mxu0 0.0
        %1831 = vmatpush1.msra.mxu0 0.0
        %1832 = vmatprep.subr.mxu0 0.0
        %1833 = vmatpush1.msra.mxu0 0.0
        %1834 = vmatprep.subr.mxu0 0.0
        %1835 = vmatpush1.msra.mxu0 0.0
        %1836 = vmatprep.mubr.f32.mxu0 0.0
        %1837 = vmatmul.mubr.f32.gmra.mrb[0].mxu0 %v1767
        %v1838 = vpop.f32.mrb[0].mxu0
        %v1839 = vadd.f32 0.0, %v1838
        %v1840 = vpop.f32.mrb[0].mxu0
        %1841 = vmatprep.mubr.f32.mxu0 0.0
        %1842 = vmatmul.mubr.f32.gmra.mrb[0].mxu0 %v1770
        %v1843 = vpop.f32.mrb[0].mxu0
        %v1844 = vadd.f32 0.0, %v1843
        %v1845 = vpop.f32.mrb[0].mxu0
        %1846 = vdwg.mxu0
        %v1847 = vpack.c.bf16 %v1452, %v1451
        %v1849 = vlaneseq
        %v1850 = vshrl.u32 %v1849, 7
        %v1851 = vsub.s32 0, %v1850
        %v1852 = vrot.slane %v1461, %v1851
        %v1858 = vunpack.c.l.b16 %v1453
        %v1859 = vunpack.c.l.b16 %v1454
        %v1860 = vunpack.c.l.b16 %v1455
        %v1861 = vunpack.c.l.b16 %v1456
        %v1862 = vpack.c.b16 %v1859, %v1858
        %v1863 = vpack.c.b16 %v1861, %v1860
        %v1867 = vsel %vm1306, %v1847, 0
        %1869 = vmatprep.subr.bf16.mxu0 0
        %1870 = vmatpush1.bf16.msra.mxu0 %v1862
        %1871 = vmatprep.subr.bf16.mxu0 0
        %1872 = vmatpush1.bf16.msra.mxu0 %v1863
        %1873 = vmatprep.subr.bf16.mxu0 0
        %1874 = vmatpush1.bf16.msra.mxu0 0
        %1875 = vmatprep.subr.bf16.mxu0 0
        %1876 = vmatpush1.bf16.msra.mxu0 0
        %1877 = vmatprep.subr.bf16.mxu0 0
        %1878 = vmatpush1.bf16.msra.mxu0 0
        %1879 = vmatprep.subr.bf16.mxu0 0
        %1880 = vmatpush1.bf16.msra.mxu0 0
        %1881 = vmatprep.subr.bf16.mxu0 0
        %1882 = vmatpush1.bf16.msra.mxu0 0
        %1883 = vmatprep.subr.bf16.mxu0 0
        %1884 = vmatpush1.bf16.msra.mxu0 0
        %1885 = vmatprep.subr.bf16.mxu0 0
        %1886 = vmatpush1.bf16.msra.mxu0 0
        %1887 = vmatprep.subr.bf16.mxu0 0
        %1888 = vmatpush1.bf16.msra.mxu0 0
        %1889 = vmatprep.subr.bf16.mxu0 0
        %1890 = vmatpush1.bf16.msra.mxu0 0
        %1891 = vmatprep.subr.bf16.mxu0 0
        %1892 = vmatpush1.bf16.msra.mxu0 0
        %1893 = vmatprep.subr.bf16.mxu0 0
        %1894 = vmatpush1.bf16.msra.mxu0 0
        %1895 = vmatprep.subr.bf16.mxu0 0
        %1896 = vmatpush1.bf16.msra.mxu0 0
        %1897 = vmatprep.subr.bf16.mxu0 0
        %1898 = vmatpush1.bf16.msra.mxu0 0
        %1899 = vmatprep.subr.bf16.mxu0 0
        %1900 = vmatpush1.bf16.msra.mxu0 0
        %1901 = vmatprep.mubr.bf16.mxu0 0
        %1902 = vmatmul.mubr.bf16.gmra.mrb[0].mxu0 %v1867
        %v1903 = vpop.f32.mrb[0].mxu0
        %v1904 = vadd.f32 %v1852, %v1903
        %v1905 = vpop.f32.mrb[0].mxu0
        %v1906 = vpop.f32.mrb[0].mxu0
        %v1907 = vadd.f32 %v1852, %v1906
        %v1908 = vpop.f32.mrb[0].mxu0
        %1909 = vdwg.mxu0
        %v1910 = vsub.f32 %v1758, %v1451
        %v1911 = vsub.f32 %v1763, %v1452
        %v1912 = vpack.c.bf16 %v1911, %v1910
        %v1917 = vunpack.c.l.b16 %v1457
        %v1918 = vunpack.c.l.b16 %v1458
        %v1919 = vunpack.c.l.b16 %v1459
        %v1920 = vunpack.c.l.b16 %v1460
        %v1921 = vpack.c.b16 %v1918, %v1917
        %v1922 = vpack.c.b16 %v1920, %v1919
        %v1926 = vsel %vm1306, %v1912, 0
        %1928 = vmatprep.subr.bf16.mxu0 0
        %1929 = vmatpush1.bf16.msra.mxu0 %v1921
        %1930 = vmatprep.subr.bf16.mxu0 0
        %1931 = vmatpush1.bf16.msra.mxu0 %v1922
        %1932 = vmatprep.subr.bf16.mxu0 0
        %1933 = vmatpush1.bf16.msra.mxu0 0
        %1934 = vmatprep.subr.bf16.mxu0 0
        %1935 = vmatpush1.bf16.msra.mxu0 0
        %1936 = vmatprep.subr.bf16.mxu0 0
        %1937 = vmatpush1.bf16.msra.mxu0 0
        %1938 = vmatprep.subr.bf16.mxu0 0
        %1939 = vmatpush1.bf16.msra.mxu0 0
        %1940 = vmatprep.subr.bf16.mxu0 0
        %1941 = vmatpush1.bf16.msra.mxu0 0
        %1942 = vmatprep.subr.bf16.mxu0 0
        %1943 = vmatpush1.bf16.msra.mxu0 0
        %1944 = vmatprep.subr.bf16.mxu0 0
        %1945 = vmatpush1.bf16.msra.mxu0 0
        %1946 = vmatprep.subr.bf16.mxu0 0
        %1947 = vmatpush1.bf16.msra.mxu0 0
        %1948 = vmatprep.subr.bf16.mxu0 0
        %1949 = vmatpush1.bf16.msra.mxu0 0
        %1950 = vmatprep.subr.bf16.mxu0 0
        %1951 = vmatpush1.bf16.msra.mxu0 0
        %1952 = vmatprep.subr.bf16.mxu0 0
        %1953 = vmatpush1.bf16.msra.mxu0 0
        %1954 = vmatprep.subr.bf16.mxu0 0
        %1955 = vmatpush1.bf16.msra.mxu0 0
        %1956 = vmatprep.subr.bf16.mxu0 0
        %1957 = vmatpush1.bf16.msra.mxu0 0
        %1958 = vmatprep.subr.bf16.mxu0 0
        %1959 = vmatpush1.bf16.msra.mxu0 0
        %1960 = vmatprep.mubr.bf16.mxu0 0
        %1961 = vmatmul.mubr.bf16.gmra.mrb[0].mxu0 %v1926
        %v1962 = vpop.f32.mrb[0].mxu0
        %v1963 = vadd.f32 0.0, %v1962
        %v1964 = vpop.f32.mrb[0].mxu0
        %v1965 = vpop.f32.mrb[0].mxu0
        %v1966 = vadd.f32 0.0, %v1965
        %v1967 = vpop.f32.mrb[0].mxu0
        %1968 = vdwg.mxu0
        %v1969 = vadd.f32 %v1904, %v1963
        %v1970 = vadd.f32 %v1907, %v1966
        %v1971 = vmax.f32 %v1969, 0.0
        %v1972 = vmax.f32 %v1970, 0.0
        %v1973 = vsub.f32 %v1839, %v1451
        %v1974 = vsub.f32 %v1844, %v1452
        %v1975 = vpack.c.bf16 %v1974, %v1973
        %v1977 = vsel %vm1306, %v1975, 0
        %1979 = vmatprep.subr.bf16.mxu0 0
        %1980 = vmatpush1.bf16.msra.mxu0 %v1921
        %1981 = vmatprep.subr.bf16.mxu0 0
        %1982 = vmatpush1.bf16.msra.mxu0 %v1922
        %1983 = vmatprep.subr.bf16.mxu0 0
        %1984 = vmatpush1.bf16.msra.mxu0 0
        %1985 = vmatprep.subr.bf16.mxu0 0
        %1986 = vmatpush1.bf16.msra.mxu0 0
        %1987 = vmatprep.subr.bf16.mxu0 0
        %1988 = vmatpush1.bf16.msra.mxu0 0
        %1989 = vmatprep.subr.bf16.mxu0 0
        %1990 = vmatpush1.bf16.msra.mxu0 0
        %1991 = vmatprep.subr.bf16.mxu0 0
        %1992 = vmatpush1.bf16.msra.mxu0 0
        %1993 = vmatprep.subr.bf16.mxu0 0
        %1994 = vmatpush1.bf16.msra.mxu0 0
        %1995 = vmatprep.subr.bf16.mxu0 0
        %1996 = vmatpush1.bf16.msra.mxu0 0
        %1997 = vmatprep.subr.bf16.mxu0 0
        %1998 = vmatpush1.bf16.msra.mxu0 0
        %1999 = vmatprep.subr.bf16.mxu0 0
        %2000 = vmatpush1.bf16.msra.mxu0 0
        %2001 = vmatprep.subr.bf16.mxu0 0
        %2002 = vmatpush1.bf16.msra.mxu0 0
        %2003 = vmatprep.subr.bf16.mxu0 0
        %2004 = vmatpush1.bf16.msra.mxu0 0
        %2005 = vmatprep.subr.bf16.mxu0 0
        %2006 = vmatpush1.bf16.msra.mxu0 0
        %2007 = vmatprep.subr.bf16.mxu0 0
        %2008 = vmatpush1.bf16.msra.mxu0 0
        %2009 = vmatprep.subr.bf16.mxu0 0
        %2010 = vmatpush1.bf16.msra.mxu0 0
        %2011 = vmatprep.mubr.bf16.mxu0 0
        %2012 = vmatmul.mubr.bf16.gmra.mrb[0].mxu0 %v1977
        %v2013 = vpop.f32.mrb[0].mxu0
        %v2014 = vadd.f32 0.0, %v2013
        %v2015 = vpop.f32.mrb[0].mxu0
        %v2016 = vpop.f32.mrb[0].mxu0
        %v2017 = vadd.f32 0.0, %v2016
        %v2018 = vpop.f32.mrb[0].mxu0
        %2019 = vdwg.mxu0
        %v2020 = vadd.f32 %v1904, %v2014
        %v2021 = vadd.f32 %v1907, %v2017
        %v2022 = vmax.f32 %v2020, 0.0
        %v2023 = vmax.f32 %v2021, 0.0
        %v2024 = vmax.f32 %v1971, %v2022
        %v2025 = vmax.f32 %v1972, %v2023
        %v2026 = vld [vmem:[#allocation16] sm:$0xf]
        %v2027 = vld [vmem:[#allocation16 + $0x4] sm:$0xf]
        %v2028 = vld [vmem:[#allocation16 + $0x8] sm:$0xf]
        %v2029 = vld [vmem:[#allocation16 + $0xc] sm:$0xf]
        %v2030 = vld [vmem:[#allocation17] sm:$0xf]
        %v2031 = vld [vmem:[#allocation17 + $0x4] sm:$0xf]
        %v2032 = vld [vmem:[#allocation17 + $0x8] sm:$0xf]
        %v2033 = vld [vmem:[#allocation17 + $0xc] sm:$0xf]
        %v2034 = vld [vmem:[#allocation19] sm:$0x1]
        %v2036 = vsel %vm1306, %v2024, 0
        %v2039 = vsel %vm1306, %v2025, 0
        %2041 = vmatprep.subr.mxu0 0.0
        %2042 = vmatpush1.xpose.msra.mxu0 %v2036
        %2043 = vmatprep.subr.mxu0 0.0
        %2044 = vmatpush1.xpose.msra.mxu0 %v2039
        %2045 = vmatprep.subr.mxu0 0.0
        %2046 = vmatpush1.xpose.msra.mxu0 0.0
        %2047 = vmatprep.subr.mxu0 0.0
        %2048 = vmatpush1.xpose.msra.mxu0 0.0
        %2049 = vmatprep.subr.mxu0 0.0
        %2050 = vmatpush1.xpose.msra.mxu0 0.0
        %2051 = vmatprep.subr.mxu0 0.0
        %2052 = vmatpush1.xpose.msra.mxu0 0.0
        %2053 = vmatprep.subr.mxu0 0.0
        %2054 = vmatpush1.xpose.msra.mxu0 0.0
        %2055 = vmatprep.subr.mxu0 0.0
        %2056 = vmatpush1.xpose.msra.mxu0 0.0
        %2057 = vmatprep.subr.mxu0 0.0
        %2058 = vmatpush1.xpose.msra.mxu0 0.0
        %2059 = vmatprep.subr.mxu0 0.0
        %2060 = vmatpush1.xpose.msra.mxu0 0.0
        %2061 = vmatprep.subr.mxu0 0.0
        %2062 = vmatpush1.xpose.msra.mxu0 0.0
        %2063 = vmatprep.subr.mxu0 0.0
        %2064 = vmatpush1.xpose.msra.mxu0 0.0
        %2065 = vmatprep.subr.mxu0 0.0
        %2066 = vmatpush1.xpose.msra.mxu0 0.0
        %2067 = vmatprep.subr.mxu0 0.0
        %2068 = vmatpush1.xpose.msra.mxu0 0.0
        %2069 = vmatprep.subr.mxu0 0.0
        %2070 = vmatpush1.xpose.msra.mxu0 0.0
        %2071 = vmatprep.subr.mxu0 0.0
        %2072 = vmatpush1.xpose.msra.mxu0 0.0
        %2073 = vmatprep.subr.mxu0 0.0
        %2074 = vmatpush1.xpose.msra.mxu0 0.0
        %2075 = vmatprep.subr.mxu0 0.0
        %2076 = vmatpush1.xpose.msra.mxu0 0.0
        %2077 = vmatprep.subr.mxu0 0.0
        %2078 = vmatpush1.xpose.msra.mxu0 0.0
        %2079 = vmatprep.subr.mxu0 0.0
        %2080 = vmatpush1.xpose.msra.mxu0 0.0
        %2081 = vmatprep.subr.mxu0 0.0
        %2082 = vmatpush1.xpose.msra.mxu0 0.0
        %2083 = vmatprep.subr.mxu0 0.0
        %2084 = vmatpush1.xpose.msra.mxu0 0.0
        %2085 = vmatprep.subr.mxu0 0.0
        %2086 = vmatpush1.xpose.msra.mxu0 0.0
        %2087 = vmatprep.subr.mxu0 0.0
        %2088 = vmatpush1.xpose.msra.mxu0 0.0
        %2089 = vmatprep.subr.mxu0 0.0
        %2090 = vmatpush1.xpose.msra.mxu0 0.0
        %2091 = vmatprep.subr.mxu0 0.0
        %2092 = vmatpush1.xpose.msra.mxu0 0.0
        %2093 = vmatprep.subr.mxu0 0.0
        %2094 = vmatpush1.xpose.msra.mxu0 0.0
        %2095 = vmatprep.subr.mxu0 0.0
        %2096 = vmatpush1.xpose.msra.mxu0 0.0
        %2097 = vmatprep.subr.mxu0 0.0
        %2098 = vmatpush1.xpose.msra.mxu0 0.0
        %2099 = vmatprep.subr.mxu0 0.0
        %2100 = vmatpush1.xpose.msra.mxu0 0.0
        %2101 = vmatprep.subr.mxu0 0.0
        %2102 = vmatpush1.xpose.msra.mxu0 0.0
        %2103 = vmatprep.subr.mxu0 0.0
        %2104 = vmatpush1.xpose.msra.mxu0 0.0
        %2105 = vmatprep.mubr.f32.mxu0 0.0
        %2106 = vmatmul.mubr.f32.gmra.mrb[0].mxu0 %v2036
        %v2107 = vpop.f32.mrb[0].mxu0
        %v2108 = vadd.f32 0.0, %v2107
        %v2109 = vpop.f32.mrb[0].mxu0
        %2110 = vmatprep.mubr.f32.mxu0 0.0
        %2111 = vmatmul.mubr.f32.gmra.mrb[0].mxu0 %v2039
        %v2112 = vpop.f32.mrb[0].mxu0
        %v2113 = vadd.f32 0.0, %v2112
        %v2114 = vpop.f32.mrb[0].mxu0
        %2115 = vdwg.mxu0
        %v2116 = vmul.f32 %v2024, %v2024
        %v2117 = vmul.f32 %v2025, %v2025
        %v2118 = vsel %vm1306, %v2116, 0.0
        %2119 = vadd.xlane.f32.xlu0 %v2118
        %v2120 = vpop.xlane.xlu0 %2119
        %v2121 = vsel %vm1306, %v2117, 0.0
        %2122 = vadd.xlane.f32.xlu0 %v2121
        %v2123 = vpop.xlane.xlu0 %2122
        %2124 = vxpose.xlu0.b32.start [1/16] %v2120, 128
        %2125 = vxpose.xlu0.b32.cont [2/16] %v2123, 128
        %2126 = vxpose.xlu0.b32.cont [3/16] 0.0, 128
        %2127 = vxpose.xlu0.b32.cont [4/16] 0.0, 128
        %2128 = vxpose.xlu0.b32.cont [5/16] 0.0, 128
        %2129 = vxpose.xlu0.b32.cont [6/16] 0.0, 128
        %2130 = vxpose.xlu0.b32.cont [7/16] 0.0, 128
        %2131 = vxpose.xlu0.b32.cont [8/16] 0.0, 128
        %2132 = vxpose.xlu0.b32.cont [9/16] 0.0, 128
        %2133 = vxpose.xlu0.b32.cont [10/16] 0.0, 128
        %2134 = vxpose.xlu0.b32.cont [11/16] 0.0, 128
        %2135 = vxpose.xlu0.b32.cont [12/16] 0.0, 128
        %2136 = vxpose.xlu0.b32.cont [13/16] 0.0, 128
        %2137 = vxpose.xlu0.b32.cont [14/16] 0.0, 128
        %2138 = vxpose.xlu0.b32.cont [15/16] 0.0, 128
        %2139 = vxpose.xlu0.b32.end [16/16] 0.0, 128
        %v2140 = vpop.trf.xlu0
        %v2141 = vpop.trf.xlu0
        %v2142 = vpop.trf.xlu0
        %v2143 = vpop.trf.xlu0
        %v2144 = vpop.trf.xlu0
        %v2145 = vpop.trf.xlu0
        %v2146 = vpop.trf.xlu0
        %v2147 = vpop.trf.xlu0
        %v2148 = vpop.trf.xlu0
        %v2149 = vpop.trf.xlu0
        %v2150 = vpop.trf.xlu0
        %v2151 = vpop.trf.xlu0
        %v2152 = vpop.trf.xlu0
        %v2153 = vpop.trf.xlu0
        %v2154 = vpop.trf.xlu0
        %v2155 = vpop.trf.xlu0
        %v2156 = vmul.f32 %v2108, 2.0
        %v2157 = vmul.f32 %v2113, 2.0
        %v2158 = vlaneseq
        %v2159 = vshrl.u32 %v2158, 7
        %v2160 = vsub.s32 0, %v2159
        %v2161 = vrot.slane %v2140, %v2160
        %v2162 = vsub.f32 %v2161, %v2156
        %v2163 = vsub.f32 %v2161, %v2157
        %v2164 = vsel %vm921, %v2162, inf
        %2165 = vmin.xlane.f32.xlu0 %v2164
        %v2166 = vpop.xlane.xlu0 %2165
        %v2167 = vsel %vm921, %v2163, inf
        %2168 = vmin.xlane.f32.xlu0 %v2167
        %v2169 = vpop.xlane.xlu0 %2168
        %vm2170 = vcmp.le.f32.partialorder %v2162, %v2166
        %vm2171 = vcmp.le.f32.partialorder %v2163, %v2169
        %v2172 = vsel %vm2170, %v782, 16
        %v2173 = vsel %vm2171, %v782, 16
        %v2174 = vsel %vm921, %v2172, 2147483647
        %v2175 = vand.u32 %v2174, 65535
        %v2176 = vshra.s32 %v2174, 16
        %v2177 = vcvt.s32.f32 %v2175
        %v2178 = vcvt.s32.f32 %v2176
        %2179 = vmin.xlane.f32.xlu0 %v2178
        %v2180 = vpop.xlane.xlu0 %2179
        %vm2181 = vcmp.eq.f32.partialorder %v2178, %v2180
        %v2182 = vsel %vm2181, %v2177, inf
        %2183 = vmin.xlane.f32.xlu0 %v2182
        %v2184 = vpop.xlane.xlu0 %2183
        %v2185 = vcvt.f32.s32 %v2184
        %v2186 = vcvt.f32.s32 %v2180
        %v2187 = vshll.u32 %v2186, 16
        %v2188 = vadd.s32 %v2187, %v2185
        %v2189 = vsel %vm921, %v2173, 2147483647
        %v2190 = vand.u32 %v2189, 65535
        %v2191 = vshra.s32 %v2189, 16
        %v2192 = vcvt.s32.f32 %v2190
        %v2193 = vcvt.s32.f32 %v2191
        %2194 = vmin.xlane.f32.xlu0 %v2193
        %v2195 = vpop.xlane.xlu0 %2194
        %vm2196 = vcmp.eq.f32.partialorder %v2193, %v2195
        %v2197 = vsel %vm2196, %v2192, inf
        %2198 = vmin.xlane.f32.xlu0 %v2197
        %v2199 = vpop.xlane.xlu0 %2198
        %v2200 = vcvt.f32.s32 %v2199
        %v2201 = vcvt.f32.s32 %v2195
        %v2202 = vshll.u32 %v2201, 16
        %v2203 = vadd.s32 %v2202, %v2200
        %vm2204 = vcmp.eq.s32.totalorder %v782, %v2188
        %vm2205 = vcmp.eq.s32.totalorder %v782, %v2203
        %v2206 = vsel %vm2204, 1, 0
        %v2207 = vsel %vm2205, 1, 0
        %v2208 = vcvt.s32.f32 %v2206
        %v2209 = vcvt.s32.f32 %v2207
        %v2210 = vsel %vm2204, 1e+30, %v2162
        %v2211 = vsel %vm2205, 1e+30, %v2163
        %v2212 = vsel %vm921, %v2210, inf
        %2213 = vmin.xlane.f32.xlu0 %v2212
        %v2214 = vpop.xlane.xlu0 %2213
        %v2215 = vsel %vm921, %v2211, inf
        %2216 = vmin.xlane.f32.xlu0 %v2215
        %v2217 = vpop.xlane.xlu0 %2216
        %vm2218 = vcmp.le.f32.partialorder %v2210, %v2214
        %vm2219 = vcmp.le.f32.partialorder %v2211, %v2217
        %v2220 = vsel %vm2218, %v782, 16
        %v2221 = vsel %vm2219, %v782, 16
        %v2222 = vsel %vm921, %v2220, 2147483647
        %v2223 = vand.u32 %v2222, 65535
        %v2224 = vshra.s32 %v2222, 16
        %v2225 = vcvt.s32.f32 %v2223
        %v2226 = vcvt.s32.f32 %v2224
        %2227 = vmin.xlane.f32.xlu0 %v2226
        %v2228 = vpop.xlane.xlu0 %2227
        %vm2229 = vcmp.eq.f32.partialorder %v2226, %v2228
        %v2230 = vsel %vm2229, %v2225, inf
        %2231 = vmin.xlane.f32.xlu0 %v2230
        %v2232 = vpop.xlane.xlu0 %2231
        %v2233 = vcvt.f32.s32 %v2232
        %v2234 = vcvt.f32.s32 %v2228
        %v2235 = vshll.u32 %v2234, 16
        %v2236 = vadd.s32 %v2235, %v2233
        %v2237 = vsel %vm921, %v2221, 2147483647
        %v2238 = vand.u32 %v2237, 65535
        %v2239 = vshra.s32 %v2237, 16
        %v2240 = vcvt.s32.f32 %v2238
        %v2241 = vcvt.s32.f32 %v2239
        %2242 = vmin.xlane.f32.xlu0 %v2241
        %v2243 = vpop.xlane.xlu0 %2242
        %vm2244 = vcmp.eq.f32.partialorder %v2241, %v2243
        %v2245 = vsel %vm2244, %v2240, inf
        %2246 = vmin.xlane.f32.xlu0 %v2245
        %v2247 = vpop.xlane.xlu0 %2246
        %v2248 = vcvt.f32.s32 %v2247
        %v2249 = vcvt.f32.s32 %v2243
        %v2250 = vshll.u32 %v2249, 16
        %v2251 = vadd.s32 %v2250, %v2248
        %vm2252 = vcmp.eq.s32.totalorder %v782, %v2236
        %vm2253 = vcmp.eq.s32.totalorder %v782, %v2251
        %v2254 = vsel %vm2252, 1, 0
        %v2255 = vsel %vm2253, 1, 0
        %v2256 = vcvt.s32.f32 %v2254
        %v2257 = vcvt.s32.f32 %v2255
        %v2259 = vsel %vm921, %v2208, 0
        %v2262 = vsel %vm921, %v2209, 0
        %2264 = vmatprep.subr.mxu0 0.0
        %2265 = vmatpush1.msra.mxu0 %v2024
        %2266 = vmatprep.subr.mxu0 0.0
        %2267 = vmatpush1.msra.mxu0 %v2025
        %2268 = vmatprep.subr.mxu0 0.0
        %2269 = vmatpush1.msra.mxu0 0.0
        %2270 = vmatprep.subr.mxu0 0.0
        %2271 = vmatpush1.msra.mxu0 0.0
        %2272 = vmatprep.subr.mxu0 0.0
        %2273 = vmatpush1.msra.mxu0 0.0
        %2274 = vmatprep.subr.mxu0 0.0
        %2275 = vmatpush1.msra.mxu0 0.0
        %2276 = vmatprep.subr.mxu0 0.0
        %2277 = vmatpush1.msra.mxu0 0.0
        %2278 = vmatprep.subr.mxu0 0.0
        %2279 = vmatpush1.msra.mxu0 0.0
        %2280 = vmatprep.subr.mxu0 0.0
        %2281 = vmatpush1.msra.mxu0 0.0
        %2282 = vmatprep.subr.mxu0 0.0
        %2283 = vmatpush1.msra.mxu0 0.0
        %2284 = vmatprep.subr.mxu0 0.0
        %2285 = vmatpush1.msra.mxu0 0.0
        %2286 = vmatprep.subr.mxu0 0.0
        %2287 = vmatpush1.msra.mxu0 0.0
        %2288 = vmatprep.subr.mxu0 0.0
        %2289 = vmatpush1.msra.mxu0 0.0
        %2290 = vmatprep.subr.mxu0 0.0
        %2291 = vmatpush1.msra.mxu0 0.0
        %2292 = vmatprep.subr.mxu0 0.0
        %2293 = vmatpush1.msra.mxu0 0.0
        %2294 = vmatprep.subr.mxu0 0.0
        %2295 = vmatpush1.msra.mxu0 0.0
        %2296 = vmatprep.subr.mxu0 0.0
        %2297 = vmatpush1.msra.mxu0 0.0
        %2298 = vmatprep.subr.mxu0 0.0
        %2299 = vmatpush1.msra.mxu0 0.0
        %2300 = vmatprep.subr.mxu0 0.0
        %2301 = vmatpush1.msra.mxu0 0.0
        %2302 = vmatprep.subr.mxu0 0.0
        %2303 = vmatpush1.msra.mxu0 0.0
        %2304 = vmatprep.subr.mxu0 0.0
        %2305 = vmatpush1.msra.mxu0 0.0
        %2306 = vmatprep.subr.mxu0 0.0
        %2307 = vmatpush1.msra.mxu0 0.0
        %2308 = vmatprep.subr.mxu0 0.0
        %2309 = vmatpush1.msra.mxu0 0.0
        %2310 = vmatprep.subr.mxu0 0.0
        %2311 = vmatpush1.msra.mxu0 0.0
        %2312 = vmatprep.subr.mxu0 0.0
        %2313 = vmatpush1.msra.mxu0 0.0
        %2314 = vmatprep.subr.mxu0 0.0
        %2315 = vmatpush1.msra.mxu0 0.0
        %2316 = vmatprep.subr.mxu0 0.0
        %2317 = vmatpush1.msra.mxu0 0.0
        %2318 = vmatprep.subr.mxu0 0.0
        %2319 = vmatpush1.msra.mxu0 0.0
        %2320 = vmatprep.subr.mxu0 0.0
        %2321 = vmatpush1.msra.mxu0 0.0
        %2322 = vmatprep.subr.mxu0 0.0
        %2323 = vmatpush1.msra.mxu0 0.0
        %2324 = vmatprep.subr.mxu0 0.0
        %2325 = vmatpush1.msra.mxu0 0.0
        %2326 = vmatprep.subr.mxu0 0.0
        %2327 = vmatpush1.msra.mxu0 0.0
        %2328 = vmatprep.mubr.f32.mxu0 0.0
        %2329 = vmatmul.mubr.f32.gmra.mrb[0].mxu0 %v2259
        %v2330 = vpop.f32.mrb[0].mxu0
        %v2331 = vadd.f32 0.0, %v2330
        %v2332 = vpop.f32.mrb[0].mxu0
        %2333 = vmatprep.mubr.f32.mxu0 0.0
        %2334 = vmatmul.mubr.f32.gmra.mrb[0].mxu0 %v2262
        %v2335 = vpop.f32.mrb[0].mxu0
        %v2336 = vadd.f32 0.0, %v2335
        %v2337 = vpop.f32.mrb[0].mxu0
        %2338 = vdwg.mxu0
        %v2340 = vsel %vm921, %v2256, 0
        %v2343 = vsel %vm921, %v2257, 0
        %2345 = vmatprep.subr.mxu0 0.0
        %2346 = vmatpush1.msra.mxu0 %v2024
        %2347 = vmatprep.subr.mxu0 0.0
        %2348 = vmatpush1.msra.mxu0 %v2025
        %2349 = vmatprep.subr.mxu0 0.0
        %2350 = vmatpush1.msra.mxu0 0.0
        %2351 = vmatprep.subr.mxu0 0.0
        %2352 = vmatpush1.msra.mxu0 0.0
        %2353 = vmatprep.subr.mxu0 0.0
        %2354 = vmatpush1.msra.mxu0 0.0
        %2355 = vmatprep.subr.mxu0 0.0
        %2356 = vmatpush1.msra.mxu0 0.0
        %2357 = vmatprep.subr.mxu0 0.0
        %2358 = vmatpush1.msra.mxu0 0.0
        %2359 = vmatprep.subr.mxu0 0.0
        %2360 = vmatpush1.msra.mxu0 0.0
        %2361 = vmatprep.subr.mxu0 0.0
        %2362 = vmatpush1.msra.mxu0 0.0
        %2363 = vmatprep.subr.mxu0 0.0
        %2364 = vmatpush1.msra.mxu0 0.0
        %2365 = vmatprep.subr.mxu0 0.0
        %2366 = vmatpush1.msra.mxu0 0.0
        %2367 = vmatprep.subr.mxu0 0.0
        %2368 = vmatpush1.msra.mxu0 0.0
        %2369 = vmatprep.subr.mxu0 0.0
        %2370 = vmatpush1.msra.mxu0 0.0
        %2371 = vmatprep.subr.mxu0 0.0
        %2372 = vmatpush1.msra.mxu0 0.0
        %2373 = vmatprep.subr.mxu0 0.0
        %2374 = vmatpush1.msra.mxu0 0.0
        %2375 = vmatprep.subr.mxu0 0.0
        %2376 = vmatpush1.msra.mxu0 0.0
        %2377 = vmatprep.subr.mxu0 0.0
        %2378 = vmatpush1.msra.mxu0 0.0
        %2379 = vmatprep.subr.mxu0 0.0
        %2380 = vmatpush1.msra.mxu0 0.0
        %2381 = vmatprep.subr.mxu0 0.0
        %2382 = vmatpush1.msra.mxu0 0.0
        %2383 = vmatprep.subr.mxu0 0.0
        %2384 = vmatpush1.msra.mxu0 0.0
        %2385 = vmatprep.subr.mxu0 0.0
        %2386 = vmatpush1.msra.mxu0 0.0
        %2387 = vmatprep.subr.mxu0 0.0
        %2388 = vmatpush1.msra.mxu0 0.0
        %2389 = vmatprep.subr.mxu0 0.0
        %2390 = vmatpush1.msra.mxu0 0.0
        %2391 = vmatprep.subr.mxu0 0.0
        %2392 = vmatpush1.msra.mxu0 0.0
        %2393 = vmatprep.subr.mxu0 0.0
        %2394 = vmatpush1.msra.mxu0 0.0
        %2395 = vmatprep.subr.mxu0 0.0
        %2396 = vmatpush1.msra.mxu0 0.0
        %2397 = vmatprep.subr.mxu0 0.0
        %2398 = vmatpush1.msra.mxu0 0.0
        %2399 = vmatprep.subr.mxu0 0.0
        %2400 = vmatpush1.msra.mxu0 0.0
        %2401 = vmatprep.subr.mxu0 0.0
        %2402 = vmatpush1.msra.mxu0 0.0
        %2403 = vmatprep.subr.mxu0 0.0
        %2404 = vmatpush1.msra.mxu0 0.0
        %2405 = vmatprep.subr.mxu0 0.0
        %2406 = vmatpush1.msra.mxu0 0.0
        %2407 = vmatprep.subr.mxu0 0.0
        %2408 = vmatpush1.msra.mxu0 0.0
        %2409 = vmatprep.mubr.f32.mxu0 0.0
        %2410 = vmatmul.mubr.f32.gmra.mrb[0].mxu0 %v2340
        %v2411 = vpop.f32.mrb[0].mxu0
        %v2412 = vadd.f32 0.0, %v2411
        %v2413 = vpop.f32.mrb[0].mxu0
        %2414 = vmatprep.mubr.f32.mxu0 0.0
        %2415 = vmatmul.mubr.f32.gmra.mrb[0].mxu0 %v2343
        %v2416 = vpop.f32.mrb[0].mxu0
        %v2417 = vadd.f32 0.0, %v2416
        %v2418 = vpop.f32.mrb[0].mxu0
        %2419 = vdwg.mxu0
        %v2420 = vpack.c.bf16 %v2025, %v2024
        %v2422 = vlaneseq
        %v2423 = vshrl.u32 %v2422, 7
        %v2424 = vsub.s32 0, %v2423
        %v2425 = vrot.slane %v2034, %v2424
        %v2431 = vunpack.c.l.b16 %v2026
        %v2432 = vunpack.c.l.b16 %v2027
        %v2433 = vunpack.c.l.b16 %v2028
        %v2434 = vunpack.c.l.b16 %v2029
        %v2435 = vpack.c.b16 %v2432, %v2431
        %v2436 = vpack.c.b16 %v2434, %v2433
        %v2440 = vsel %vm1306, %v2420, 0
        %2442 = vmatprep.subr.bf16.mxu0 0
        %2443 = vmatpush1.bf16.msra.mxu0 %v2435
        %2444 = vmatprep.subr.bf16.mxu0 0
        %2445 = vmatpush1.bf16.msra.mxu0 %v2436
        %2446 = vmatprep.subr.bf16.mxu0 0
        %2447 = vmatpush1.bf16.msra.mxu0 0
        %2448 = vmatprep.subr.bf16.mxu0 0
        %2449 = vmatpush1.bf16.msra.mxu0 0
        %2450 = vmatprep.subr.bf16.mxu0 0
        %2451 = vmatpush1.bf16.msra.mxu0 0
        %2452 = vmatprep.subr.bf16.mxu0 0
        %2453 = vmatpush1.bf16.msra.mxu0 0
        %2454 = vmatprep.subr.bf16.mxu0 0
        %2455 = vmatpush1.bf16.msra.mxu0 0
        %2456 = vmatprep.subr.bf16.mxu0 0
        %2457 = vmatpush1.bf16.msra.mxu0 0
        %2458 = vmatprep.subr.bf16.mxu0 0
        %2459 = vmatpush1.bf16.msra.mxu0 0
        %2460 = vmatprep.subr.bf16.mxu0 0
        %2461 = vmatpush1.bf16.msra.mxu0 0
        %2462 = vmatprep.subr.bf16.mxu0 0
        %2463 = vmatpush1.bf16.msra.mxu0 0
        %2464 = vmatprep.subr.bf16.mxu0 0
        %2465 = vmatpush1.bf16.msra.mxu0 0
        %2466 = vmatprep.subr.bf16.mxu0 0
        %2467 = vmatpush1.bf16.msra.mxu0 0
        %2468 = vmatprep.subr.bf16.mxu0 0
        %2469 = vmatpush1.bf16.msra.mxu0 0
        %2470 = vmatprep.subr.bf16.mxu0 0
        %2471 = vmatpush1.bf16.msra.mxu0 0
        %2472 = vmatprep.subr.bf16.mxu0 0
        %2473 = vmatpush1.bf16.msra.mxu0 0
        %2474 = vmatprep.mubr.bf16.mxu0 0
        %2475 = vmatmul.mubr.bf16.gmra.mrb[0].mxu0 %v2440
        %v2476 = vpop.f32.mrb[0].mxu0
        %v2477 = vadd.f32 %v2425, %v2476
        %v2478 = vpop.f32.mrb[0].mxu0
        %v2479 = vpop.f32.mrb[0].mxu0
        %v2480 = vadd.f32 %v2425, %v2479
        %v2481 = vpop.f32.mrb[0].mxu0
        %2482 = vdwg.mxu0
        %v2483 = vsub.f32 %v2331, %v2024
        %v2484 = vsub.f32 %v2336, %v2025
        %v2485 = vpack.c.bf16 %v2484, %v2483
        %v2490 = vunpack.c.l.b16 %v2030
        %v2491 = vunpack.c.l.b16 %v2031
        %v2492 = vunpack.c.l.b16 %v2032
        %v2493 = vunpack.c.l.b16 %v2033
        %v2494 = vpack.c.b16 %v2491, %v2490
        %v2495 = vpack.c.b16 %v2493, %v2492
        %v2499 = vsel %vm1306, %v2485, 0
        %2501 = vmatprep.subr.bf16.mxu0 0
        %2502 = vmatpush1.bf16.msra.mxu0 %v2494
        %2503 = vmatprep.subr.bf16.mxu0 0
        %2504 = vmatpush1.bf16.msra.mxu0 %v2495
        %2505 = vmatprep.subr.bf16.mxu0 0
        %2506 = vmatpush1.bf16.msra.mxu0 0
        %2507 = vmatprep.subr.bf16.mxu0 0
        %2508 = vmatpush1.bf16.msra.mxu0 0
        %2509 = vmatprep.subr.bf16.mxu0 0
        %2510 = vmatpush1.bf16.msra.mxu0 0
        %2511 = vmatprep.subr.bf16.mxu0 0
        %2512 = vmatpush1.bf16.msra.mxu0 0
        %2513 = vmatprep.subr.bf16.mxu0 0
        %2514 = vmatpush1.bf16.msra.mxu0 0
        %2515 = vmatprep.subr.bf16.mxu0 0
        %2516 = vmatpush1.bf16.msra.mxu0 0
        %2517 = vmatprep.subr.bf16.mxu0 0
        %2518 = vmatpush1.bf16.msra.mxu0 0
        %2519 = vmatprep.subr.bf16.mxu0 0
        %2520 = vmatpush1.bf16.msra.mxu0 0
        %2521 = vmatprep.subr.bf16.mxu0 0
        %2522 = vmatpush1.bf16.msra.mxu0 0
        %2523 = vmatprep.subr.bf16.mxu0 0
        %2524 = vmatpush1.bf16.msra.mxu0 0
        %2525 = vmatprep.subr.bf16.mxu0 0
        %2526 = vmatpush1.bf16.msra.mxu0 0
        %2527 = vmatprep.subr.bf16.mxu0 0
        %2528 = vmatpush1.bf16.msra.mxu0 0
        %2529 = vmatprep.subr.bf16.mxu0 0
        %2530 = vmatpush1.bf16.msra.mxu0 0
        %2531 = vmatprep.subr.bf16.mxu0 0
        %2532 = vmatpush1.bf16.msra.mxu0 0
        %2533 = vmatprep.mubr.bf16.mxu0 0
        %2534 = vmatmul.mubr.bf16.gmra.mrb[0].mxu0 %v2499
        %v2535 = vpop.f32.mrb[0].mxu0
        %v2536 = vadd.f32 0.0, %v2535
        %v2537 = vpop.f32.mrb[0].mxu0
        %v2538 = vpop.f32.mrb[0].mxu0
        %v2539 = vadd.f32 0.0, %v2538
        %v2540 = vpop.f32.mrb[0].mxu0
        %2541 = vdwg.mxu0
        %v2542 = vadd.f32 %v2477, %v2536
        %v2543 = vadd.f32 %v2480, %v2539
        %v2544 = vmax.f32 %v2542, 0.0
        %v2545 = vmax.f32 %v2543, 0.0
        %v2546 = vsub.f32 %v2412, %v2024
        %v2547 = vsub.f32 %v2417, %v2025
        %v2548 = vpack.c.bf16 %v2547, %v2546
        %v2550 = vsel %vm1306, %v2548, 0
        %2552 = vmatprep.subr.bf16.mxu0 0
        %2553 = vmatpush1.bf16.msra.mxu0 %v2494
        %2554 = vmatprep.subr.bf16.mxu0 0
        %2555 = vmatpush1.bf16.msra.mxu0 %v2495
        %2556 = vmatprep.subr.bf16.mxu0 0
        %2557 = vmatpush1.bf16.msra.mxu0 0
        %2558 = vmatprep.subr.bf16.mxu0 0
        %2559 = vmatpush1.bf16.msra.mxu0 0
        %2560 = vmatprep.subr.bf16.mxu0 0
        %2561 = vmatpush1.bf16.msra.mxu0 0
        %2562 = vmatprep.subr.bf16.mxu0 0
        %2563 = vmatpush1.bf16.msra.mxu0 0
        %2564 = vmatprep.subr.bf16.mxu0 0
        %2565 = vmatpush1.bf16.msra.mxu0 0
        %2566 = vmatprep.subr.bf16.mxu0 0
        %2567 = vmatpush1.bf16.msra.mxu0 0
        %2568 = vmatprep.subr.bf16.mxu0 0
        %2569 = vmatpush1.bf16.msra.mxu0 0
        %2570 = vmatprep.subr.bf16.mxu0 0
        %2571 = vmatpush1.bf16.msra.mxu0 0
        %2572 = vmatprep.subr.bf16.mxu0 0
        %2573 = vmatpush1.bf16.msra.mxu0 0
        %2574 = vmatprep.subr.bf16.mxu0 0
        %2575 = vmatpush1.bf16.msra.mxu0 0
        %2576 = vmatprep.subr.bf16.mxu0 0
        %2577 = vmatpush1.bf16.msra.mxu0 0
        %2578 = vmatprep.subr.bf16.mxu0 0
        %2579 = vmatpush1.bf16.msra.mxu0 0
        %2580 = vmatprep.subr.bf16.mxu0 0
        %2581 = vmatpush1.bf16.msra.mxu0 0
        %2582 = vmatprep.subr.bf16.mxu0 0
        %2583 = vmatpush1.bf16.msra.mxu0 0
        %2584 = vmatprep.mubr.bf16.mxu0 0
        %2585 = vmatmul.mubr.bf16.gmra.mrb[0].mxu0 %v2550
        %v2586 = vpop.f32.mrb[0].mxu0
        %v2587 = vadd.f32 0.0, %v2586
        %v2588 = vpop.f32.mrb[0].mxu0
        %v2589 = vpop.f32.mrb[0].mxu0
        %v2590 = vadd.f32 0.0, %v2589
        %v2591 = vpop.f32.mrb[0].mxu0
        %2592 = vdwg.mxu0
        %v2593 = vadd.f32 %v2477, %v2587
        %v2594 = vadd.f32 %v2480, %v2590
        %v2595 = vmax.f32 %v2593, 0.0
        %v2596 = vmax.f32 %v2594, 0.0
        %v2597 = vmax.f32 %v2544, %v2595
        %v2598 = vmax.f32 %v2545, %v2596
        %2599 = vrot.lane.b32.xlu0 %v2024, 32
        %v2600 = vpop.permute.xlu0 %2599
        %2601 = vrot.lane.b32.xlu0 %v2025, 32
        %v2602 = vpop.permute.xlu0 %2601
        %2607 = vrot.lane.b32.xlu0 %v2597, 64
        %v2608 = vpop.permute.xlu0 %2607
        %2609 = vrot.lane.b32.xlu0 %v2598, 64
        %v2610 = vpop.permute.xlu0 %2609
        %v2613 = vsel %vm1306, %v1451, %v2600
        %v2614 = vsel %vm1306, %v1452, %v2602
        %vm2615 = vcmask 523264
        %v2616 = vsel %vm2615, %v2613, %v2608
        %v2617 = vsel %vm2615, %v2614, %v2610
        %vm2618 = vcmask 785408
        %v2619 = vsel %vm2618, %v2616, 0.0
        %v2620 = vsel %vm2618, %v2617, 0.0
        %v2621 = vadd.f32 %v2619, %v2620
        %v2622 = vrot.slane %v2621, 4
        %v2623 = vadd.f32 %v2621, %v2622
        %v2624 = vrot.slane %v2623, 2
        %v2625 = vadd.f32 %v2623, %v2624
        %v2626 = vrot.slane %v2625, 1
        %v2627 = vadd.f32 %v2625, %v2626
        %v2628 = vmul.f32 %v2627, 0.0625
        %v2629 = vsel %vm2618, %v2616, -inf
        %v2630 = vsel %vm2618, %v2617, -inf
        %v2631 = vmax.f32 %v2629, %v2630
        %v2632 = vrot.slane %v2631, 4
        %v2633 = vmax.f32 %v2631, %v2632
        %v2634 = vrot.slane %v2633, 2
        %v2635 = vmax.f32 %v2633, %v2634
        %v2636 = vrot.slane %v2635, 1
        %v2637 = vmax.f32 %v2635, %v2636
        %2639 = vrot.lane.b32.xlu0 %v2637, 96
        %v2640 = vpop.permute.xlu0 %2639
        %v2642 = vsel %vm2618, %v2628, %v2640
        %v2643 = vld [vmem:[#allocation20] sm:$0x3]
        %v2645 = vlaneseq
        %v2646 = vshrl.u32 %v2645, 7
        %v2647 = vsub.s32 0, %v2646
        %v2648 = vrot.slane %v2643, %v2647
        %v2649 = vlaneseq
        %v2650 = vshrl.u32 %v2649, 7
        %v2651 = vsub.s32 1, %v2650
        %v2652 = vrot.slane %v2643, %v2651
        %v2655 = vmul.f32 %v2642, %v2648
        %v2656 = vmul.f32 %v2640, %v2652
        %v2657 = vld [vmem:[#allocation22] sm:$0x3]
        %v2659 = vlaneseq
        %v2660 = vshrl.u32 %v2659, 7
        %v2661 = vsub.s32 0, %v2660
        %v2662 = vrot.slane %v2657, %v2661
        %v2663 = vlaneseq
        %v2664 = vshrl.u32 %v2663, 7
        %v2665 = vsub.s32 1, %v2664
        %v2666 = vrot.slane %v2657, %v2665
        %v2669 = vadd.f32 %v2655, %v2662
        %v2670 = vadd.f32 %v2656, %v2666
        %v2671 = vpack.c.bf16 %v2669, %v2669
        %v2672 = vpack.c.bf16 %v2670, %v2670
        %v2673 = vld [vmem:[#allocation23] sm:$0xff]
        %v2674 = vld [vmem:[#allocation23 + $0x8] sm:$0xff]
        %v2675 = vld [vmem:[#allocation23 + $0x10] sm:$0xff]
        %v2676 = vld [vmem:[#allocation23 + $0x18] sm:$0xff]
        %v2677 = vld [vmem:[#allocation23 + $0x20] sm:$0xff]
        %v2678 = vld [vmem:[#allocation23 + $0x28] sm:$0xff]
        %v2679 = vld [vmem:[#allocation23 + $0x30] sm:$0xff]
        %v2680 = vld [vmem:[#allocation23 + $0x38] sm:$0xff]
        %v2681 = vld [vmem:[#allocation23 + $0x40] sm:$0xff]
        %v2682 = vld [vmem:[#allocation23 + $0x48] sm:$0xff]
        %v2683 = vld [vmem:[#allocation23 + $0x50] sm:$0xff]
        %v2684 = vld [vmem:[#allocation23 + $0x58] sm:$0xff]
        %v2685 = vld [vmem:[#allocation23 + $0x60] sm:$0xff]
        %v2686 = vld [vmem:[#allocation23 + $0x68] sm:$0xff]
        %v2687 = vld [vmem:[#allocation23 + $0x70] sm:$0xff]
        %v2688 = vld [vmem:[#allocation23 + $0x78] sm:$0xff]
        %v2689 = vld [vmem:[#allocation23 + $0x80] sm:$0xff]
        %v2690 = vld [vmem:[#allocation23 + $0x88] sm:$0xff]
        %v2691 = vld [vmem:[#allocation23 + $0x90] sm:$0xff]
        %v2692 = vld [vmem:[#allocation23 + $0x98] sm:$0xff]
        %v2693 = vld [vmem:[#allocation23 + $0xa0] sm:$0xff]
        %v2694 = vld [vmem:[#allocation23 + $0xa8] sm:$0xff]
        %v2695 = vld [vmem:[#allocation23 + $0xb0] sm:$0xff]
        %v2696 = vld [vmem:[#allocation23 + $0xb8] sm:$0xff]
        %v2697 = vld [vmem:[#allocation25] sm:$0x3]
        %v2722 = vunpack.c.l.b16 %v2673
        %v2723 = vunpack.c.h.b16 %v2673
        %v2724 = vunpack.c.l.b16 %v2674
        %v2725 = vunpack.c.h.b16 %v2674
        %v2726 = vunpack.c.l.b16 %v2675
        %v2727 = vunpack.c.h.b16 %v2675
        %v2728 = vunpack.c.l.b16 %v2676
        %v2729 = vunpack.c.h.b16 %v2676
        %v2730 = vunpack.c.l.b16 %v2677
        %v2731 = vunpack.c.h.b16 %v2677
        %v2732 = vunpack.c.l.b16 %v2678
        %v2733 = vunpack.c.h.b16 %v2678
        %v2734 = vunpack.c.l.b16 %v2679
        %v2735 = vunpack.c.h.b16 %v2679
        %v2736 = vunpack.c.l.b16 %v2680
        %v2737 = vunpack.c.h.b16 %v2680
        %v2738 = vunpack.c.l.b16 %v2681
        %v2739 = vunpack.c.h.b16 %v2681
        %v2740 = vunpack.c.l.b16 %v2682
        %v2741 = vunpack.c.h.b16 %v2682
        %v2742 = vunpack.c.l.b16 %v2683
        %v2743 = vunpack.c.h.b16 %v2683
        %v2744 = vunpack.c.l.b16 %v2684
        %v2745 = vunpack.c.h.b16 %v2684
        %v2746 = vunpack.c.l.b16 %v2685
        %v2747 = vunpack.c.h.b16 %v2685
        %v2748 = vunpack.c.l.b16 %v2686
        %v2749 = vunpack.c.h.b16 %v2686
        %v2750 = vunpack.c.l.b16 %v2687
        %v2751 = vunpack.c.h.b16 %v2687
        %v2752 = vunpack.c.l.b16 %v2688
        %v2753 = vunpack.c.h.b16 %v2688
        %v2754 = vunpack.c.l.b16 %v2689
        %v2755 = vunpack.c.h.b16 %v2689
        %v2756 = vunpack.c.l.b16 %v2690
        %v2757 = vunpack.c.h.b16 %v2690
        %v2758 = vunpack.c.l.b16 %v2691
        %v2759 = vunpack.c.h.b16 %v2691
        %v2760 = vunpack.c.l.b16 %v2692
        %v2761 = vunpack.c.h.b16 %v2692
        %v2762 = vunpack.c.l.b16 %v2693
        %v2763 = vunpack.c.h.b16 %v2693
        %v2764 = vunpack.c.l.b16 %v2694
        %v2765 = vunpack.c.h.b16 %v2694
        %v2766 = vunpack.c.l.b16 %v2695
        %v2767 = vunpack.c.h.b16 %v2695
        %v2768 = vunpack.c.l.b16 %v2696
        %v2769 = vunpack.c.h.b16 %v2696
        %v2770 = vpack.c.b16 %v2724, %v2722
        %v2771 = vpack.c.b16 %v2725, %v2723
        %v2772 = vpack.c.b16 %v2728, %v2726
        %v2773 = vpack.c.b16 %v2729, %v2727
        %v2774 = vpack.c.b16 %v2732, %v2730
        %v2775 = vpack.c.b16 %v2733, %v2731
        %v2776 = vpack.c.b16 %v2736, %v2734
        %v2777 = vpack.c.b16 %v2737, %v2735
        %v2778 = vpack.c.b16 %v2740, %v2738
        %v2779 = vpack.c.b16 %v2741, %v2739
        %v2780 = vpack.c.b16 %v2744, %v2742
        %v2781 = vpack.c.b16 %v2745, %v2743
        %v2782 = vpack.c.b16 %v2748, %v2746
        %v2783 = vpack.c.b16 %v2749, %v2747
        %v2784 = vpack.c.b16 %v2752, %v2750
        %v2785 = vpack.c.b16 %v2753, %v2751
        %v2786 = vpack.c.b16 %v2756, %v2754
        %v2787 = vpack.c.b16 %v2757, %v2755
        %v2788 = vpack.c.b16 %v2760, %v2758
        %v2789 = vpack.c.b16 %v2761, %v2759
        %v2790 = vpack.c.b16 %v2764, %v2762
        %v2791 = vpack.c.b16 %v2765, %v2763
        %v2792 = vpack.c.b16 %v2768, %v2766
        %v2793 = vpack.c.b16 %v2769, %v2767
        %v2819 = vlaneseq
        %v2820 = vshrl.u32 %v2819, 7
        %v2821 = vsub.s32 0, %v2820
        %v2822 = vrot.slane %v2697, %v2821
        %v2823 = vlaneseq
        %v2824 = vshrl.u32 %v2823, 7
        %v2825 = vsub.s32 1, %v2824
        %v2826 = vrot.slane %v2697, %v2825
        %v2830 = vsel %vm2615, %v2672, 0
        %2832 = vmatprep.subr.bf16.mxu0 %v2771
        %2833 = vmatpush1.bf16.msra.mxu0 %v2770
        %2834 = vmatprep.subr.bf16.mxu0 %v2773
        %2835 = vmatpush1.bf16.msra.mxu0 %v2772
        %2836 = vmatprep.subr.bf16.mxu0 %v2775
        %2837 = vmatpush1.bf16.msra.mxu0 %v2774
        %2838 = vmatprep.subr.bf16.mxu0 %v2777
        %2839 = vmatpush1.bf16.msra.mxu0 %v2776
        %2840 = vmatprep.subr.bf16.mxu0 %v2779
        %2841 = vmatpush1.bf16.msra.mxu0 %v2778
        %2842 = vmatprep.subr.bf16.mxu0 %v2781
        %2843 = vmatpush1.bf16.msra.mxu0 %v2780
        %2844 = vmatprep.subr.bf16.mxu0 %v2783
        %2845 = vmatpush1.bf16.msra.mxu0 %v2782
        %2846 = vmatprep.subr.bf16.mxu0 %v2785
        %2847 = vmatpush1.bf16.msra.mxu0 %v2784
        %2848 = vmatprep.subr.bf16.mxu0 %v2787
        %2849 = vmatpush1.bf16.msra.mxu0 %v2786
        %2850 = vmatprep.subr.bf16.mxu0 %v2789
        %2851 = vmatpush1.bf16.msra.mxu0 %v2788
        %2852 = vmatprep.subr.bf16.mxu0 %v2791
        %2853 = vmatpush1.bf16.msra.mxu0 %v2790
        %2854 = vmatprep.subr.bf16.mxu0 %v2793
        %2855 = vmatpush1.bf16.msra.mxu0 %v2792
        %2856 = vmatprep.subr.bf16.mxu0 0
        %2857 = vmatpush1.bf16.msra.mxu0 0
        %2858 = vmatprep.subr.bf16.mxu0 0
        %2859 = vmatpush1.bf16.msra.mxu0 0
        %2860 = vmatprep.subr.bf16.mxu0 0
        %2861 = vmatpush1.bf16.msra.mxu0 0
        %2862 = vmatprep.subr.bf16.mxu0 0
        %2863 = vmatpush1.bf16.msra.mxu0 0
        %2864 = vmatprep.mubr.bf16.mxu0 %v2830
        %2865 = vmatmul.mubr.bf16.gmra.mrb[0].mxu0 %v2671
        %v2866 = vpop.f32.mrb[0].mxu0
        %v2867 = vadd.f32 %v2822, %v2866
        %v2868 = vpop.f32.mrb[0].mxu0
        %v2869 = vadd.f32 %v2826, %v2868
        %v2870 = vpop.f32.mrb[0].mxu0
        %v2871 = vpop.f32.mrb[0].mxu0
        %2872 = vdwg.mxu0
        %vm2873 = vcmp.gt.f32.partialorder %v2867, 0.0
        %vm2874 = vcmp.gt.f32.partialorder %v2869, 0.0
        %v2875 = vmul.f32 %v2867, 0.01
        %v2876 = vmul.f32 %v2869, 0.01
        %v2877 = vsel %vm2873, %v2867, %v2875
        %v2878 = vsel %vm2874, %v2869, %v2876
        %v2879 = vpack.c.bf16 %v2877, %v2877
        %v2880 = vpack.c.bf16 %v2878, %v2878
        %s2881 = scalar_lea.vmem [#allocation23], 192
        %v2882 = vld [vmem:[%s2881] sm:$0xff]
        %v2883 = vld [vmem:[%s2881 + $0x8] sm:$0xff]
        %v2884 = vld [vmem:[%s2881 + $0x10] sm:$0xff]
        %v2885 = vld [vmem:[%s2881 + $0x18] sm:$0xff]
        %v2886 = vld [vmem:[%s2881 + $0x20] sm:$0xff]
        %v2887 = vld [vmem:[%s2881 + $0x28] sm:$0xff]
        %v2888 = vld [vmem:[%s2881 + $0x30] sm:$0xff]
        %v2889 = vld [vmem:[%s2881 + $0x38] sm:$0xff]
        %v2890 = vld [vmem:[%s2881 + $0x40] sm:$0xff]
        %v2891 = vld [vmem:[%s2881 + $0x48] sm:$0xff]
        %v2892 = vld [vmem:[%s2881 + $0x50] sm:$0xff]
        %v2893 = vld [vmem:[%s2881 + $0x58] sm:$0xff]
        %v2894 = vld [vmem:[%s2881 + $0x60] sm:$0xff]
        %v2895 = vld [vmem:[%s2881 + $0x68] sm:$0xff]
        %v2896 = vld [vmem:[%s2881 + $0x70] sm:$0xff]
        %v2897 = vld [vmem:[%s2881 + $0x78] sm:$0xff]
        %v2898 = vld [vmem:[%s2881 + $0x80] sm:$0xff]
        %v2899 = vld [vmem:[%s2881 + $0x88] sm:$0xff]
        %v2900 = vld [vmem:[%s2881 + $0x90] sm:$0xff]
        %v2901 = vld [vmem:[%s2881 + $0x98] sm:$0xff]
        %v2902 = vld [vmem:[%s2881 + $0xa0] sm:$0xff]
        %v2903 = vld [vmem:[%s2881 + $0xa8] sm:$0xff]
        %v2904 = vld [vmem:[%s2881 + $0xb0] sm:$0xff]
        %v2905 = vld [vmem:[%s2881 + $0xb8] sm:$0xff]
        %s2906 = scalar_lea.vmem [#allocation25], 2
        %v2907 = vld [vmem:[%s2906] sm:$0x3]
        %v2932 = vunpack.c.l.b16 %v2882
        %v2933 = vunpack.c.h.b16 %v2882
        %v2934 = vunpack.c.l.b16 %v2883
        %v2935 = vunpack.c.h.b16 %v2883
        %v2936 = vunpack.c.l.b16 %v2884
        %v2937 = vunpack.c.h.b16 %v2884
        %v2938 = vunpack.c.l.b16 %v2885
        %v2939 = vunpack.c.h.b16 %v2885
        %v2940 = vunpack.c.l.b16 %v2886
        %v2941 = vunpack.c.h.b16 %v2886
        %v2942 = vunpack.c.l.b16 %v2887
        %v2943 = vunpack.c.h.b16 %v2887
        %v2944 = vunpack.c.l.b16 %v2888
        %v2945 = vunpack.c.h.b16 %v2888
        %v2946 = vunpack.c.l.b16 %v2889
        %v2947 = vunpack.c.h.b16 %v2889
        %v2948 = vunpack.c.l.b16 %v2890
        %v2949 = vunpack.c.h.b16 %v2890
        %v2950 = vunpack.c.l.b16 %v2891
        %v2951 = vunpack.c.h.b16 %v2891
        %v2952 = vunpack.c.l.b16 %v2892
        %v2953 = vunpack.c.h.b16 %v2892
        %v2954 = vunpack.c.l.b16 %v2893
        %v2955 = vunpack.c.h.b16 %v2893
        %v2956 = vunpack.c.l.b16 %v2894
        %v2957 = vunpack.c.h.b16 %v2894
        %v2958 = vunpack.c.l.b16 %v2895
        %v2959 = vunpack.c.h.b16 %v2895
        %v2960 = vunpack.c.l.b16 %v2896
        %v2961 = vunpack.c.h.b16 %v2896
        %v2962 = vunpack.c.l.b16 %v2897
        %v2963 = vunpack.c.h.b16 %v2897
        %v2964 = vunpack.c.l.b16 %v2898
        %v2965 = vunpack.c.h.b16 %v2898
        %v2966 = vunpack.c.l.b16 %v2899
        %v2967 = vunpack.c.h.b16 %v2899
        %v2968 = vunpack.c.l.b16 %v2900
        %v2969 = vunpack.c.h.b16 %v2900
        %v2970 = vunpack.c.l.b16 %v2901
        %v2971 = vunpack.c.h.b16 %v2901
        %v2972 = vunpack.c.l.b16 %v2902
        %v2973 = vunpack.c.h.b16 %v2902
        %v2974 = vunpack.c.l.b16 %v2903
        %v2975 = vunpack.c.h.b16 %v2903
        %v2976 = vunpack.c.l.b16 %v2904
        %v2977 = vunpack.c.h.b16 %v2904
        %v2978 = vunpack.c.l.b16 %v2905
        %v2979 = vunpack.c.h.b16 %v2905
        %v2980 = vpack.c.b16 %v2934, %v2932
        %v2981 = vpack.c.b16 %v2935, %v2933
        %v2982 = vpack.c.b16 %v2938, %v2936
        %v2983 = vpack.c.b16 %v2939, %v2937
        %v2984 = vpack.c.b16 %v2942, %v2940
        %v2985 = vpack.c.b16 %v2943, %v2941
        %v2986 = vpack.c.b16 %v2946, %v2944
        %v2987 = vpack.c.b16 %v2947, %v2945
        %v2988 = vpack.c.b16 %v2950, %v2948
        %v2989 = vpack.c.b16 %v2951, %v2949
        %v2990 = vpack.c.b16 %v2954, %v2952
        %v2991 = vpack.c.b16 %v2955, %v2953
        %v2992 = vpack.c.b16 %v2958, %v2956
        %v2993 = vpack.c.b16 %v2959, %v2957
        %v2994 = vpack.c.b16 %v2962, %v2960
        %v2995 = vpack.c.b16 %v2963, %v2961
        %v2996 = vpack.c.b16 %v2966, %v2964
        %v2997 = vpack.c.b16 %v2967, %v2965
        %v2998 = vpack.c.b16 %v2970, %v2968
        %v2999 = vpack.c.b16 %v2971, %v2969
        %v3000 = vpack.c.b16 %v2974, %v2972
        %v3001 = vpack.c.b16 %v2975, %v2973
        %v3002 = vpack.c.b16 %v2978, %v2976
        %v3003 = vpack.c.b16 %v2979, %v2977
        %v3029 = vlaneseq
        %v3030 = vshrl.u32 %v3029, 7
        %v3031 = vsub.s32 0, %v3030
        %v3032 = vrot.slane %v2907, %v3031
        %v3033 = vlaneseq
        %v3034 = vshrl.u32 %v3033, 7
        %v3035 = vsub.s32 1, %v3034
        %v3036 = vrot.slane %v2907, %v3035
        %v3040 = vsel %vm2615, %v2880, 0
        %3042 = vmatprep.subr.bf16.mxu0 %v2981
        %3043 = vmatpush1.bf16.msra.mxu0 %v2980
        %3044 = vmatprep.subr.bf16.mxu0 %v2983
        %3045 = vmatpush1.bf16.msra.mxu0 %v2982
        %3046 = vmatprep.subr.bf16.mxu0 %v2985
        %3047 = vmatpush1.bf16.msra.mxu0 %v2984
        %3048 = vmatprep.subr.bf16.mxu0 %v2987
        %3049 = vmatpush1.bf16.msra.mxu0 %v2986
        %3050 = vmatprep.subr.bf16.mxu0 %v2989
        %3051 = vmatpush1.bf16.msra.mxu0 %v2988
        %3052 = vmatprep.subr.bf16.mxu0 %v2991
        %3053 = vmatpush1.bf16.msra.mxu0 %v2990
        %3054 = vmatprep.subr.bf16.mxu0 %v2993
        %3055 = vmatpush1.bf16.msra.mxu0 %v2992
        %3056 = vmatprep.subr.bf16.mxu0 %v2995
        %3057 = vmatpush1.bf16.msra.mxu0 %v2994
        %3058 = vmatprep.subr.bf16.mxu0 %v2997
        %3059 = vmatpush1.bf16.msra.mxu0 %v2996
        %3060 = vmatprep.subr.bf16.mxu0 %v2999
        %3061 = vmatpush1.bf16.msra.mxu0 %v2998
        %3062 = vmatprep.subr.bf16.mxu0 %v3001
        %3063 = vmatpush1.bf16.msra.mxu0 %v3000
        %3064 = vmatprep.subr.bf16.mxu0 %v3003
        %3065 = vmatpush1.bf16.msra.mxu0 %v3002
        %3066 = vmatprep.subr.bf16.mxu0 0
        %3067 = vmatpush1.bf16.msra.mxu0 0
        %3068 = vmatprep.subr.bf16.mxu0 0
        %3069 = vmatpush1.bf16.msra.mxu0 0
        %3070 = vmatprep.subr.bf16.mxu0 0
        %3071 = vmatpush1.bf16.msra.mxu0 0
        %3072 = vmatprep.subr.bf16.mxu0 0
        %3073 = vmatpush1.bf16.msra.mxu0 0
        %3074 = vmatprep.mubr.bf16.mxu0 %v3040
        %3075 = vmatmul.mubr.bf16.gmra.mrb[0].mxu0 %v2879
        %v3076 = vpop.f32.mrb[0].mxu0
        %v3077 = vadd.f32 %v3032, %v3076
        %v3078 = vpop.f32.mrb[0].mxu0
        %v3079 = vadd.f32 %v3036, %v3078
        %v3080 = vpop.f32.mrb[0].mxu0
        %v3081 = vpop.f32.mrb[0].mxu0
        %3082 = vdwg.mxu0
        %vm3083 = vcmp.gt.f32.partialorder %v3077, 0.0
        %vm3084 = vcmp.gt.f32.partialorder %v3079, 0.0
        %v3085 = vmul.f32 %v3077, 0.01
        %v3086 = vmul.f32 %v3079, 0.01
        %v3087 = vsel %vm3083, %v3077, %v3085
        %v3088 = vsel %vm3084, %v3079, %v3086
        %v3089 = vpack.c.bf16 %v3087, %v3087
        %v3090 = vpack.c.bf16 %v3088, %v3088
        %s3091 = scalar_lea.vmem [#allocation23], 384
        %v3092 = vld [vmem:[%s3091] sm:$0xff]
        %v3093 = vld [vmem:[%s3091 + $0x8] sm:$0xff]
        %v3094 = vld [vmem:[%s3091 + $0x10] sm:$0xff]
        %v3095 = vld [vmem:[%s3091 + $0x18] sm:$0xff]
        %v3096 = vld [vmem:[%s3091 + $0x20] sm:$0xff]
        %v3097 = vld [vmem:[%s3091 + $0x28] sm:$0xff]
        %v3098 = vld [vmem:[%s3091 + $0x30] sm:$0xff]
        %v3099 = vld [vmem:[%s3091 + $0x38] sm:$0xff]
        %v3100 = vld [vmem:[%s3091 + $0x40] sm:$0xff]
        %v3101 = vld [vmem:[%s3091 + $0x48] sm:$0xff]
        %v3102 = vld [vmem:[%s3091 + $0x50] sm:$0xff]
        %v3103 = vld [vmem:[%s3091 + $0x58] sm:$0xff]
        %v3104 = vld [vmem:[%s3091 + $0x60] sm:$0xff]
        %v3105 = vld [vmem:[%s3091 + $0x68] sm:$0xff]
        %v3106 = vld [vmem:[%s3091 + $0x70] sm:$0xff]
        %v3107 = vld [vmem:[%s3091 + $0x78] sm:$0xff]
        %v3108 = vld [vmem:[%s3091 + $0x80] sm:$0xff]
        %v3109 = vld [vmem:[%s3091 + $0x88] sm:$0xff]
        %v3110 = vld [vmem:[%s3091 + $0x90] sm:$0xff]
        %v3111 = vld [vmem:[%s3091 + $0x98] sm:$0xff]
        %v3112 = vld [vmem:[%s3091 + $0xa0] sm:$0xff]
        %v3113 = vld [vmem:[%s3091 + $0xa8] sm:$0xff]
        %v3114 = vld [vmem:[%s3091 + $0xb0] sm:$0xff]
        %v3115 = vld [vmem:[%s3091 + $0xb8] sm:$0xff]
        %s3116 = scalar_lea.vmem [#allocation25], 4
        %v3117 = vld [vmem:[%s3116] sm:$0x3]
        %v3142 = vunpack.c.l.b16 %v3092
        %v3143 = vunpack.c.h.b16 %v3092
        %v3144 = vunpack.c.l.b16 %v3093
        %v3145 = vunpack.c.h.b16 %v3093
        %v3146 = vunpack.c.l.b16 %v3094
        %v3147 = vunpack.c.h.b16 %v3094
        %v3148 = vunpack.c.l.b16 %v3095
        %v3149 = vunpack.c.h.b16 %v3095
        %v3150 = vunpack.c.l.b16 %v3096
        %v3151 = vunpack.c.h.b16 %v3096
        %v3152 = vunpack.c.l.b16 %v3097
        %v3153 = vunpack.c.h.b16 %v3097
        %v3154 = vunpack.c.l.b16 %v3098
        %v3155 = vunpack.c.h.b16 %v3098
        %v3156 = vunpack.c.l.b16 %v3099
        %v3157 = vunpack.c.h.b16 %v3099
        %v3158 = vunpack.c.l.b16 %v3100
        %v3159 = vunpack.c.h.b16 %v3100
        %v3160 = vunpack.c.l.b16 %v3101
        %v3161 = vunpack.c.h.b16 %v3101
        %v3162 = vunpack.c.l.b16 %v3102
        %v3163 = vunpack.c.h.b16 %v3102
        %v3164 = vunpack.c.l.b16 %v3103
        %v3165 = vunpack.c.h.b16 %v3103
        %v3166 = vunpack.c.l.b16 %v3104
        %v3167 = vunpack.c.h.b16 %v3104
        %v3168 = vunpack.c.l.b16 %v3105
        %v3169 = vunpack.c.h.b16 %v3105
        %v3170 = vunpack.c.l.b16 %v3106
        %v3171 = vunpack.c.h.b16 %v3106
        %v3172 = vunpack.c.l.b16 %v3107
        %v3173 = vunpack.c.h.b16 %v3107
        %v3174 = vunpack.c.l.b16 %v3108
        %v3175 = vunpack.c.h.b16 %v3108
        %v3176 = vunpack.c.l.b16 %v3109
        %v3177 = vunpack.c.h.b16 %v3109
        %v3178 = vunpack.c.l.b16 %v3110
        %v3179 = vunpack.c.h.b16 %v3110
        %v3180 = vunpack.c.l.b16 %v3111
        %v3181 = vunpack.c.h.b16 %v3111
        %v3182 = vunpack.c.l.b16 %v3112
        %v3183 = vunpack.c.h.b16 %v3112
        %v3184 = vunpack.c.l.b16 %v3113
        %v3185 = vunpack.c.h.b16 %v3113
        %v3186 = vunpack.c.l.b16 %v3114
        %v3187 = vunpack.c.h.b16 %v3114
        %v3188 = vunpack.c.l.b16 %v3115
        %v3189 = vunpack.c.h.b16 %v3115
        %v3190 = vpack.c.b16 %v3144, %v3142
        %v3191 = vpack.c.b16 %v3145, %v3143
        %v3192 = vpack.c.b16 %v3148, %v3146
        %v3193 = vpack.c.b16 %v3149, %v3147
        %v3194 = vpack.c.b16 %v3152, %v3150
        %v3195 = vpack.c.b16 %v3153, %v3151
        %v3196 = vpack.c.b16 %v3156, %v3154
        %v3197 = vpack.c.b16 %v3157, %v3155
        %v3198 = vpack.c.b16 %v3160, %v3158
        %v3199 = vpack.c.b16 %v3161, %v3159
        %v3200 = vpack.c.b16 %v3164, %v3162
        %v3201 = vpack.c.b16 %v3165, %v3163
        %v3202 = vpack.c.b16 %v3168, %v3166
        %v3203 = vpack.c.b16 %v3169, %v3167
        %v3204 = vpack.c.b16 %v3172, %v3170
        %v3205 = vpack.c.b16 %v3173, %v3171
        %v3206 = vpack.c.b16 %v3176, %v3174
        %v3207 = vpack.c.b16 %v3177, %v3175
        %v3208 = vpack.c.b16 %v3180, %v3178
        %v3209 = vpack.c.b16 %v3181, %v3179
        %v3210 = vpack.c.b16 %v3184, %v3182
        %v3211 = vpack.c.b16 %v3185, %v3183
        %v3212 = vpack.c.b16 %v3188, %v3186
        %v3213 = vpack.c.b16 %v3189, %v3187
        %v3239 = vlaneseq
        %v3240 = vshrl.u32 %v3239, 7
        %v3241 = vsub.s32 0, %v3240
        %v3242 = vrot.slane %v3117, %v3241
        %v3243 = vlaneseq
        %v3244 = vshrl.u32 %v3243, 7
        %v3245 = vsub.s32 1, %v3244
        %v3246 = vrot.slane %v3117, %v3245
        %v3250 = vsel %vm2615, %v3090, 0
        %3252 = vmatprep.subr.bf16.mxu0 %v3191
        %3253 = vmatpush1.bf16.msra.mxu0 %v3190
        %3254 = vmatprep.subr.bf16.mxu0 %v3193
        %3255 = vmatpush1.bf16.msra.mxu0 %v3192
        %3256 = vmatprep.subr.bf16.mxu0 %v3195
        %3257 = vmatpush1.bf16.msra.mxu0 %v3194
        %3258 = vmatprep.subr.bf16.mxu0 %v3197
        %3259 = vmatpush1.bf16.msra.mxu0 %v3196
        %3260 = vmatprep.subr.bf16.mxu0 %v3199
        %3261 = vmatpush1.bf16.msra.mxu0 %v3198
        %3262 = vmatprep.subr.bf16.mxu0 %v3201
        %3263 = vmatpush1.bf16.msra.mxu0 %v3200
        %3264 = vmatprep.subr.bf16.mxu0 %v3203
        %3265 = vmatpush1.bf16.msra.mxu0 %v3202
        %3266 = vmatprep.subr.bf16.mxu0 %v3205
        %3267 = vmatpush1.bf16.msra.mxu0 %v3204
        %3268 = vmatprep.subr.bf16.mxu0 %v3207
        %3269 = vmatpush1.bf16.msra.mxu0 %v3206
        %3270 = vmatprep.subr.bf16.mxu0 %v3209
        %3271 = vmatpush1.bf16.msra.mxu0 %v3208
        %3272 = vmatprep.subr.bf16.mxu0 %v3211
        %3273 = vmatpush1.bf16.msra.mxu0 %v3210
        %3274 = vmatprep.subr.bf16.mxu0 %v3213
        %3275 = vmatpush1.bf16.msra.mxu0 %v3212
        %3276 = vmatprep.subr.bf16.mxu0 0
        %3277 = vmatpush1.bf16.msra.mxu0 0
        %3278 = vmatprep.subr.bf16.mxu0 0
        %3279 = vmatpush1.bf16.msra.mxu0 0
        %3280 = vmatprep.subr.bf16.mxu0 0
        %3281 = vmatpush1.bf16.msra.mxu0 0
        %3282 = vmatprep.subr.bf16.mxu0 0
        %3283 = vmatpush1.bf16.msra.mxu0 0
        %3284 = vmatprep.mubr.bf16.mxu0 %v3250
        %3285 = vmatmul.mubr.bf16.gmra.mrb[0].mxu0 %v3089
        %v3286 = vpop.f32.mrb[0].mxu0
        %v3287 = vadd.f32 %v3242, %v3286
        %v3288 = vpop.f32.mrb[0].mxu0
        %v3289 = vadd.f32 %v3246, %v3288
        %v3290 = vpop.f32.mrb[0].mxu0
        %v3291 = vpop.f32.mrb[0].mxu0
        %3292 = vdwg.mxu0
        %vm3293 = vcmp.gt.f32.partialorder %v3287, 0.0
        %vm3294 = vcmp.gt.f32.partialorder %v3289, 0.0
        %v3295 = vmul.f32 %v3287, 0.01
        %v3296 = vmul.f32 %v3289, 0.01
        %v3297 = vsel %vm3293, %v3287, %v3295
        %v3298 = vsel %vm3294, %v3289, %v3296
        %v3299 = vpack.c.bf16 %v3297, %v3297
        %v3300 = vpack.c.bf16 %v3298, %v3298
        %s3301 = scalar_lea.vmem [#allocation23], 576
        %v3302 = vld [vmem:[%s3301] sm:$0xff]
        %v3303 = vld [vmem:[%s3301 + $0x8] sm:$0xff]
        %v3304 = vld [vmem:[%s3301 + $0x10] sm:$0xff]
        %v3305 = vld [vmem:[%s3301 + $0x18] sm:$0xff]
        %v3306 = vld [vmem:[%s3301 + $0x20] sm:$0xff]
        %v3307 = vld [vmem:[%s3301 + $0x28] sm:$0xff]
        %v3308 = vld [vmem:[%s3301 + $0x30] sm:$0xff]
        %v3309 = vld [vmem:[%s3301 + $0x38] sm:$0xff]
        %v3310 = vld [vmem:[%s3301 + $0x40] sm:$0xff]
        %v3311 = vld [vmem:[%s3301 + $0x48] sm:$0xff]
        %v3312 = vld [vmem:[%s3301 + $0x50] sm:$0xff]
        %v3313 = vld [vmem:[%s3301 + $0x58] sm:$0xff]
        %v3314 = vld [vmem:[%s3301 + $0x60] sm:$0xff]
        %v3315 = vld [vmem:[%s3301 + $0x68] sm:$0xff]
        %v3316 = vld [vmem:[%s3301 + $0x70] sm:$0xff]
        %v3317 = vld [vmem:[%s3301 + $0x78] sm:$0xff]
        %v3318 = vld [vmem:[%s3301 + $0x80] sm:$0xff]
        %v3319 = vld [vmem:[%s3301 + $0x88] sm:$0xff]
        %v3320 = vld [vmem:[%s3301 + $0x90] sm:$0xff]
        %v3321 = vld [vmem:[%s3301 + $0x98] sm:$0xff]
        %v3322 = vld [vmem:[%s3301 + $0xa0] sm:$0xff]
        %v3323 = vld [vmem:[%s3301 + $0xa8] sm:$0xff]
        %v3324 = vld [vmem:[%s3301 + $0xb0] sm:$0xff]
        %v3325 = vld [vmem:[%s3301 + $0xb8] sm:$0xff]
        %s3326 = scalar_lea.vmem [#allocation25], 6
        %v3327 = vld [vmem:[%s3326] sm:$0x3]
        %v3352 = vunpack.c.l.b16 %v3302
        %v3353 = vunpack.c.h.b16 %v3302
        %v3354 = vunpack.c.l.b16 %v3303
        %v3355 = vunpack.c.h.b16 %v3303
        %v3356 = vunpack.c.l.b16 %v3304
        %v3357 = vunpack.c.h.b16 %v3304
        %v3358 = vunpack.c.l.b16 %v3305
        %v3359 = vunpack.c.h.b16 %v3305
        %v3360 = vunpack.c.l.b16 %v3306
        %v3361 = vunpack.c.h.b16 %v3306
        %v3362 = vunpack.c.l.b16 %v3307
        %v3363 = vunpack.c.h.b16 %v3307
        %v3364 = vunpack.c.l.b16 %v3308
        %v3365 = vunpack.c.h.b16 %v3308
        %v3366 = vunpack.c.l.b16 %v3309
        %v3367 = vunpack.c.h.b16 %v3309
        %v3368 = vunpack.c.l.b16 %v3310
        %v3369 = vunpack.c.h.b16 %v3310
        %v3370 = vunpack.c.l.b16 %v3311
        %v3371 = vunpack.c.h.b16 %v3311
        %v3372 = vunpack.c.l.b16 %v3312
        %v3373 = vunpack.c.h.b16 %v3312
        %v3374 = vunpack.c.l.b16 %v3313
        %v3375 = vunpack.c.h.b16 %v3313
        %v3376 = vunpack.c.l.b16 %v3314
        %v3377 = vunpack.c.h.b16 %v3314
        %v3378 = vunpack.c.l.b16 %v3315
        %v3379 = vunpack.c.h.b16 %v3315
        %v3380 = vunpack.c.l.b16 %v3316
        %v3381 = vunpack.c.h.b16 %v3316
        %v3382 = vunpack.c.l.b16 %v3317
        %v3383 = vunpack.c.h.b16 %v3317
        %v3384 = vunpack.c.l.b16 %v3318
        %v3385 = vunpack.c.h.b16 %v3318
        %v3386 = vunpack.c.l.b16 %v3319
        %v3387 = vunpack.c.h.b16 %v3319
        %v3388 = vunpack.c.l.b16 %v3320
        %v3389 = vunpack.c.h.b16 %v3320
        %v3390 = vunpack.c.l.b16 %v3321
        %v3391 = vunpack.c.h.b16 %v3321
        %v3392 = vunpack.c.l.b16 %v3322
        %v3393 = vunpack.c.h.b16 %v3322
        %v3394 = vunpack.c.l.b16 %v3323
        %v3395 = vunpack.c.h.b16 %v3323
        %v3396 = vunpack.c.l.b16 %v3324
        %v3397 = vunpack.c.h.b16 %v3324
        %v3398 = vunpack.c.l.b16 %v3325
        %v3399 = vunpack.c.h.b16 %v3325
        %v3400 = vpack.c.b16 %v3354, %v3352
        %v3401 = vpack.c.b16 %v3355, %v3353
        %v3402 = vpack.c.b16 %v3358, %v3356
        %v3403 = vpack.c.b16 %v3359, %v3357
        %v3404 = vpack.c.b16 %v3362, %v3360
        %v3405 = vpack.c.b16 %v3363, %v3361
        %v3406 = vpack.c.b16 %v3366, %v3364
        %v3407 = vpack.c.b16 %v3367, %v3365
        %v3408 = vpack.c.b16 %v3370, %v3368
        %v3409 = vpack.c.b16 %v3371, %v3369
        %v3410 = vpack.c.b16 %v3374, %v3372
        %v3411 = vpack.c.b16 %v3375, %v3373
        %v3412 = vpack.c.b16 %v3378, %v3376
        %v3413 = vpack.c.b16 %v3379, %v3377
        %v3414 = vpack.c.b16 %v3382, %v3380
        %v3415 = vpack.c.b16 %v3383, %v3381
        %v3416 = vpack.c.b16 %v3386, %v3384
        %v3417 = vpack.c.b16 %v3387, %v3385
        %v3418 = vpack.c.b16 %v3390, %v3388
        %v3419 = vpack.c.b16 %v3391, %v3389
        %v3420 = vpack.c.b16 %v3394, %v3392
        %v3421 = vpack.c.b16 %v3395, %v3393
        %v3422 = vpack.c.b16 %v3398, %v3396
        %v3423 = vpack.c.b16 %v3399, %v3397
        %v3449 = vlaneseq
        %v3450 = vshrl.u32 %v3449, 7
        %v3451 = vsub.s32 0, %v3450
        %v3452 = vrot.slane %v3327, %v3451
        %v3453 = vlaneseq
        %v3454 = vshrl.u32 %v3453, 7
        %v3455 = vsub.s32 1, %v3454
        %v3456 = vrot.slane %v3327, %v3455
        %v3460 = vsel %vm2615, %v3300, 0
        %3462 = vmatprep.subr.bf16.mxu0 %v3401
        %3463 = vmatpush1.bf16.msra.mxu0 %v3400
        %3464 = vmatprep.subr.bf16.mxu0 %v3403
        %3465 = vmatpush1.bf16.msra.mxu0 %v3402
        %3466 = vmatprep.subr.bf16.mxu0 %v3405
        %3467 = vmatpush1.bf16.msra.mxu0 %v3404
        %3468 = vmatprep.subr.bf16.mxu0 %v3407
        %3469 = vmatpush1.bf16.msra.mxu0 %v3406
        %3470 = vmatprep.subr.bf16.mxu0 %v3409
        %3471 = vmatpush1.bf16.msra.mxu0 %v3408
        %3472 = vmatprep.subr.bf16.mxu0 %v3411
        %3473 = vmatpush1.bf16.msra.mxu0 %v3410
        %3474 = vmatprep.subr.bf16.mxu0 %v3413
        %3475 = vmatpush1.bf16.msra.mxu0 %v3412
        %3476 = vmatprep.subr.bf16.mxu0 %v3415
        %3477 = vmatpush1.bf16.msra.mxu0 %v3414
        %3478 = vmatprep.subr.bf16.mxu0 %v3417
        %3479 = vmatpush1.bf16.msra.mxu0 %v3416
        %3480 = vmatprep.subr.bf16.mxu0 %v3419
        %3481 = vmatpush1.bf16.msra.mxu0 %v3418
        %3482 = vmatprep.subr.bf16.mxu0 %v3421
        %3483 = vmatpush1.bf16.msra.mxu0 %v3420
        %3484 = vmatprep.subr.bf16.mxu0 %v3423
        %3485 = vmatpush1.bf16.msra.mxu0 %v3422
        %3486 = vmatprep.subr.bf16.mxu0 0
        %3487 = vmatpush1.bf16.msra.mxu0 0
        %3488 = vmatprep.subr.bf16.mxu0 0
        %3489 = vmatpush1.bf16.msra.mxu0 0
        %3490 = vmatprep.subr.bf16.mxu0 0
        %3491 = vmatpush1.bf16.msra.mxu0 0
        %3492 = vmatprep.subr.bf16.mxu0 0
        %3493 = vmatpush1.bf16.msra.mxu0 0
        %3494 = vmatprep.mubr.bf16.mxu0 %v3460
        %3495 = vmatmul.mubr.bf16.gmra.mrb[0].mxu0 %v3299
        %v3496 = vpop.f32.mrb[0].mxu0
        %v3497 = vadd.f32 %v3452, %v3496
        %v3498 = vpop.f32.mrb[0].mxu0
        %v3499 = vadd.f32 %v3456, %v3498
        %v3500 = vpop.f32.mrb[0].mxu0
        %v3501 = vpop.f32.mrb[0].mxu0
        %3502 = vdwg.mxu0
        %vm3503 = vcmp.gt.f32.partialorder %v3497, 0.0
        %vm3504 = vcmp.gt.f32.partialorder %v3499, 0.0
        %v3505 = vmul.f32 %v3497, 0.01
        %v3506 = vmul.f32 %v3499, 0.01
        %v3507 = vsel %vm3503, %v3497, %v3505
        %v3508 = vsel %vm3504, %v3499, %v3506
        %v3509 = vpack.c.bf16 %v3507, %v3507
        %v3510 = vpack.c.bf16 %v3508, %v3508
        %s3511 = scalar_lea.vmem [#allocation23], 768
        %v3512 = vld [vmem:[%s3511] sm:$0xff]
        %v3513 = vld [vmem:[%s3511 + $0x8] sm:$0xff]
        %v3514 = vld [vmem:[%s3511 + $0x10] sm:$0xff]
        %v3515 = vld [vmem:[%s3511 + $0x18] sm:$0xff]
        %v3516 = vld [vmem:[%s3511 + $0x20] sm:$0xff]
        %v3517 = vld [vmem:[%s3511 + $0x28] sm:$0xff]
        %v3518 = vld [vmem:[%s3511 + $0x30] sm:$0xff]
        %v3519 = vld [vmem:[%s3511 + $0x38] sm:$0xff]
        %v3520 = vld [vmem:[%s3511 + $0x40] sm:$0xff]
        %v3521 = vld [vmem:[%s3511 + $0x48] sm:$0xff]
        %v3522 = vld [vmem:[%s3511 + $0x50] sm:$0xff]
        %v3523 = vld [vmem:[%s3511 + $0x58] sm:$0xff]
        %v3524 = vld [vmem:[%s3511 + $0x60] sm:$0xff]
        %v3525 = vld [vmem:[%s3511 + $0x68] sm:$0xff]
        %v3526 = vld [vmem:[%s3511 + $0x70] sm:$0xff]
        %v3527 = vld [vmem:[%s3511 + $0x78] sm:$0xff]
        %v3528 = vld [vmem:[%s3511 + $0x80] sm:$0xff]
        %v3529 = vld [vmem:[%s3511 + $0x88] sm:$0xff]
        %v3530 = vld [vmem:[%s3511 + $0x90] sm:$0xff]
        %v3531 = vld [vmem:[%s3511 + $0x98] sm:$0xff]
        %v3532 = vld [vmem:[%s3511 + $0xa0] sm:$0xff]
        %v3533 = vld [vmem:[%s3511 + $0xa8] sm:$0xff]
        %v3534 = vld [vmem:[%s3511 + $0xb0] sm:$0xff]
        %v3535 = vld [vmem:[%s3511 + $0xb8] sm:$0xff]
        %s3536 = scalar_lea.vmem [#allocation25], 8
        %v3537 = vld [vmem:[%s3536] sm:$0x3]
        %v3562 = vunpack.c.l.b16 %v3512
        %v3563 = vunpack.c.h.b16 %v3512
        %v3564 = vunpack.c.l.b16 %v3513
        %v3565 = vunpack.c.h.b16 %v3513
        %v3566 = vunpack.c.l.b16 %v3514
        %v3567 = vunpack.c.h.b16 %v3514
        %v3568 = vunpack.c.l.b16 %v3515
        %v3569 = vunpack.c.h.b16 %v3515
        %v3570 = vunpack.c.l.b16 %v3516
        %v3571 = vunpack.c.h.b16 %v3516
        %v3572 = vunpack.c.l.b16 %v3517
        %v3573 = vunpack.c.h.b16 %v3517
        %v3574 = vunpack.c.l.b16 %v3518
        %v3575 = vunpack.c.h.b16 %v3518
        %v3576 = vunpack.c.l.b16 %v3519
        %v3577 = vunpack.c.h.b16 %v3519
        %v3578 = vunpack.c.l.b16 %v3520
        %v3579 = vunpack.c.h.b16 %v3520
        %v3580 = vunpack.c.l.b16 %v3521
        %v3581 = vunpack.c.h.b16 %v3521
        %v3582 = vunpack.c.l.b16 %v3522
        %v3583 = vunpack.c.h.b16 %v3522
        %v3584 = vunpack.c.l.b16 %v3523
        %v3585 = vunpack.c.h.b16 %v3523
        %v3586 = vunpack.c.l.b16 %v3524
        %v3587 = vunpack.c.h.b16 %v3524
        %v3588 = vunpack.c.l.b16 %v3525
        %v3589 = vunpack.c.h.b16 %v3525
        %v3590 = vunpack.c.l.b16 %v3526
        %v3591 = vunpack.c.h.b16 %v3526
        %v3592 = vunpack.c.l.b16 %v3527
        %v3593 = vunpack.c.h.b16 %v3527
        %v3594 = vunpack.c.l.b16 %v3528
        %v3595 = vunpack.c.h.b16 %v3528
        %v3596 = vunpack.c.l.b16 %v3529
        %v3597 = vunpack.c.h.b16 %v3529
        %v3598 = vunpack.c.l.b16 %v3530
        %v3599 = vunpack.c.h.b16 %v3530
        %v3600 = vunpack.c.l.b16 %v3531
        %v3601 = vunpack.c.h.b16 %v3531
        %v3602 = vunpack.c.l.b16 %v3532
        %v3603 = vunpack.c.h.b16 %v3532
        %v3604 = vunpack.c.l.b16 %v3533
        %v3605 = vunpack.c.h.b16 %v3533
        %v3606 = vunpack.c.l.b16 %v3534
        %v3607 = vunpack.c.h.b16 %v3534
        %v3608 = vunpack.c.l.b16 %v3535
        %v3609 = vunpack.c.h.b16 %v3535
        %v3610 = vpack.c.b16 %v3564, %v3562
        %v3611 = vpack.c.b16 %v3565, %v3563
        %v3612 = vpack.c.b16 %v3568, %v3566
        %v3613 = vpack.c.b16 %v3569, %v3567
        %v3614 = vpack.c.b16 %v3572, %v3570
        %v3615 = vpack.c.b16 %v3573, %v3571
        %v3616 = vpack.c.b16 %v3576, %v3574
        %v3617 = vpack.c.b16 %v3577, %v3575
        %v3618 = vpack.c.b16 %v3580, %v3578
        %v3619 = vpack.c.b16 %v3581, %v3579
        %v3620 = vpack.c.b16 %v3584, %v3582
        %v3621 = vpack.c.b16 %v3585, %v3583
        %v3622 = vpack.c.b16 %v3588, %v3586
        %v3623 = vpack.c.b16 %v3589, %v3587
        %v3624 = vpack.c.b16 %v3592, %v3590
        %v3625 = vpack.c.b16 %v3593, %v3591
        %v3626 = vpack.c.b16 %v3596, %v3594
        %v3627 = vpack.c.b16 %v3597, %v3595
        %v3628 = vpack.c.b16 %v3600, %v3598
        %v3629 = vpack.c.b16 %v3601, %v3599
        %v3630 = vpack.c.b16 %v3604, %v3602
        %v3631 = vpack.c.b16 %v3605, %v3603
        %v3632 = vpack.c.b16 %v3608, %v3606
        %v3633 = vpack.c.b16 %v3609, %v3607
        %v3659 = vlaneseq
        %v3660 = vshrl.u32 %v3659, 7
        %v3661 = vsub.s32 0, %v3660
        %v3662 = vrot.slane %v3537, %v3661
        %v3663 = vlaneseq
        %v3664 = vshrl.u32 %v3663, 7
        %v3665 = vsub.s32 1, %v3664
        %v3666 = vrot.slane %v3537, %v3665
        %v3670 = vsel %vm2615, %v3510, 0
        %3672 = vmatprep.subr.bf16.mxu0 %v3611
        %3673 = vmatpush1.bf16.msra.mxu0 %v3610
        %3674 = vmatprep.subr.bf16.mxu0 %v3613
        %3675 = vmatpush1.bf16.msra.mxu0 %v3612
        %3676 = vmatprep.subr.bf16.mxu0 %v3615
        %3677 = vmatpush1.bf16.msra.mxu0 %v3614
        %3678 = vmatprep.subr.bf16.mxu0 %v3617
        %3679 = vmatpush1.bf16.msra.mxu0 %v3616
        %3680 = vmatprep.subr.bf16.mxu0 %v3619
        %3681 = vmatpush1.bf16.msra.mxu0 %v3618
        %3682 = vmatprep.subr.bf16.mxu0 %v3621
        %3683 = vmatpush1.bf16.msra.mxu0 %v3620
        %3684 = vmatprep.subr.bf16.mxu0 %v3623
        %3685 = vmatpush1.bf16.msra.mxu0 %v3622
        %3686 = vmatprep.subr.bf16.mxu0 %v3625
        %3687 = vmatpush1.bf16.msra.mxu0 %v3624
        %3688 = vmatprep.subr.bf16.mxu0 %v3627
        %3689 = vmatpush1.bf16.msra.mxu0 %v3626
        %3690 = vmatprep.subr.bf16.mxu0 %v3629
        %3691 = vmatpush1.bf16.msra.mxu0 %v3628
        %3692 = vmatprep.subr.bf16.mxu0 %v3631
        %3693 = vmatpush1.bf16.msra.mxu0 %v3630
        %3694 = vmatprep.subr.bf16.mxu0 %v3633
        %3695 = vmatpush1.bf16.msra.mxu0 %v3632
        %3696 = vmatprep.subr.bf16.mxu0 0
        %3697 = vmatpush1.bf16.msra.mxu0 0
        %3698 = vmatprep.subr.bf16.mxu0 0
        %3699 = vmatpush1.bf16.msra.mxu0 0
        %3700 = vmatprep.subr.bf16.mxu0 0
        %3701 = vmatpush1.bf16.msra.mxu0 0
        %3702 = vmatprep.subr.bf16.mxu0 0
        %3703 = vmatpush1.bf16.msra.mxu0 0
        %3704 = vmatprep.mubr.bf16.mxu0 %v3670
        %3705 = vmatmul.mubr.bf16.gmra.mrb[0].mxu0 %v3509
        %v3706 = vpop.f32.mrb[0].mxu0
        %v3707 = vadd.f32 %v3662, %v3706
        %v3708 = vpop.f32.mrb[0].mxu0
        %v3709 = vadd.f32 %v3666, %v3708
        %v3710 = vpop.f32.mrb[0].mxu0
        %v3711 = vpop.f32.mrb[0].mxu0
        %3712 = vdwg.mxu0
        %vm3713 = vcmp.gt.f32.partialorder %v3707, 0.0
        %vm3714 = vcmp.gt.f32.partialorder %v3709, 0.0
        %v3715 = vmul.f32 %v3707, 0.01
        %v3716 = vmul.f32 %v3709, 0.01
        %v3717 = vsel %vm3713, %v3707, %v3715
        %v3718 = vsel %vm3714, %v3709, %v3716
        %v3719 = vpack.c.bf16 %v3717, %v3717
        %v3720 = vpack.c.bf16 %v3718, %v3718
        %v3721 = vld [vmem:[%s16] sm:$0xf]
        %v3722 = vld [vmem:[%s16 + $0x4] sm:$0xf]
        %v3723 = vld [vmem:[%s16 + $0x8] sm:$0xf]
        %v3724 = vld [vmem:[%s16 + $0xc] sm:$0xf]
        %v3725 = vld [vmem:[%s16 + $0x10] sm:$0xf]
        %v3726 = vld [vmem:[%s16 + $0x14] sm:$0xf]
        %v3727 = vld [vmem:[%s16 + $0x18] sm:$0xf]
        %v3728 = vld [vmem:[%s16 + $0x1c] sm:$0xf]
        %v3729 = vld [vmem:[%s16 + $0x20] sm:$0xf]
        %v3730 = vld [vmem:[%s16 + $0x24] sm:$0xf]
        %v3731 = vld [vmem:[%s16 + $0x28] sm:$0xf]
        %v3732 = vld [vmem:[%s16 + $0x2c] sm:$0xf]
        %v3733 = vld [vmem:[%s16 + $0x30] sm:$0xf]
        %v3734 = vld [vmem:[%s16 + $0x34] sm:$0xf]
        %v3735 = vld [vmem:[%s16 + $0x38] sm:$0xf]
        %v3736 = vld [vmem:[%s16 + $0x3c] sm:$0xf]
        %v3737 = vld [vmem:[%s16 + $0x40] sm:$0xf]
        %v3738 = vld [vmem:[%s16 + $0x44] sm:$0xf]
        %v3739 = vld [vmem:[%s16 + $0x48] sm:$0xf]
        %v3740 = vld [vmem:[%s16 + $0x4c] sm:$0xf]
        %v3741 = vld [vmem:[%s16 + $0x50] sm:$0xf]
        %v3742 = vld [vmem:[%s16 + $0x54] sm:$0xf]
        %v3743 = vld [vmem:[%s16 + $0x58] sm:$0xf]
        %v3744 = vld [vmem:[%s16 + $0x5c] sm:$0xf]
        %v3745 = vld [vmem:[%s17] sm:$0x1]
        %v3770 = vunpack.c.l.b16 %v3721
        %v3771 = vunpack.c.l.b16 %v3722
        %v3772 = vunpack.c.l.b16 %v3723
        %v3773 = vunpack.c.l.b16 %v3724
        %v3774 = vunpack.c.l.b16 %v3725
        %v3775 = vunpack.c.l.b16 %v3726
        %v3776 = vunpack.c.l.b16 %v3727
        %v3777 = vunpack.c.l.b16 %v3728
        %v3778 = vunpack.c.l.b16 %v3729
        %v3779 = vunpack.c.l.b16 %v3730
        %v3780 = vunpack.c.l.b16 %v3731
        %v3781 = vunpack.c.l.b16 %v3732
        %v3782 = vunpack.c.l.b16 %v3733
        %v3783 = vunpack.c.l.b16 %v3734
        %v3784 = vunpack.c.l.b16 %v3735
        %v3785 = vunpack.c.l.b16 %v3736
        %v3786 = vunpack.c.l.b16 %v3737
        %v3787 = vunpack.c.l.b16 %v3738
        %v3788 = vunpack.c.l.b16 %v3739
        %v3789 = vunpack.c.l.b16 %v3740
        %v3790 = vunpack.c.l.b16 %v3741
        %v3791 = vunpack.c.l.b16 %v3742
        %v3792 = vunpack.c.l.b16 %v3743
        %v3793 = vunpack.c.l.b16 %v3744
        %v3794 = vpack.c.b16 %v3771, %v3770
        %v3795 = vpack.c.b16 %v3773, %v3772
        %v3796 = vpack.c.b16 %v3775, %v3774
        %v3797 = vpack.c.b16 %v3777, %v3776
        %v3798 = vpack.c.b16 %v3779, %v3778
        %v3799 = vpack.c.b16 %v3781, %v3780
        %v3800 = vpack.c.b16 %v3783, %v3782
        %v3801 = vpack.c.b16 %v3785, %v3784
        %v3802 = vpack.c.b16 %v3787, %v3786
        %v3803 = vpack.c.b16 %v3789, %v3788
        %v3804 = vpack.c.b16 %v3791, %v3790
        %v3805 = vpack.c.b16 %v3793, %v3792
        %v3819 = vsel %vm2615, %v3720, 0
        %3821 = vmatprep.subr.bf16.mxu0 0
        %3822 = vmatpush1.bf16.msra.mxu0 %v3794
        %3823 = vmatprep.subr.bf16.mxu0 0
        %3824 = vmatpush1.bf16.msra.mxu0 %v3795
        %3825 = vmatprep.subr.bf16.mxu0 0
        %3826 = vmatpush1.bf16.msra.mxu0 %v3796
        %3827 = vmatprep.subr.bf16.mxu0 0
        %3828 = vmatpush1.bf16.msra.mxu0 %v3797
        %3829 = vmatprep.subr.bf16.mxu0 0
        %3830 = vmatpush1.bf16.msra.mxu0 %v3798
        %3831 = vmatprep.subr.bf16.mxu0 0
        %3832 = vmatpush1.bf16.msra.mxu0 %v3799
        %3833 = vmatprep.subr.bf16.mxu0 0
        %3834 = vmatpush1.bf16.msra.mxu0 %v3800
        %3835 = vmatprep.subr.bf16.mxu0 0
        %3836 = vmatpush1.bf16.msra.mxu0 %v3801
        %3837 = vmatprep.subr.bf16.mxu0 0
        %3838 = vmatpush1.bf16.msra.mxu0 %v3802
        %3839 = vmatprep.subr.bf16.mxu0 0
        %3840 = vmatpush1.bf16.msra.mxu0 %v3803
        %3841 = vmatprep.subr.bf16.mxu0 0
        %3842 = vmatpush1.bf16.msra.mxu0 %v3804
        %3843 = vmatprep.subr.bf16.mxu0 0
        %3844 = vmatpush1.bf16.msra.mxu0 %v3805
        %3845 = vmatprep.subr.bf16.mxu0 0
        %3846 = vmatpush1.bf16.msra.mxu0 0
        %3847 = vmatprep.subr.bf16.mxu0 0
        %3848 = vmatpush1.bf16.msra.mxu0 0
        %3849 = vmatprep.subr.bf16.mxu0 0
        %3850 = vmatpush1.bf16.msra.mxu0 0
        %3851 = vmatprep.subr.bf16.mxu0 0
        %3852 = vmatpush1.bf16.msra.mxu0 0
        %3853 = vmatprep.mubr.bf16.mxu0 %v3819
        %3854 = vmatmul.mubr.bf16.gmra.mrb[0].mxu0 %v3719
        %v3855 = vpop.f32.mrb[0].mxu0
        %v3856 = vadd.f32 %v3745, %v3855
        %v3857 = vpop.f32.mrb[0].mxu0
        %v3858 = vpop.f32.mrb[0].mxu0
        %v3859 = vpop.f32.mrb[0].mxu0
        %3860 = vdwg.mxu0
        %v3861 = vlaneseq
        %v3862 = vshrl.u32 %v3861, 7
        %v3863 = vsub.s32 0, %v3862
        %v3864 = vrot.slane %v3856, %v3863
        %3865 = vst [vmem:[%s771] sm:$0xff] %v3864
        %s3866 = sand.u32 %s431, 1
        %s3867 = scalar_lea.sflag [#allocation4], %s3866
        %s3868 = sand.u32 %s431, 1
        %s3869 = smul.addr %s3868, 8
        %s3870 = scalar_lea.vmem [#allocation26], %s3869
        // Predicated region
        $region153: #{tpu_custom_call.1} parent=91 // pred_check
          %p3871 = pneg %p441
        $region154: #{tpu_custom_call.1} parent=91 // pred_check_branch
          %3873 = sbr.rel (%p3871) target = $region156
        $region155: #{tpu_custom_call.1} parent=91 // pred_region
          %s3875 = ssub.s32 128, 128
          %3876 = vsyncadd %s3867, %s3875
          %s3877 = smul.addr %s40, 128
          %s3878 = scalar_lea.hbm %s18, %s3877
          %s3880 = sshll.u32 %s3870, 4
          %s3881 = int_to_ptr.vmem [resolvable:$true] %s3880
          %3883 = dma.vmem_to_hbm [thread:$0]  %s3881, 128, %s3878, %s3867
        $region156: #{tpu_custom_call.1} parent=91 // pred_fallthru
          _
      $region92: #{tpu_custom_call.1} parent=5 // pred_fallthru
        _
      %p3884 = scmp.le.s32.totalorder 2, %s35
      // Predicated region
      $region157: #{tpu_custom_call.1} parent=5 // pred_check
        %p3885 = pneg %p3884
      $region158: #{tpu_custom_call.1} parent=5 // pred_check_branch
        %3887 = sbr.rel (%p3885) target = $region160
      $region159: #{tpu_custom_call.1} parent=5 // pred_region
        %s3888 = ssub.s32 %s35, 2
        // Predicated region
        $region161: #{tpu_custom_call.1} parent=159 // pred_check
          %p3889 = pneg %p447
        $region162: #{tpu_custom_call.1} parent=159 // pred_check_branch
          %3891 = sbr.rel (%p3889) target = $region164
        $region163: #{tpu_custom_call.1} parent=159 // pred_region
          %s3892 = sand.u32 %s432, 1
          %s3893 = scalar_lea.sflag [#allocation4], %s3892
          %s3894 = sand.u32 %s432, 1
          %s3895 = smul.addr %s3894, 8
          %s3896 = scalar_lea.vmem [#allocation26], %s3895
          %3897 = dma.done %s3893, 128
        $region164: #{tpu_custom_call.1} parent=159 // pred_fallthru
          _
      $region160: #{tpu_custom_call.1} parent=5 // pred_fallthru
        _
    $region6: #{tpu_custom_call.1} parent=1 // loop_footer
      %s39 = sadd.s32 1, %s35
    $region7: #{tpu_custom_call.1} parent=1 // loop_footer_branch
      %34 = sbr.rel target = $region3
    $region8: #{tpu_custom_call.1} parent=1 // loop_exit
      _
    %3898 = vsyncpa [#allocation3], 1
    %s3899 = scalar_lea.sflag [#allocation3], 1
    %3900 = vsyncpa %s3899, 1
    %3901 = vsyncpa [#allocation6], 1
    %3902 = vsyncpa [#allocation9], 1
    %3903 = vsyncpa [#allocation12], 1
    %3904 = vsyncpa [#allocation15], 1
    %3905 = vsyncpa [#allocation18], 1
    %3906 = vsyncpa [#allocation21], 1
    %3907 = vsyncpa [#allocation24], 1
    %3908 = vsyncpa [#allocation4], 1
    %s3909 = scalar_lea.sflag [#allocation4], 1
    %3910 = vsyncpa %s3909, 1

</llo_original>
